<compile_context>
chip_gen: v7x
topology: tpu7x:2x2x1
jax: 0.10.0
libtpu: 0.0.40
codegen_flags: <defaults>
</compile_context>

<pallas_src>
import math
from functools import partial

import numpy as np
import jax
import jax.numpy as jnp
from jax import lax
from jax.experimental import pallas as pl
from jax.experimental.pallas import tpu as pltpu


# ----------------------------- in-kernel helpers -----------------------------

def _layernorm(x, gamma, beta, eps=1e-5):
    mu = jnp.mean(x, axis=-1, keepdims=True)
    var = jnp.mean((x - mu) ** 2, axis=-1, keepdims=True)
    return (x - mu) * jax.lax.rsqrt(var + eps) * gamma + beta


def _softmax_rows(s, approx):
    s = s - jnp.max(s, axis=-1, keepdims=True)
    e = jnp.exp(s)
    denom = jnp.sum(e, axis=-1, keepdims=True)
    if approx:
        # EUP reciprocal + one Newton step: off the VALU path, still ~f32 accurate.
        r = pl.reciprocal(denom, approx=True)
        r = r * (2.0 - denom * r)
        return e * r
    return e / denom


# ----------------------------- fused kernel ------------------------------------

def encoder_kernel(x_ref, z_ref,
                   wx_ref, bx_ref, wz_ref, bz_ref,
                   wfc_ref, bfc_ref, g1_ref, be1_ref,
                   w1_ref, b1_ref, w2_ref, b2_ref, g2_ref, be2_ref,
                   out_ref, attn_c_ref, attn_l_ref,
                   acc_ref,
                   *, d_k, d_kl, matmul_dtype, approx_softmax):
    """Grid step (b, h): one head of one batch element; epilogue at the last head."""
    h = pl.program_id(1)
    h_last = pl.num_programs(1) - 1

    x = x_ref[0]                                   # (S, Dx) f32
    z = z_ref[0]                                   # (L, Dx) f32
    xm = x.astype(matmul_dtype)
    zm = z.astype(matmul_dtype)

    # Head-h projections; 1/sqrt(d) softmax scales already folded into the Q / Q_l columns.
    px = jnp.dot(xm, wx_ref[0].astype(matmul_dtype),
                 preferred_element_type=jnp.float32) + bx_ref[0]        # (S, 3*d_k + d_kl)
    pz = jnp.dot(zm, wz_ref[0].astype(matmul_dtype),
                 preferred_element_type=jnp.float32) + bz_ref[0]        # (L, 2*d_kl)

    q = px[:, :d_k]
    k = px[:, d_k:2 * d_k]
    v = px[:, 2 * d_k:3 * d_k]
    ql = px[:, 3 * d_k:]
    kl = pz[:, :d_kl]
    vl = pz[:, d_kl:]

    # Contract the feature dims (== q @ k.T, no explicit transpose / relayout).
    dn = (((1,), (1,)), ((), ()))

    # Context attention for this head; store the map directly (no jnp.stack).
    a_c = _softmax_rows(lax.dot_general(q, k, dn, preferred_element_type=jnp.float32),
                        approx_softmax)                                  # (S, S)
    attn_c_ref[0, 0] = a_c.astype(attn_c_ref.dtype)
    av_c = jnp.dot(a_c.astype(matmul_dtype), v.astype(matmul_dtype),
                   preferred_element_type=jnp.float32)                   # (S, d_k)

    # Lexicon attention for this head.
    a_l = _softmax_rows(lax.dot_general(ql, kl, dn, preferred_element_type=jnp.float32),
                        approx_softmax)                                  # (S, L)
    attn_l_ref[0, 0] = a_l.astype(attn_l_ref.dtype)
    av_l = jnp.dot(a_l.astype(matmul_dtype), vl.astype(matmul_dtype),
                   preferred_element_type=jnp.float32)                   # (S, d_kl)

    # Per-head fc accumulation (replaces the (S, H*(d_k+d_kl)) concat scratch round trip).
    wfc = wfc_ref[0]                                                     # (d_k + d_kl, Dx)
    contrib = (jnp.dot(av_c.astype(matmul_dtype), wfc[:d_k].astype(matmul_dtype),
                       preferred_element_type=jnp.float32)
               + jnp.dot(av_l.astype(matmul_dtype), wfc[d_k:].astype(matmul_dtype),
                         preferred_element_type=jnp.float32))            # (S, Dx)

    @pl.when(h == 0)
    def _():
        # Seed with residual(X) + fc bias once per batch element.
        acc_ref[...] = x + bfc_ref[...]

    acc_ref[...] += contrib

    @pl.when(h == h_last)
    def _():
        # fc result + residual already in acc; LayerNorm.
        o = _layernorm(acc_ref[...], g1_ref[...], be1_ref[...])

        # Position-wise FF (relu) + residual + LayerNorm.
        hid = jnp.maximum(
            jnp.dot(o.astype(matmul_dtype), w1_ref[...].astype(matmul_dtype),
                    preferred_element_type=jnp.float32) + b1_ref[...], 0.0)
        f = jnp.dot(hid.astype(matmul_dtype), w2_ref[...].astype(matmul_dtype),
                    preferred_element_type=jnp.float32) + b2_ref[...]
        f = _layernorm(f + o, g2_ref[...], be2_ref[...])

        # norm = X.ne(0.0).any(axis=2).float().unsqueeze(-1)
        mask = jnp.max((x != 0.0).astype(jnp.float32), axis=-1, keepdims=True)
        out_ref[0] = (f * mask).astype(out_ref.dtype)


# ----------------------------- weight packing ----------------------------------

def pack_params(p, *, num_head, d_k, d_kl):
    """Offline packing: fold softmax scales into Q weights, split per head (leading head axis)."""
    H = num_head
    d_x = p["wq"].shape[0]
    sc = 1.0 / math.sqrt(d_k)
    sl = 1.0 / math.sqrt(d_kl)

    def wheads(w, d):   # (d_x, H*d) -> (H, d_x, d)
        return jnp.transpose(w.reshape(d_x, H, d), (1, 0, 2))

    def bheads(b, d):   # (1, H*d) -> (H, 1, d)
        return jnp.transpose(b.reshape(1, H, d), (1, 0, 2))

    wx = jnp.concatenate([wheads(p["wq"] * sc, d_k), wheads(p["wk"], d_k),
                          wheads(p["wv"], d_k), wheads(p["wql"] * sl, d_kl)], axis=2)
    bx = jnp.concatenate([bheads(p["bq"] * sc, d_k), bheads(p["bk"], d_k),
                          bheads(p["bv"], d_k), bheads(p["bql"] * sl, d_kl)], axis=2)
    wz = jnp.concatenate([wheads(p["wkl"], d_kl), wheads(p["wvl"], d_kl)], axis=2)
    bz = jnp.concatenate([bheads(p["bkl"], d_kl), bheads(p["bvl"], d_kl)], axis=2)

    # fc rows reordered so head h's context rows and lexicon rows are one contiguous block.
    wfc_ctx = p["wfc"][:H * d_k].reshape(H, d_k, d_x)
    wfc_lex = p["wfc"][H * d_k:].reshape(H, d_kl, d_x)
    wfc = jnp.concatenate([wfc_ctx, wfc_lex], axis=1)            # (H, d_k + d_kl, d_x)

    per_head = [wx, bx, wz, bz, wfc]
    consts = [p["bfc"], p["g_attn"], p["b_attn"],
              p["w1"], p["b1"], p["w2"], p["b2"], p["g_ff"], p["b_ff"]]
    return per_head, consts


# ----------------------------- wrapper ------------------------------------------

def lexicon_transformer_encoder(X, z, params, *, num_head, d_k, d_kl,
                                matmul_dtype=jnp.float32,   # bf16 recommended on v6e/v7x
                                attn_dtype=jnp.float32,     # bf16 halves the dominant writeback
                                approx_softmax=False):
    B, S, Dx = X.shape
    L = z.shape[1]
    H = num_head

    per_head, consts = pack_params(params, num_head=H, d_k=d_k, d_kl=d_kl)

    def per_head_spec(arr):
        # (H, r, c) -> (1, r, c) block at head index; last two dims are full array dims.
        return pl.BlockSpec((1,) + arr.shape[1:], lambda b, h: (h, 0, 0))

    def const_spec(arr, single_buffer):
        nd = arr.ndim
        idx = lambda b, h, _nd=nd: (0,) * _nd
        if single_buffer:
            # Grid-constant weights: no double-buffering needed -> halves their VMEM footprint.
            return pl.BlockSpec(arr.shape, idx, pipeline_mode=pl.Buffered(1))
        return pl.BlockSpec(arr.shape, idx)

    out_shape = (jax.ShapeDtypeStruct((B, S, Dx), X.dtype),
                 jax.ShapeDtypeStruct((B, H, S, S), attn_dtype),
                 jax.ShapeDtypeStruct((B, H, S, L), attn_dtype))

    def build(single_buffer_consts):
        return pl.pallas_call(
            partial(encoder_kernel, d_k=d_k, d_kl=d_kl,
                    matmul_dtype=matmul_dtype, approx_softmax=approx_softmax),
            out_shape=out_shape,
            grid=(B, H),
            in_specs=[pl.BlockSpec((1, S, Dx), lambda b, h: (b, 0, 0)),
                      pl.BlockSpec((1, L, Dx), lambda b, h: (b, 0, 0))]
                     + [per_head_spec(a) for a in per_head]
                     + [const_spec(a, single_buffer_consts) for a in consts],
            out_specs=(pl.BlockSpec((1, S, Dx), lambda b, h: (b, 0, 0)),
                       pl.BlockSpec((1, 1, S, S), lambda b, h: (b, h, 0, 0)),
                       pl.BlockSpec((1, 1, S, L), lambda b, h: (b, h, 0, 0))),
            scratch_shapes=[pltpu.VMEM((S, Dx), jnp.float32)],   # per-batch fc accumulator
            compiler_params=pltpu.CompilerParams(
                # batch is megacore-parallel; head axis carries the accumulator -> arbitrary.
                dimension_semantics=("parallel", "arbitrary"),
                vmem_limit_bytes=32 * 1024 * 1024),
        )

    args = (X, z, *per_head, *consts)
    try:
        out, attn_c, attn_l = build(single_buffer_consts=True)(*args)
    except Exception:
        # TODO(synk): pipeline_mode=pl.Buffered(1) unsupported on this jax version; fall back
        # to default double-buffered constant weights.
        out, attn_c, attn_l = build(single_buffer_consts=False)(*args)

    residual = X
    return out, attn_c, attn_l, residual


# ----------------------------- pure-JAX reference ------------------------------

def reference(X, z, p, num_head, d_k, d_kl):
    def ln(x, g, b, eps=1e-5):
        mu = x.mean(-1, keepdims=True)
        var = ((x - mu) ** 2).mean(-1, keepdims=True)
        return (x - mu) / jnp.sqrt(var + eps) * g + b

    B, S, Dx = X.shape
    L = z.shape[1]
    H = num_head
    q = (X @ p["wq"] + p["bq"][0]).reshape(B, S, H, d_k)
    k = (X @ p["wk"] + p["bk"][0]).reshape(B, S, H, d_k)
    v = (X @ p["wv"] + p["bv"][0]).reshape(B, S, H, d_k)
    ql = (X @ p["wql"] + p["bql"][0]).reshape(B, S, H, d_kl)
    kl = (z @ p["wkl"] + p["bkl"][0]).reshape(B, L, H, d_kl)
    vl = (z @ p["wvl"] + p["bvl"][0]).reshape(B, L, H, d_kl)

    sc = jnp.einsum("bshd,bthd->bhst", q, k) / math.sqrt(d_k)
    ac = jax.nn.softmax(sc, axis=-1)
    oc = jnp.einsum("bhst,bthd->bshd", ac, v).reshape(B, S, H * d_k)

    sl = jnp.einsum("bshd,bthd->bhst", ql, kl) / math.sqrt(d_kl)
    al = jax.nn.softmax(sl, axis=-1)
    ol = jnp.einsum("bhst,bthd->bshd", al, vl).reshape(B, S, H * d_kl)

    cat = jnp.concatenate([oc, ol], axis=-1)
    o = cat @ p["wfc"] + p["bfc"][0]
    o = ln(o + X, p["g_attn"][0], p["b_attn"][0])

    h = jnp.maximum(o @ p["w1"] + p["b1"][0], 0.0)
    f = h @ p["w2"] + p["b2"][0]
    f = ln(f + o, p["g_ff"][0], p["b_ff"][0])
    norm = jnp.any(X != 0.0, axis=2, keepdims=True).astype(jnp.float32)
    return f * norm, ac, al, X


# ----------------------------- params -----------------------------------------

def init_params(key, num_head, d_x, d_k, d_kl, d_linear):
    H = num_head
    shapes = [("wq", (d_x, H * d_k)), ("wk", (d_x, H * d_k)), ("wv", (d_x, H * d_k)),
              ("wql", (d_x, H * d_kl)), ("wkl", (d_x, H * d_kl)), ("wvl", (d_x, H * d_kl)),
              ("wfc", (H * (d_k + d_kl), d_x)),
              ("w1", (d_x, d_linear)), ("w2", (d_linear, d_x))]
    params = {}
    keys = jax.random.split(key, len(shapes))
    for (name, shape), k in zip(shapes, keys):
        params[name] = (jax.random.normal(k, shape, jnp.float32) / math.sqrt(shape[0]))
    for name, dim in [("bq", H * d_k), ("bk", H * d_k), ("bv", H * d_k),
                      ("bql", H * d_kl), ("bkl", H * d_kl), ("bvl", H * d_kl),
                      ("bfc", d_x), ("b1", d_linear), ("b2", d_x)]:
        params[name] = jnp.zeros((1, dim), jnp.float32)
    params["g_attn"] = jnp.ones((1, d_x), jnp.float32)
    params["b_attn"] = jnp.zeros((1, d_x), jnp.float32)
    params["g_ff"] = jnp.ones((1, d_x), jnp.float32)
    params["b_ff"] = jnp.zeros((1, d_x), jnp.float32)
    return params


# ----------------------------- main --------------------------------------------

if __name__ == "__main__":
    B, S, L = 2, 8, 8
    num_head, d_x, d_k, d_kl, d_linear = 2, 32, 16, 8, 64

    key = jax.random.PRNGKey(0)
    kx, kz, kp = jax.random.split(key, 3)
    X = jax.random.normal(kx, (B, S, d_x), jnp.float32)
    X = X.at[:, -2:, :].set(0.0)   # padded (all-zero) rows exercise the norm mask
    z = jax.random.normal(kz, (B, L, d_x), jnp.float32)
    params = init_params(kp, num_head, d_x, d_k, d_kl, d_linear)

    out, attn_c, attn_l, residual = jax.block_until_ready(
        lexicon_transformer_encoder(X, z, params, num_head=num_head, d_k=d_k, d_kl=d_kl))

    ref_out, ref_c, ref_l, ref_res = reference(X, z, params, num_head, d_k, d_kl)
    np.testing.assert_allclose(np.asarray(out), np.asarray(ref_out), rtol=1e-4, atol=1e-4)
    np.testing.assert_allclose(np.asarray(attn_c), np.asarray(ref_c), rtol=1e-4, atol=1e-4)
    np.testing.assert_allclose(np.asarray(attn_l), np.asarray(ref_l), rtol=1e-4, atol=1e-4)
    np.testing.assert_allclose(np.asarray(residual), np.asarray(ref_res))

    print("KERNEL_OK")
</pallas_src>

<mosaic_0001>
module attributes {stable_mosaic.version = 11 : i64} {
  func.func @encoder_kernel(%arg0: i32, %arg1: i32, %arg2: memref<1x8x32xf32, #tpu.memory_space<vmem>>, %arg3: memref<1x8x32xf32, #tpu.memory_space<vmem>>, %arg4: memref<1x32x56xf32, #tpu.memory_space<vmem>>, %arg5: memref<1x1x56xf32, #tpu.memory_space<vmem>>, %arg6: memref<1x32x16xf32, #tpu.memory_space<vmem>>, %arg7: memref<1x1x16xf32, #tpu.memory_space<vmem>>, %arg8: memref<1x24x32xf32, #tpu.memory_space<vmem>>, %arg9: memref<1x32xf32, #tpu.memory_space<vmem>>, %arg10: memref<1x32xf32, #tpu.memory_space<vmem>>, %arg11: memref<1x32xf32, #tpu.memory_space<vmem>>, %arg12: memref<32x64xf32, #tpu.memory_space<vmem>>, %arg13: memref<1x64xf32, #tpu.memory_space<vmem>>, %arg14: memref<64x32xf32, #tpu.memory_space<vmem>>, %arg15: memref<1x32xf32, #tpu.memory_space<vmem>>, %arg16: memref<1x32xf32, #tpu.memory_space<vmem>>, %arg17: memref<1x32xf32, #tpu.memory_space<vmem>>, %arg18: memref<1x8x32xf32, #tpu.memory_space<vmem>>, %arg19: memref<1x1x8x8xf32, #tpu.memory_space<vmem>>, %arg20: memref<1x1x8x8xf32, #tpu.memory_space<vmem>>, %arg21: memref<8x32xf32, #tpu.memory_space<vmem>>) attributes {dimension_semantics = [#tpu.dimension_semantics<parallel>, #tpu.dimension_semantics<arbitrary>], iteration_bounds = array<i64: 2, 2>, scalar_prefetch = 0 : i64, scratch_operands = 1 : i64, tpu.core_type = #tpu.core_type<tc>, window_params = [{transform_indices = @transform_0, window_bounds = array<i64: 1, 8, 32>}, {transform_indices = @transform_1, window_bounds = array<i64: 1, 8, 32>}, {transform_indices = @transform_2, window_bounds = array<i64: 1, 32, 56>}, {transform_indices = @transform_3, window_bounds = array<i64: 1, 1, 56>}, {transform_indices = @transform_4, window_bounds = array<i64: 1, 32, 16>}, {transform_indices = @transform_5, window_bounds = array<i64: 1, 1, 16>}, {transform_indices = @transform_6, window_bounds = array<i64: 1, 24, 32>}, {pipeline_mode = #tpu.pipeline_mode<synchronous>, transform_indices = @transform_7, window_bounds = array<i64: 1, 32>}, {pipeline_mode = #tpu.pipeline_mode<synchronous>, transform_indices = @transform_8, window_bounds = array<i64: 1, 32>}, {pipeline_mode = #tpu.pipeline_mode<synchronous>, transform_indices = @transform_9, window_bounds = array<i64: 1, 32>}, {pipeline_mode = #tpu.pipeline_mode<synchronous>, transform_indices = @transform_10, window_bounds = array<i64: 32, 64>}, {pipeline_mode = #tpu.pipeline_mode<synchronous>, transform_indices = @transform_11, window_bounds = array<i64: 1, 64>}, {pipeline_mode = #tpu.pipeline_mode<synchronous>, transform_indices = @transform_12, window_bounds = array<i64: 64, 32>}, {pipeline_mode = #tpu.pipeline_mode<synchronous>, transform_indices = @transform_13, window_bounds = array<i64: 1, 32>}, {pipeline_mode = #tpu.pipeline_mode<synchronous>, transform_indices = @transform_14, window_bounds = array<i64: 1, 32>}, {pipeline_mode = #tpu.pipeline_mode<synchronous>, transform_indices = @transform_15, window_bounds = array<i64: 1, 32>}, {transform_indices = @transform_16, window_bounds = array<i64: 1, 8, 32>}, {transform_indices = @transform_17, window_bounds = array<i64: 1, 1, 8, 8>}, {transform_indices = @transform_18, window_bounds = array<i64: 1, 1, 8, 8>}]} {
    %c0 = arith.constant 0 : index
    %c0_0 = arith.constant 0 : index
    %c0_1 = arith.constant 0 : index
    %0 = vector.load %arg2[%c0, %c0_0, %c0_1] : memref<1x8x32xf32, #tpu.memory_space<vmem>>, vector<1x8x32xf32>
    %1 = vector.shape_cast %0 : vector<1x8x32xf32> to vector<8x32xf32>
    %c0_2 = arith.constant 0 : index
    %c0_3 = arith.constant 0 : index
    %c0_4 = arith.constant 0 : index
    %2 = vector.load %arg3[%c0_2, %c0_3, %c0_4] : memref<1x8x32xf32, #tpu.memory_space<vmem>>, vector<1x8x32xf32>
    %3 = vector.shape_cast %2 : vector<1x8x32xf32> to vector<8x32xf32>
    %c0_5 = arith.constant 0 : index
    %c0_6 = arith.constant 0 : index
    %c0_7 = arith.constant 0 : index
    %4 = vector.load %arg4[%c0_5, %c0_6, %c0_7] : memref<1x32x56xf32, #tpu.memory_space<vmem>>, vector<1x32x56xf32>
    %5 = vector.shape_cast %4 : vector<1x32x56xf32> to vector<32x56xf32>
    %cst = arith.constant dense<0.000000e+00> : vector<8x56xf32>
    %6 = tpu.matmul %1, %5, %cst {dimension_numbers = #tpu.dot_dimension_numbers<[1], [0], [0], [1], [0, 0, 1, 1], [], []>} : vector<8x32xf32>, vector<32x56xf32>, vector<8x56xf32> -> vector<8x56xf32>
    %c0_8 = arith.constant 0 : index
    %c0_9 = arith.constant 0 : index
    %c0_10 = arith.constant 0 : index
    %7 = vector.load %arg5[%c0_8, %c0_9, %c0_10] : memref<1x1x56xf32, #tpu.memory_space<vmem>>, vector<1x1x56xf32>
    %8 = vector.shape_cast %7 : vector<1x1x56xf32> to vector<1x56xf32>
    %9 = vector.broadcast %8 : vector<1x56xf32> to vector<8x56xf32>
    %10 = arith.addf %6, %9 : vector<8x56xf32>
    %c0_11 = arith.constant 0 : index
    %c0_12 = arith.constant 0 : index
    %c0_13 = arith.constant 0 : index
    %11 = vector.load %arg6[%c0_11, %c0_12, %c0_13] : memref<1x32x16xf32, #tpu.memory_space<vmem>>, vector<1x32x16xf32>
    %12 = vector.shape_cast %11 : vector<1x32x16xf32> to vector<32x16xf32>
    %cst_14 = arith.constant dense<0.000000e+00> : vector<8x16xf32>
    %13 = tpu.matmul %3, %12, %cst_14 {dimension_numbers = #tpu.dot_dimension_numbers<[1], [0], [0], [1], [0, 0, 1, 1], [], []>} : vector<8x32xf32>, vector<32x16xf32>, vector<8x16xf32> -> vector<8x16xf32>
    %c0_15 = arith.constant 0 : index
    %c0_16 = arith.constant 0 : index
    %c0_17 = arith.constant 0 : index
    %14 = vector.load %arg7[%c0_15, %c0_16, %c0_17] : memref<1x1x16xf32, #tpu.memory_space<vmem>>, vector<1x1x16xf32>
    %15 = vector.shape_cast %14 : vector<1x1x16xf32> to vector<1x16xf32>
    %16 = vector.broadcast %15 : vector<1x16xf32> to vector<8x16xf32>
    %17 = arith.addf %13, %16 : vector<8x16xf32>
    %18 = vector.extract_strided_slice %10 {offsets = [0, 0], sizes = [8, 16], strides = [1, 1]} : vector<8x56xf32> to vector<8x16xf32>
    %19 = vector.extract_strided_slice %10 {offsets = [0, 16], sizes = [8, 16], strides = [1, 1]} : vector<8x56xf32> to vector<8x16xf32>
    %20 = vector.extract_strided_slice %10 {offsets = [0, 32], sizes = [8, 16], strides = [1, 1]} : vector<8x56xf32> to vector<8x16xf32>
    %21 = vector.extract_strided_slice %10 {offsets = [0, 48], sizes = [8, 8], strides = [1, 1]} : vector<8x56xf32> to vector<8x8xf32>
    %22 = vector.extract_strided_slice %17 {offsets = [0, 0], sizes = [8, 8], strides = [1, 1]} : vector<8x16xf32> to vector<8x8xf32>
    %23 = vector.extract_strided_slice %17 {offsets = [0, 8], sizes = [8, 8], strides = [1, 1]} : vector<8x16xf32> to vector<8x8xf32>
    %cst_18 = arith.constant dense<0.000000e+00> : vector<8x8xf32>
    %24 = tpu.matmul %18, %19, %cst_18 {dimension_numbers = #tpu.dot_dimension_numbers<[1], [1], [0], [0], [0, 0, 1, 0], [], []>} : vector<8x16xf32>, vector<8x16xf32>, vector<8x8xf32> -> vector<8x8xf32>
    %cst_19 = arith.constant dense<0xFF800000> : vector<8xf32>
    %25 = vector.multi_reduction <maximumf>, %24, %cst_19 [1] : vector<8x8xf32> to vector<8xf32>
    %26 = vector.shape_cast %25 : vector<8xf32> to vector<8x1xf32>
    %27 = vector.broadcast %26 : vector<8x1xf32> to vector<8x8xf32>
    %28 = arith.subf %24, %27 : vector<8x8xf32>
    %29 = math.exp %28 : vector<8x8xf32>
    %cst_20 = arith.constant dense<0.000000e+00> : vector<8xf32>
    %30 = vector.multi_reduction <add>, %29, %cst_20 [1] : vector<8x8xf32> to vector<8xf32>
    %31 = vector.shape_cast %30 : vector<8xf32> to vector<8x1xf32>
    %32 = vector.broadcast %31 : vector<8x1xf32> to vector<8x8xf32>
    %33 = arith.divf %29, %32 : vector<8x8xf32>
    %c0_21 = arith.constant 0 : index
    %c0_22 = arith.constant 0 : index
    %c0_23 = arith.constant 0 : index
    %c0_24 = arith.constant 0 : index
    %34 = vector.load %arg19[%c0_21, %c0_22, %c0_23, %c0_24] : memref<1x1x8x8xf32, #tpu.memory_space<vmem>>, vector<1x1x8x8xf32>
    %35 = vector.shape_cast %34 : vector<1x1x8x8xf32> to vector<8x8xf32>
    %36 = vector.shape_cast %33 : vector<8x8xf32> to vector<1x1x8x8xf32>
    tpu.vector_store %arg19[%c0_21, %c0_22, %c0_23, %c0_24], %36 {strides = array<i32>} : memref<1x1x8x8xf32, #tpu.memory_space<vmem>>, vector<1x1x8x8xf32>,
    %cst_25 = arith.constant dense<0.000000e+00> : vector<8x16xf32>
    %37 = tpu.matmul %33, %20, %cst_25 {dimension_numbers = #tpu.dot_dimension_numbers<[1], [0], [0], [1], [0, 0, 1, 1], [], []>} : vector<8x8xf32>, vector<8x16xf32>, vector<8x16xf32> -> vector<8x16xf32>
    %cst_26 = arith.constant dense<0.000000e+00> : vector<8x8xf32>
    %38 = tpu.matmul %21, %22, %cst_26 {dimension_numbers = #tpu.dot_dimension_numbers<[1], [1], [0], [0], [0, 0, 1, 0], [], []>} : vector<8x8xf32>, vector<8x8xf32>, vector<8x8xf32> -> vector<8x8xf32>
    %cst_27 = arith.constant dense<0xFF800000> : vector<8xf32>
    %39 = vector.multi_reduction <maximumf>, %38, %cst_27 [1] : vector<8x8xf32> to vector<8xf32>
    %40 = vector.shape_cast %39 : vector<8xf32> to vector<8x1xf32>
    %41 = vector.broadcast %40 : vector<8x1xf32> to vector<8x8xf32>
    %42 = arith.subf %38, %41 : vector<8x8xf32>
    %43 = math.exp %42 : vector<8x8xf32>
    %cst_28 = arith.constant dense<0.000000e+00> : vector<8xf32>
    %44 = vector.multi_reduction <add>, %43, %cst_28 [1] : vector<8x8xf32> to vector<8xf32>
    %45 = vector.shape_cast %44 : vector<8xf32> to vector<8x1xf32>
    %46 = vector.broadcast %45 : vector<8x1xf32> to vector<8x8xf32>
    %47 = arith.divf %43, %46 : vector<8x8xf32>
    %c0_29 = arith.constant 0 : index
    %c0_30 = arith.constant 0 : index
    %c0_31 = arith.constant 0 : index
    %c0_32 = arith.constant 0 : index
    %48 = vector.load %arg20[%c0_29, %c0_30, %c0_31, %c0_32] : memref<1x1x8x8xf32, #tpu.memory_space<vmem>>, vector<1x1x8x8xf32>
    %49 = vector.shape_cast %48 : vector<1x1x8x8xf32> to vector<8x8xf32>
    %50 = vector.shape_cast %47 : vector<8x8xf32> to vector<1x1x8x8xf32>
    tpu.vector_store %arg20[%c0_29, %c0_30, %c0_31, %c0_32], %50 {strides = array<i32>} : memref<1x1x8x8xf32, #tpu.memory_space<vmem>>, vector<1x1x8x8xf32>,
    %cst_33 = arith.constant dense<0.000000e+00> : vector<8x8xf32>
    %51 = tpu.matmul %47, %23, %cst_33 {dimension_numbers = #tpu.dot_dimension_numbers<[1], [0], [0], [1], [0, 0, 1, 1], [], []>} : vector<8x8xf32>, vector<8x8xf32>, vector<8x8xf32> -> vector<8x8xf32>
    %c0_34 = arith.constant 0 : index
    %c0_35 = arith.constant 0 : index
    %c0_36 = arith.constant 0 : index
    %52 = vector.load %arg8[%c0_34, %c0_35, %c0_36] : memref<1x24x32xf32, #tpu.memory_space<vmem>>, vector<1x24x32xf32>
    %53 = vector.shape_cast %52 : vector<1x24x32xf32> to vector<24x32xf32>
    %54 = vector.extract_strided_slice %53 {offsets = [0, 0], sizes = [16, 32], strides = [1, 1]} : vector<24x32xf32> to vector<16x32xf32>
    %cst_37 = arith.constant dense<0.000000e+00> : vector<8x32xf32>
    %55 = tpu.matmul %37, %54, %cst_37 {dimension_numbers = #tpu.dot_dimension_numbers<[1], [0], [0], [1], [0, 0, 1, 1], [], []>} : vector<8x16xf32>, vector<16x32xf32>, vector<8x32xf32> -> vector<8x32xf32>
    %56 = vector.extract_strided_slice %53 {offsets = [16, 0], sizes = [8, 32], strides = [1, 1]} : vector<24x32xf32> to vector<8x32xf32>
    %cst_38 = arith.constant dense<0.000000e+00> : vector<8x32xf32>
    %57 = tpu.matmul %51, %56, %cst_38 {dimension_numbers = #tpu.dot_dimension_numbers<[1], [0], [0], [1], [0, 0, 1, 1], [], []>} : vector<8x8xf32>, vector<8x32xf32>, vector<8x32xf32> -> vector<8x32xf32>
    %58 = arith.addf %55, %57 : vector<8x32xf32>
    %c0_i32 = arith.constant 0 : i32
    %59 = arith.cmpi eq, %arg1, %c0_i32 : i32
    %60 = arith.extui %59 : i1 to i32
    %c0_i32_39 = arith.constant 0 : i32
    %61 = arith.cmpi ne, %60, %c0_i32_39 : i32
    scf.if %61 {
      %c0_45 = arith.constant 0 : index
      %c0_46 = arith.constant 0 : index
      %68 = vector.load %arg9[%c0_45, %c0_46] : memref<1x32xf32, #tpu.memory_space<vmem>>, vector<1x32xf32>
      %69 = vector.broadcast %68 : vector<1x32xf32> to vector<8x32xf32>
      %70 = arith.addf %1, %69 : vector<8x32xf32>
      %c0_47 = arith.constant 0 : index
      %c0_48 = arith.constant 0 : index
      %71 = vector.load %arg21[%c0_47, %c0_48] : memref<8x32xf32, #tpu.memory_space<vmem>>, vector<8x32xf32>
      tpu.vector_store %arg21[%c0_47, %c0_48], %70 {strides = array<i32>} : memref<8x32xf32, #tpu.memory_space<vmem>>, vector<8x32xf32>,
    } else {
    }
    %c0_40 = arith.constant 0 : index
    %c0_41 = arith.constant 0 : index
    %62 = vector.load %arg21[%c0_40, %c0_41] : memref<8x32xf32, #tpu.memory_space<vmem>>, vector<8x32xf32>
    %63 = arith.addf %62, %58 : vector<8x32xf32>
    %c0_42 = arith.constant 0 : index
    %c0_43 = arith.constant 0 : index
    %64 = vector.load %arg21[%c0_42, %c0_43] : memref<8x32xf32, #tpu.memory_space<vmem>>, vector<8x32xf32>
    tpu.vector_store %arg21[%c0_42, %c0_43], %63 {strides = array<i32>} : memref<8x32xf32, #tpu.memory_space<vmem>>, vector<8x32xf32>,
    %c1_i32 = arith.constant 1 : i32
    %65 = arith.cmpi eq, %arg1, %c1_i32 : i32
    %66 = arith.extui %65 : i1 to i32
    %c0_i32_44 = arith.constant 0 : i32
    %67 = arith.cmpi ne, %66, %c0_i32_44 : i32
    scf.if %67 {
      %c0_45 = arith.constant 0 : index
      %c0_46 = arith.constant 0 : index
      %68 = vector.load %arg21[%c0_45, %c0_46] : memref<8x32xf32, #tpu.memory_space<vmem>>, vector<8x32xf32>
      %c0_47 = arith.constant 0 : index
      %c0_48 = arith.constant 0 : index
      %69 = vector.load %arg10[%c0_47, %c0_48] : memref<1x32xf32, #tpu.memory_space<vmem>>, vector<1x32xf32>
      %c0_49 = arith.constant 0 : index
      %c0_50 = arith.constant 0 : index
      %70 = vector.load %arg11[%c0_49, %c0_50] : memref<1x32xf32, #tpu.memory_space<vmem>>, vector<1x32xf32>
      %cst_51 = arith.constant dense<0.000000e+00> : vector<8xf32>
      %71 = vector.multi_reduction <add>, %68, %cst_51 [1] : vector<8x32xf32> to vector<8xf32>
      %72 = vector.shape_cast %71 : vector<8xf32> to vector<8x1xf32>
      %cst_52 = arith.constant 3.200000e+01 : f32
      %73 = vector.broadcast %cst_52 : f32 to vector<8x1xf32>
      %74 = arith.divf %72, %73 : vector<8x1xf32>
      %75 = vector.broadcast %74 : vector<8x1xf32> to vector<8x32xf32>
      %76 = arith.subf %68, %75 : vector<8x32xf32>
      %77 = arith.mulf %76, %76 : vector<8x32xf32>
      %cst_53 = arith.constant dense<0.000000e+00> : vector<8xf32>
      %78 = vector.multi_reduction <add>, %77, %cst_53 [1] : vector<8x32xf32> to vector<8xf32>
      %79 = vector.shape_cast %78 : vector<8xf32> to vector<8x1xf32>
      %cst_54 = arith.constant 3.200000e+01 : f32
      %80 = vector.broadcast %cst_54 : f32 to vector<8x1xf32>
      %81 = arith.divf %79, %80 : vector<8x1xf32>
      %82 = vector.broadcast %74 : vector<8x1xf32> to vector<8x32xf32>
      %83 = arith.subf %68, %82 : vector<8x32xf32>
      %cst_55 = arith.constant 9.99999974E-6 : f32
      %84 = vector.broadcast %cst_55 : f32 to vector<8x1xf32>
      %85 = arith.addf %81, %84 : vector<8x1xf32>
      %86 = math.rsqrt %85 : vector<8x1xf32>
      %87 = vector.broadcast %86 : vector<8x1xf32> to vector<8x32xf32>
      %88 = arith.mulf %83, %87 : vector<8x32xf32>
      %89 = vector.broadcast %69 : vector<1x32xf32> to vector<8x32xf32>
      %90 = arith.mulf %88, %89 : vector<8x32xf32>
      %91 = vector.broadcast %70 : vector<1x32xf32> to vector<8x32xf32>
      %92 = arith.addf %90, %91 : vector<8x32xf32>
      %c0_56 = arith.constant 0 : index
      %c0_57 = arith.constant 0 : index
      %93 = vector.load %arg12[%c0_56, %c0_57] : memref<32x64xf32, #tpu.memory_space<vmem>>, vector<32x64xf32>
      %cst_58 = arith.constant dense<0.000000e+00> : vector<8x64xf32>
      %94 = tpu.matmul %92, %93, %cst_58 {dimension_numbers = #tpu.dot_dimension_numbers<[1], [0], [0], [1], [0, 0, 1, 1], [], []>} : vector<8x32xf32>, vector<32x64xf32>, vector<8x64xf32> -> vector<8x64xf32>
      %c0_59 = arith.constant 0 : index
      %c0_60 = arith.constant 0 : index
      %95 = vector.load %arg13[%c0_59, %c0_60] : memref<1x64xf32, #tpu.memory_space<vmem>>, vector<1x64xf32>
      %96 = vector.broadcast %95 : vector<1x64xf32> to vector<8x64xf32>
      %97 = arith.addf %94, %96 : vector<8x64xf32>
      %cst_61 = arith.constant 0.000000e+00 : f32
      %98 = vector.broadcast %cst_61 : f32 to vector<8x64xf32>
      %99 = arith.maximumf %97, %98 : vector<8x64xf32>
      %c0_62 = arith.constant 0 : index
      %c0_63 = arith.constant 0 : index
      %100 = vector.load %arg14[%c0_62, %c0_63] : memref<64x32xf32, #tpu.memory_space<vmem>>, vector<64x32xf32>
      %cst_64 = arith.constant dense<0.000000e+00> : vector<8x32xf32>
      %101 = tpu.matmul %99, %100, %cst_64 {dimension_numbers = #tpu.dot_dimension_numbers<[1], [0], [0], [1], [0, 0, 1, 1], [], []>} : vector<8x64xf32>, vector<64x32xf32>, vector<8x32xf32> -> vector<8x32xf32>
      %c0_65 = arith.constant 0 : index
      %c0_66 = arith.constant 0 : index
      %102 = vector.load %arg15[%c0_65, %c0_66] : memref<1x32xf32, #tpu.memory_space<vmem>>, vector<1x32xf32>
      %103 = vector.broadcast %102 : vector<1x32xf32> to vector<8x32xf32>
      %104 = arith.addf %101, %103 : vector<8x32xf32>
      %105 = arith.addf %104, %92 : vector<8x32xf32>
      %c0_67 = arith.constant 0 : index
      %c0_68 = arith.constant 0 : index
      %106 = vector.load %arg16[%c0_67, %c0_68] : memref<1x32xf32, #tpu.memory_space<vmem>>, vector<1x32xf32>
      %c0_69 = arith.constant 0 : index
      %c0_70 = arith.constant 0 : index
      %107 = vector.load %arg17[%c0_69, %c0_70] : memref<1x32xf32, #tpu.memory_space<vmem>>, vector<1x32xf32>
      %cst_71 = arith.constant dense<0.000000e+00> : vector<8xf32>
      %108 = vector.multi_reduction <add>, %105, %cst_71 [1] : vector<8x32xf32> to vector<8xf32>
      %109 = vector.shape_cast %108 : vector<8xf32> to vector<8x1xf32>
      %cst_72 = arith.constant 3.200000e+01 : f32
      %110 = vector.broadcast %cst_72 : f32 to vector<8x1xf32>
      %111 = arith.divf %109, %110 : vector<8x1xf32>
      %112 = vector.broadcast %111 : vector<8x1xf32> to vector<8x32xf32>
      %113 = arith.subf %105, %112 : vector<8x32xf32>
      %114 = arith.mulf %113, %113 : vector<8x32xf32>
      %cst_73 = arith.constant dense<0.000000e+00> : vector<8xf32>
      %115 = vector.multi_reduction <add>, %114, %cst_73 [1] : vector<8x32xf32> to vector<8xf32>
      %116 = vector.shape_cast %115 : vector<8xf32> to vector<8x1xf32>
      %cst_74 = arith.constant 3.200000e+01 : f32
      %117 = vector.broadcast %cst_74 : f32 to vector<8x1xf32>
      %118 = arith.divf %116, %117 : vector<8x1xf32>
      %119 = vector.broadcast %111 : vector<8x1xf32> to vector<8x32xf32>
      %120 = arith.subf %105, %119 : vector<8x32xf32>
      %cst_75 = arith.constant 9.99999974E-6 : f32
      %121 = vector.broadcast %cst_75 : f32 to vector<8x1xf32>
      %122 = arith.addf %118, %121 : vector<8x1xf32>
      %123 = math.rsqrt %122 : vector<8x1xf32>
      %124 = vector.broadcast %123 : vector<8x1xf32> to vector<8x32xf32>
      %125 = arith.mulf %120, %124 : vector<8x32xf32>
      %126 = vector.broadcast %106 : vector<1x32xf32> to vector<8x32xf32>
      %127 = arith.mulf %125, %126 : vector<8x32xf32>
      %128 = vector.broadcast %107 : vector<1x32xf32> to vector<8x32xf32>
      %129 = arith.addf %127, %128 : vector<8x32xf32>
      %cst_76 = arith.constant 0.000000e+00 : f32
      %130 = vector.broadcast %cst_76 : f32 to vector<8x32xf32>
      %131 = arith.cmpf one, %1, %130 : vector<8x32xf32>
      %132 = arith.extui %131 : vector<8x32xi1> to vector<8x32xi32>
      %133 = arith.sitofp %132 : vector<8x32xi32> to vector<8x32xf32>
      %cst_77 = arith.constant dense<0xFF800000> : vector<8xf32>
      %134 = vector.multi_reduction <maximumf>, %133, %cst_77 [1] : vector<8x32xf32> to vector<8xf32>
      %135 = vector.shape_cast %134 : vector<8xf32> to vector<8x1xf32>
      %136 = vector.broadcast %135 : vector<8x1xf32> to vector<8x32xf32>
      %137 = arith.mulf %129, %136 : vector<8x32xf32>
      %c0_78 = arith.constant 0 : index
      %c0_79 = arith.constant 0 : index
      %c0_80 = arith.constant 0 : index
      %138 = vector.load %arg18[%c0_78, %c0_79, %c0_80] : memref<1x8x32xf32, #tpu.memory_space<vmem>>, vector<1x8x32xf32>
      %139 = vector.shape_cast %138 : vector<1x8x32xf32> to vector<8x32xf32>
      %140 = vector.shape_cast %137 : vector<8x32xf32> to vector<1x8x32xf32>
      tpu.vector_store %arg18[%c0_78, %c0_79, %c0_80], %140 {strides = array<i32>} : memref<1x8x32xf32, #tpu.memory_space<vmem>>, vector<1x8x32xf32>,
    } else {
    }
    return
  }
  func.func @transform_0(%arg0: i32, %arg1: i32) -> (i32, i32, i32) {
    %c0_i32 = arith.constant 0 : i32
    %c0_i32_0 = arith.constant 0 : i32
    %c0_i32_1 = arith.constant 0 : i32
    return %arg0, %c0_i32, %c0_i32_0 : i32, i32, i32
  }
  func.func @transform_1(%arg0: i32, %arg1: i32) -> (i32, i32, i32) {
    %c0_i32 = arith.constant 0 : i32
    %c0_i32_0 = arith.constant 0 : i32
    %c0_i32_1 = arith.constant 0 : i32
    return %arg0, %c0_i32, %c0_i32_0 : i32, i32, i32
  }
  func.func @transform_2(%arg0: i32, %arg1: i32) -> (i32, i32, i32) {
    %c0_i32 = arith.constant 0 : i32
    %c0_i32_0 = arith.constant 0 : i32
    %c0_i32_1 = arith.constant 0 : i32
    return %arg1, %c0_i32, %c0_i32_0 : i32, i32, i32
  }
  func.func @transform_3(%arg0: i32, %arg1: i32) -> (i32, i32, i32) {
    %c0_i32 = arith.constant 0 : i32
    %c0_i32_0 = arith.constant 0 : i32
    %c0_i32_1 = arith.constant 0 : i32
    return %arg1, %c0_i32, %c0_i32_0 : i32, i32, i32
  }
  func.func @transform_4(%arg0: i32, %arg1: i32) -> (i32, i32, i32) {
    %c0_i32 = arith.constant 0 : i32
    %c0_i32_0 = arith.constant 0 : i32
    %c0_i32_1 = arith.constant 0 : i32
    return %arg1, %c0_i32, %c0_i32_0 : i32, i32, i32
  }
  func.func @transform_5(%arg0: i32, %arg1: i32) -> (i32, i32, i32) {
    %c0_i32 = arith.constant 0 : i32
    %c0_i32_0 = arith.constant 0 : i32
    %c0_i32_1 = arith.constant 0 : i32
    return %arg1, %c0_i32, %c0_i32_0 : i32, i32, i32
  }
  func.func @transform_6(%arg0: i32, %arg1: i32) -> (i32, i32, i32) {
    %c0_i32 = arith.constant 0 : i32
    %c0_i32_0 = arith.constant 0 : i32
    %c0_i32_1 = arith.constant 0 : i32
    return %arg1, %c0_i32, %c0_i32_0 : i32, i32, i32
  }
  func.func @transform_7(%arg0: i32, %arg1: i32) -> (i32, i32) {
    %c0_i32 = arith.constant 0 : i32
    %c0_i32_0 = arith.constant 0 : i32
    %c0_i32_1 = arith.constant 0 : i32
    return %c0_i32, %c0_i32_0 : i32, i32
  }
  func.func @transform_8(%arg0: i32, %arg1: i32) -> (i32, i32) {
    %c0_i32 = arith.constant 0 : i32
    %c0_i32_0 = arith.constant 0 : i32
    %c0_i32_1 = arith.constant 0 : i32
    return %c0_i32, %c0_i32_0 : i32, i32
  }
  func.func @transform_9(%arg0: i32, %arg1: i32) -> (i32, i32) {
    %c0_i32 = arith.constant 0 : i32
    %c0_i32_0 = arith.constant 0 : i32
    %c0_i32_1 = arith.constant 0 : i32
    return %c0_i32, %c0_i32_0 : i32, i32
  }
  func.func @transform_10(%arg0: i32, %arg1: i32) -> (i32, i32) {
    %c0_i32 = arith.constant 0 : i32
    %c0_i32_0 = arith.constant 0 : i32
    %c0_i32_1 = arith.constant 0 : i32
    return %c0_i32, %c0_i32_0 : i32, i32
  }
  func.func @transform_11(%arg0: i32, %arg1: i32) -> (i32, i32) {
    %c0_i32 = arith.constant 0 : i32
    %c0_i32_0 = arith.constant 0 : i32
    %c0_i32_1 = arith.constant 0 : i32
    return %c0_i32, %c0_i32_0 : i32, i32
  }
  func.func @transform_12(%arg0: i32, %arg1: i32) -> (i32, i32) {
    %c0_i32 = arith.constant 0 : i32
    %c0_i32_0 = arith.constant 0 : i32
    %c0_i32_1 = arith.constant 0 : i32
    return %c0_i32, %c0_i32_0 : i32, i32
  }
  func.func @transform_13(%arg0: i32, %arg1: i32) -> (i32, i32) {
    %c0_i32 = arith.constant 0 : i32
    %c0_i32_0 = arith.constant 0 : i32
    %c0_i32_1 = arith.constant 0 : i32
    return %c0_i32, %c0_i32_0 : i32, i32
  }
  func.func @transform_14(%arg0: i32, %arg1: i32) -> (i32, i32) {
    %c0_i32 = arith.constant 0 : i32
    %c0_i32_0 = arith.constant 0 : i32
    %c0_i32_1 = arith.constant 0 : i32
    return %c0_i32, %c0_i32_0 : i32, i32
  }
  func.func @transform_15(%arg0: i32, %arg1: i32) -> (i32, i32) {
    %c0_i32 = arith.constant 0 : i32
    %c0_i32_0 = arith.constant 0 : i32
    %c0_i32_1 = arith.constant 0 : i32
    return %c0_i32, %c0_i32_0 : i32, i32
  }
  func.func @transform_16(%arg0: i32, %arg1: i32) -> (i32, i32, i32) {
    %c0_i32 = arith.constant 0 : i32
    %c0_i32_0 = arith.constant 0 : i32
    %c0_i32_1 = arith.constant 0 : i32
    return %arg0, %c0_i32, %c0_i32_0 : i32, i32, i32
  }
  func.func @transform_17(%arg0: i32, %arg1: i32) -> (i32, i32, i32, i32) {
    %c0_i32 = arith.constant 0 : i32
    %c0_i32_0 = arith.constant 0 : i32
    %c0_i32_1 = arith.constant 0 : i32
    return %arg0, %arg1, %c0_i32, %c0_i32_0 : i32, i32, i32, i32
  }
  func.func @transform_18(%arg0: i32, %arg1: i32) -> (i32, i32, i32, i32) {
    %c0_i32 = arith.constant 0 : i32
    %c0_i32_0 = arith.constant 0 : i32
    %c0_i32_1 = arith.constant 0 : i32
    return %arg0, %arg1, %c0_i32, %c0_i32_0 : i32, i32, i32, i32
  }
}

module attributes {stable_mosaic.version = 11 : i64} {
  func.func @encoder_kernel(%arg0: i32, %arg1: i32, %arg2: memref<1x8x32xf32, #tpu.memory_space<vmem>>, %arg3: memref<1x8x32xf32, #tpu.memory_space<vmem>>, %arg4: memref<1x32x56xf32, #tpu.memory_space<vmem>>, %arg5: memref<1x1x56xf32, #tpu.memory_space<vmem>>, %arg6: memref<1x32x16xf32, #tpu.memory_space<vmem>>, %arg7: memref<1x1x16xf32, #tpu.memory_space<vmem>>, %arg8: memref<1x24x32xf32, #tpu.memory_space<vmem>>, %arg9: memref<1x32xf32, #tpu.memory_space<vmem>>, %arg10: memref<1x32xf32, #tpu.memory_space<vmem>>, %arg11: memref<1x32xf32, #tpu.memory_space<vmem>>, %arg12: memref<32x64xf32, #tpu.memory_space<vmem>>, %arg13: memref<1x64xf32, #tpu.memory_space<vmem>>, %arg14: memref<64x32xf32, #tpu.memory_space<vmem>>, %arg15: memref<1x32xf32, #tpu.memory_space<vmem>>, %arg16: memref<1x32xf32, #tpu.memory_space<vmem>>, %arg17: memref<1x32xf32, #tpu.memory_space<vmem>>, %arg18: memref<1x8x32xf32, #tpu.memory_space<vmem>>, %arg19: memref<1x1x8x8xf32, #tpu.memory_space<vmem>>, %arg20: memref<1x1x8x8xf32, #tpu.memory_space<vmem>>, %arg21: memref<8x32xf32, #tpu.memory_space<vmem>>) attributes {dimension_semantics = [#tpu.dimension_semantics<parallel>, #tpu.dimension_semantics<arbitrary>], iteration_bounds = array<i64: 2, 2>, scalar_prefetch = 0 : i64, scratch_operands = 1 : i64, tpu.core_type = #tpu.core_type<tc>, window_params = [{transform_indices = @transform_0, window_bounds = array<i64: 1, 8, 32>}, {transform_indices = @transform_1, window_bounds = array<i64: 1, 8, 32>}, {transform_indices = @transform_2, window_bounds = array<i64: 1, 32, 56>}, {transform_indices = @transform_3, window_bounds = array<i64: 1, 1, 56>}, {transform_indices = @transform_4, window_bounds = array<i64: 1, 32, 16>}, {transform_indices = @transform_5, window_bounds = array<i64: 1, 1, 16>}, {transform_indices = @transform_6, window_bounds = array<i64: 1, 24, 32>}, {pipeline_mode = #tpu.pipeline_mode<synchronous>, transform_indices = @transform_7, window_bounds = array<i64: 1, 32>}, {pipeline_mode = #tpu.pipeline_mode<synchronous>, transform_indices = @transform_8, window_bounds = array<i64: 1, 32>}, {pipeline_mode = #tpu.pipeline_mode<synchronous>, transform_indices = @transform_9, window_bounds = array<i64: 1, 32>}, {pipeline_mode = #tpu.pipeline_mode<synchronous>, transform_indices = @transform_10, window_bounds = array<i64: 32, 64>}, {pipeline_mode = #tpu.pipeline_mode<synchronous>, transform_indices = @transform_11, window_bounds = array<i64: 1, 64>}, {pipeline_mode = #tpu.pipeline_mode<synchronous>, transform_indices = @transform_12, window_bounds = array<i64: 64, 32>}, {pipeline_mode = #tpu.pipeline_mode<synchronous>, transform_indices = @transform_13, window_bounds = array<i64: 1, 32>}, {pipeline_mode = #tpu.pipeline_mode<synchronous>, transform_indices = @transform_14, window_bounds = array<i64: 1, 32>}, {pipeline_mode = #tpu.pipeline_mode<synchronous>, transform_indices = @transform_15, window_bounds = array<i64: 1, 32>}, {transform_indices = @transform_16, window_bounds = array<i64: 1, 8, 32>}, {transform_indices = @transform_17, window_bounds = array<i64: 1, 1, 8, 8>}, {transform_indices = @transform_18, window_bounds = array<i64: 1, 1, 8, 8>}]} {
    %c0 = arith.constant 0 : index
    %c0_0 = arith.constant 0 : index
    %c0_1 = arith.constant 0 : index
    %0 = vector.load %arg2[%c0, %c0_0, %c0_1] : memref<1x8x32xf32, #tpu.memory_space<vmem>>, vector<1x8x32xf32>
    %1 = vector.shape_cast %0 : vector<1x8x32xf32> to vector<8x32xf32>
    %c0_2 = arith.constant 0 : index
    %c0_3 = arith.constant 0 : index
    %c0_4 = arith.constant 0 : index
    %2 = vector.load %arg3[%c0_2, %c0_3, %c0_4] : memref<1x8x32xf32, #tpu.memory_space<vmem>>, vector<1x8x32xf32>
    %3 = vector.shape_cast %2 : vector<1x8x32xf32> to vector<8x32xf32>
    %c0_5 = arith.constant 0 : index
    %c0_6 = arith.constant 0 : index
    %c0_7 = arith.constant 0 : index
    %4 = vector.load %arg4[%c0_5, %c0_6, %c0_7] : memref<1x32x56xf32, #tpu.memory_space<vmem>>, vector<1x32x56xf32>
    %5 = vector.shape_cast %4 : vector<1x32x56xf32> to vector<32x56xf32>
    %cst = arith.constant dense<0.000000e+00> : vector<8x56xf32>
    %6 = tpu.matmul %1, %5, %cst {dimension_numbers = #tpu.dot_dimension_numbers<[1], [0], [0], [1], [0, 0, 1, 1], [], []>} : vector<8x32xf32>, vector<32x56xf32>, vector<8x56xf32> -> vector<8x56xf32>
    %c0_8 = arith.constant 0 : index
    %c0_9 = arith.constant 0 : index
    %c0_10 = arith.constant 0 : index
    %7 = vector.load %arg5[%c0_8, %c0_9, %c0_10] : memref<1x1x56xf32, #tpu.memory_space<vmem>>, vector<1x1x56xf32>
    %8 = vector.shape_cast %7 : vector<1x1x56xf32> to vector<1x56xf32>
    %9 = vector.broadcast %8 : vector<1x56xf32> to vector<8x56xf32>
    %10 = arith.addf %6, %9 : vector<8x56xf32>
    %c0_11 = arith.constant 0 : index
    %c0_12 = arith.constant 0 : index
    %c0_13 = arith.constant 0 : index
    %11 = vector.load %arg6[%c0_11, %c0_12, %c0_13] : memref<1x32x16xf32, #tpu.memory_space<vmem>>, vector<1x32x16xf32>
    %12 = vector.shape_cast %11 : vector<1x32x16xf32> to vector<32x16xf32>
    %cst_14 = arith.constant dense<0.000000e+00> : vector<8x16xf32>
    %13 = tpu.matmul %3, %12, %cst_14 {dimension_numbers = #tpu.dot_dimension_numbers<[1], [0], [0], [1], [0, 0, 1, 1], [], []>} : vector<8x32xf32>, vector<32x16xf32>, vector<8x16xf32> -> vector<8x16xf32>
    %c0_15 = arith.constant 0 : index
    %c0_16 = arith.constant 0 : index
    %c0_17 = arith.constant 0 : index
    %14 = vector.load %arg7[%c0_15, %c0_16, %c0_17] : memref<1x1x16xf32, #tpu.memory_space<vmem>>, vector<1x1x16xf32>
    %15 = vector.shape_cast %14 : vector<1x1x16xf32> to vector<1x16xf32>
    %16 = vector.broadcast %15 : vector<1x16xf32> to vector<8x16xf32>
    %17 = arith.addf %13, %16 : vector<8x16xf32>
    %18 = vector.extract_strided_slice %10 {offsets = [0, 0], sizes = [8, 16], strides = [1, 1]} : vector<8x56xf32> to vector<8x16xf32>
    %19 = vector.extract_strided_slice %10 {offsets = [0, 16], sizes = [8, 16], strides = [1, 1]} : vector<8x56xf32> to vector<8x16xf32>
    %20 = vector.extract_strided_slice %10 {offsets = [0, 32], sizes = [8, 16], strides = [1, 1]} : vector<8x56xf32> to vector<8x16xf32>
    %21 = vector.extract_strided_slice %10 {offsets = [0, 48], sizes = [8, 8], strides = [1, 1]} : vector<8x56xf32> to vector<8x8xf32>
    %22 = vector.extract_strided_slice %17 {offsets = [0, 0], sizes = [8, 8], strides = [1, 1]} : vector<8x16xf32> to vector<8x8xf32>
    %23 = vector.extract_strided_slice %17 {offsets = [0, 8], sizes = [8, 8], strides = [1, 1]} : vector<8x16xf32> to vector<8x8xf32>
    %cst_18 = arith.constant dense<0.000000e+00> : vector<8x8xf32>
    %24 = tpu.matmul %18, %19, %cst_18 {dimension_numbers = #tpu.dot_dimension_numbers<[1], [1], [0], [0], [0, 0, 1, 0], [], []>} : vector<8x16xf32>, vector<8x16xf32>, vector<8x8xf32> -> vector<8x8xf32>
    %cst_19 = arith.constant dense<0xFF800000> : vector<8xf32>
    %25 = vector.multi_reduction <maximumf>, %24, %cst_19 [1] : vector<8x8xf32> to vector<8xf32>
    %26 = vector.shape_cast %25 : vector<8xf32> to vector<8x1xf32>
    %27 = vector.broadcast %26 : vector<8x1xf32> to vector<8x8xf32>
    %28 = arith.subf %24, %27 : vector<8x8xf32>
    %29 = math.exp %28 : vector<8x8xf32>
    %cst_20 = arith.constant dense<0.000000e+00> : vector<8xf32>
    %30 = vector.multi_reduction <add>, %29, %cst_20 [1] : vector<8x8xf32> to vector<8xf32>
    %31 = vector.shape_cast %30 : vector<8xf32> to vector<8x1xf32>
    %32 = vector.broadcast %31 : vector<8x1xf32> to vector<8x8xf32>
    %33 = arith.divf %29, %32 : vector<8x8xf32>
    %c0_21 = arith.constant 0 : index
    %c0_22 = arith.constant 0 : index
    %c0_23 = arith.constant 0 : index
    %c0_24 = arith.constant 0 : index
    %34 = vector.load %arg19[%c0_21, %c0_22, %c0_23, %c0_24] : memref<1x1x8x8xf32, #tpu.memory_space<vmem>>, vector<1x1x8x8xf32>
    %35 = vector.shape_cast %34 : vector<1x1x8x8xf32> to vector<8x8xf32>
    %36 = vector.shape_cast %33 : vector<8x8xf32> to vector<1x1x8x8xf32>
    tpu.vector_store %arg19[%c0_21, %c0_22, %c0_23, %c0_24], %36 {strides = array<i32>} : memref<1x1x8x8xf32, #tpu.memory_space<vmem>>, vector<1x1x8x8xf32>,
    %cst_25 = arith.constant dense<0.000000e+00> : vector<8x16xf32>
    %37 = tpu.matmul %33, %20, %cst_25 {dimension_numbers = #tpu.dot_dimension_numbers<[1], [0], [0], [1], [0, 0, 1, 1], [], []>} : vector<8x8xf32>, vector<8x16xf32>, vector<8x16xf32> -> vector<8x16xf32>
    %cst_26 = arith.constant dense<0.000000e+00> : vector<8x8xf32>
    %38 = tpu.matmul %21, %22, %cst_26 {dimension_numbers = #tpu.dot_dimension_numbers<[1], [1], [0], [0], [0, 0, 1, 0], [], []>} : vector<8x8xf32>, vector<8x8xf32>, vector<8x8xf32> -> vector<8x8xf32>
    %cst_27 = arith.constant dense<0xFF800000> : vector<8xf32>
    %39 = vector.multi_reduction <maximumf>, %38, %cst_27 [1] : vector<8x8xf32> to vector<8xf32>
    %40 = vector.shape_cast %39 : vector<8xf32> to vector<8x1xf32>
    %41 = vector.broadcast %40 : vector<8x1xf32> to vector<8x8xf32>
    %42 = arith.subf %38, %41 : vector<8x8xf32>
    %43 = math.exp %42 : vector<8x8xf32>
    %cst_28 = arith.constant dense<0.000000e+00> : vector<8xf32>
    %44 = vector.multi_reduction <add>, %43, %cst_28 [1] : vector<8x8xf32> to vector<8xf32>
    %45 = vector.shape_cast %44 : vector<8xf32> to vector<8x1xf32>
    %46 = vector.broadcast %45 : vector<8x1xf32> to vector<8x8xf32>
    %47 = arith.divf %43, %46 : vector<8x8xf32>
    %c0_29 = arith.constant 0 : index
    %c0_30 = arith.constant 0 : index
    %c0_31 = arith.constant 0 : index
    %c0_32 = arith.constant 0 : index
    %48 = vector.load %arg20[%c0_29, %c0_30, %c0_31, %c0_32] : memref<1x1x8x8xf32, #tpu.memory_space<vmem>>, vector<1x1x8x8xf32>
    %49 = vector.shape_cast %48 : vector<1x1x8x8xf32> to vector<8x8xf32>
    %50 = vector.shape_cast %47 : vector<8x8xf32> to vector<1x1x8x8xf32>
    tpu.vector_store %arg20[%c0_29, %c0_30, %c0_31, %c0_32], %50 {strides = array<i32>} : memref<1x1x8x8xf32, #tpu.memory_space<vmem>>, vector<1x1x8x8xf32>,
    %cst_33 = arith.constant dense<0.000000e+00> : vector<8x8xf32>
    %51 = tpu.matmul %47, %23, %cst_33 {dimension_numbers = #tpu.dot_dimension_numbers<[1], [0], [0], [1], [0, 0, 1, 1], [], []>} : vector<8x8xf32>, vector<8x8xf32>, vector<8x8xf32> -> vector<8x8xf32>
    %c0_34 = arith.constant 0 : index
    %c0_35 = arith.constant 0 : index
    %c0_36 = arith.constant 0 : index
    %52 = vector.load %arg8[%c0_34, %c0_35, %c0_36] : memref<1x24x32xf32, #tpu.memory_space<vmem>>, vector<1x24x32xf32>
    %53 = vector.shape_cast %52 : vector<1x24x32xf32> to vector<24x32xf32>
    %54 = vector.extract_strided_slice %53 {offsets = [0, 0], sizes = [16, 32], strides = [1, 1]} : vector<24x32xf32> to vector<16x32xf32>
    %cst_37 = arith.constant dense<0.000000e+00> : vector<8x32xf32>
    %55 = tpu.matmul %37, %54, %cst_37 {dimension_numbers = #tpu.dot_dimension_numbers<[1], [0], [0], [1], [0, 0, 1, 1], [], []>} : vector<8x16xf32>, vector<16x32xf32>, vector<8x32xf32> -> vector<8x32xf32>
    %56 = vector.extract_strided_slice %53 {offsets = [16, 0], sizes = [8, 32], strides = [1, 1]} : vector<24x32xf32> to vector<8x32xf32>
    %cst_38 = arith.constant dense<0.000000e+00> : vector<8x32xf32>
    %57 = tpu.matmul %51, %56, %cst_38 {dimension_numbers = #tpu.dot_dimension_numbers<[1], [0], [0], [1], [0, 0, 1, 1], [], []>} : vector<8x8xf32>, vector<8x32xf32>, vector<8x32xf32> -> vector<8x32xf32>
    %58 = arith.addf %55, %57 : vector<8x32xf32>
    %c0_i32 = arith.constant 0 : i32
    %59 = arith.cmpi eq, %arg1, %c0_i32 : i32
    %60 = arith.extui %59 : i1 to i32
    %c0_i32_39 = arith.constant 0 : i32
    %61 = arith.cmpi ne, %60, %c0_i32_39 : i32
    scf.if %61 {
      %c0_45 = arith.constant 0 : index
      %c0_46 = arith.constant 0 : index
      %68 = vector.load %arg9[%c0_45, %c0_46] : memref<1x32xf32, #tpu.memory_space<vmem>>, vector<1x32xf32>
      %69 = vector.broadcast %68 : vector<1x32xf32> to vector<8x32xf32>
      %70 = arith.addf %1, %69 : vector<8x32xf32>
      %c0_47 = arith.constant 0 : index
      %c0_48 = arith.constant 0 : index
      %71 = vector.load %arg21[%c0_47, %c0_48] : memref<8x32xf32, #tpu.memory_space<vmem>>, vector<8x32xf32>
      tpu.vector_store %arg21[%c0_47, %c0_48], %70 {strides = array<i32>} : memref<8x32xf32, #tpu.memory_space<vmem>>, vector<8x32xf32>,
    } else {
    }
    %c0_40 = arith.constant 0 : index
    %c0_41 = arith.constant 0 : index
    %62 = vector.load %arg21[%c0_40, %c0_41] : memref<8x32xf32, #tpu.memory_space<vmem>>, vector<8x32xf32>
    %63 = arith.addf %62, %58 : vector<8x32xf32>
    %c0_42 = arith.constant 0 : index
    %c0_43 = arith.constant 0 : index
    %64 = vector.load %arg21[%c0_42, %c0_43] : memref<8x32xf32, #tpu.memory_space<vmem>>, vector<8x32xf32>
    tpu.vector_store %arg21[%c0_42, %c0_43], %63 {strides = array<i32>} : memref<8x32xf32, #tpu.memory_space<vmem>>, vector<8x32xf32>,
    %c1_i32 = arith.constant 1 : i32
    %65 = arith.cmpi eq, %arg1, %c1_i32 : i32
    %66 = arith.extui %65 : i1 to i32
    %c0_i32_44 = arith.constant 0 : i32
    %67 = arith.cmpi ne, %66, %c0_i32_44 : i32
    scf.if %67 {
      %c0_45 = arith.constant 0 : index
      %c0_46 = arith.constant 0 : index
      %68 = vector.load %arg21[%c0_45, %c0_46] : memref<8x32xf32, #tpu.memory_space<vmem>>, vector<8x32xf32>
      %c0_47 = arith.constant 0 : index
      %c0_48 = arith.constant 0 : index
      %69 = vector.load %arg10[%c0_47, %c0_48] : memref<1x32xf32, #tpu.memory_space<vmem>>, vector<1x32xf32>
      %c0_49 = arith.constant 0 : index
      %c0_50 = arith.constant 0 : index
      %70 = vector.load %arg11[%c0_49, %c0_50] : memref<1x32xf32, #tpu.memory_space<vmem>>, vector<1x32xf32>
      %cst_51 = arith.constant dense<0.000000e+00> : vector<8xf32>
      %71 = vector.multi_reduction <add>, %68, %cst_51 [1] : vector<8x32xf32> to vector<8xf32>
      %72 = vector.shape_cast %71 : vector<8xf32> to vector<8x1xf32>
      %cst_52 = arith.constant 3.200000e+01 : f32
      %73 = vector.broadcast %cst_52 : f32 to vector<8x1xf32>
      %74 = arith.divf %72, %73 : vector<8x1xf32>
      %75 = vector.broadcast %74 : vector<8x1xf32> to vector<8x32xf32>
      %76 = arith.subf %68, %75 : vector<8x32xf32>
      %77 = arith.mulf %76, %76 : vector<8x32xf32>
      %cst_53 = arith.constant dense<0.000000e+00> : vector<8xf32>
      %78 = vector.multi_reduction <add>, %77, %cst_53 [1] : vector<8x32xf32> to vector<8xf32>
      %79 = vector.shape_cast %78 : vector<8xf32> to vector<8x1xf32>
      %cst_54 = arith.constant 3.200000e+01 : f32
      %80 = vector.broadcast %cst_54 : f32 to vector<8x1xf32>
      %81 = arith.divf %79, %80 : vector<8x1xf32>
      %82 = vector.broadcast %74 : vector<8x1xf32> to vector<8x32xf32>
      %83 = arith.subf %68, %82 : vector<8x32xf32>
      %cst_55 = arith.constant 9.99999974E-6 : f32
      %84 = vector.broadcast %cst_55 : f32 to vector<8x1xf32>
      %85 = arith.addf %81, %84 : vector<8x1xf32>
      %86 = math.rsqrt %85 : vector<8x1xf32>
      %87 = vector.broadcast %86 : vector<8x1xf32> to vector<8x32xf32>
      %88 = arith.mulf %83, %87 : vector<8x32xf32>
      %89 = vector.broadcast %69 : vector<1x32xf32> to vector<8x32xf32>
      %90 = arith.mulf %88, %89 : vector<8x32xf32>
      %91 = vector.broadcast %70 : vector<1x32xf32> to vector<8x32xf32>
      %92 = arith.addf %90, %91 : vector<8x32xf32>
      %c0_56 = arith.constant 0 : index
      %c0_57 = arith.constant 0 : index
      %93 = vector.load %arg12[%c0_56, %c0_57] : memref<32x64xf32, #tpu.memory_space<vmem>>, vector<32x64xf32>
      %cst_58 = arith.constant dense<0.000000e+00> : vector<8x64xf32>
      %94 = tpu.matmul %92, %93, %cst_58 {dimension_numbers = #tpu.dot_dimension_numbers<[1], [0], [0], [1], [0, 0, 1, 1], [], []>} : vector<8x32xf32>, vector<32x64xf32>, vector<8x64xf32> -> vector<8x64xf32>
      %c0_59 = arith.constant 0 : index
      %c0_60 = arith.constant 0 : index
      %95 = vector.load %arg13[%c0_59, %c0_60] : memref<1x64xf32, #tpu.memory_space<vmem>>, vector<1x64xf32>
      %96 = vector.broadcast %95 : vector<1x64xf32> to vector<8x64xf32>
      %97 = arith.addf %94, %96 : vector<8x64xf32>
      %cst_61 = arith.constant 0.000000e+00 : f32
      %98 = vector.broadcast %cst_61 : f32 to vector<8x64xf32>
      %99 = arith.maximumf %97, %98 : vector<8x64xf32>
      %c0_62 = arith.constant 0 : index
      %c0_63 = arith.constant 0 : index
      %100 = vector.load %arg14[%c0_62, %c0_63] : memref<64x32xf32, #tpu.memory_space<vmem>>, vector<64x32xf32>
      %cst_64 = arith.constant dense<0.000000e+00> : vector<8x32xf32>
      %101 = tpu.matmul %99, %100, %cst_64 {dimension_numbers = #tpu.dot_dimension_numbers<[1], [0], [0], [1], [0, 0, 1, 1], [], []>} : vector<8x64xf32>, vector<64x32xf32>, vector<8x32xf32> -> vector<8x32xf32>
      %c0_65 = arith.constant 0 : index
      %c0_66 = arith.constant 0 : index
      %102 = vector.load %arg15[%c0_65, %c0_66] : memref<1x32xf32, #tpu.memory_space<vmem>>, vector<1x32xf32>
      %103 = vector.broadcast %102 : vector<1x32xf32> to vector<8x32xf32>
      %104 = arith.addf %101, %103 : vector<8x32xf32>
      %105 = arith.addf %104, %92 : vector<8x32xf32>
      %c0_67 = arith.constant 0 : index
      %c0_68 = arith.constant 0 : index
      %106 = vector.load %arg16[%c0_67, %c0_68] : memref<1x32xf32, #tpu.memory_space<vmem>>, vector<1x32xf32>
      %c0_69 = arith.constant 0 : index
      %c0_70 = arith.constant 0 : index
      %107 = vector.load %arg17[%c0_69, %c0_70] : memref<1x32xf32, #tpu.memory_space<vmem>>, vector<1x32xf32>
      %cst_71 = arith.constant dense<0.000000e+00> : vector<8xf32>
      %108 = vector.multi_reduction <add>, %105, %cst_71 [1] : vector<8x32xf32> to vector<8xf32>
      %109 = vector.shape_cast %108 : vector<8xf32> to vector<8x1xf32>
      %cst_72 = arith.constant 3.200000e+01 : f32
      %110 = vector.broadcast %cst_72 : f32 to vector<8x1xf32>
      %111 = arith.divf %109, %110 : vector<8x1xf32>
      %112 = vector.broadcast %111 : vector<8x1xf32> to vector<8x32xf32>
      %113 = arith.subf %105, %112 : vector<8x32xf32>
      %114 = arith.mulf %113, %113 : vector<8x32xf32>
      %cst_73 = arith.constant dense<0.000000e+00> : vector<8xf32>
      %115 = vector.multi_reduction <add>, %114, %cst_73 [1] : vector<8x32xf32> to vector<8xf32>
      %116 = vector.shape_cast %115 : vector<8xf32> to vector<8x1xf32>
      %cst_74 = arith.constant 3.200000e+01 : f32
      %117 = vector.broadcast %cst_74 : f32 to vector<8x1xf32>
      %118 = arith.divf %116, %117 : vector<8x1xf32>
      %119 = vector.broadcast %111 : vector<8x1xf32> to vector<8x32xf32>
      %120 = arith.subf %105, %119 : vector<8x32xf32>
      %cst_75 = arith.constant 9.99999974E-6 : f32
      %121 = vector.broadcast %cst_75 : f32 to vector<8x1xf32>
      %122 = arith.addf %118, %121 : vector<8x1xf32>
      %123 = math.rsqrt %122 : vector<8x1xf32>
      %124 = vector.broadcast %123 : vector<8x1xf32> to vector<8x32xf32>
      %125 = arith.mulf %120, %124 : vector<8x32xf32>
      %126 = vector.broadcast %106 : vector<1x32xf32> to vector<8x32xf32>
      %127 = arith.mulf %125, %126 : vector<8x32xf32>
      %128 = vector.broadcast %107 : vector<1x32xf32> to vector<8x32xf32>
      %129 = arith.addf %127, %128 : vector<8x32xf32>
      %cst_76 = arith.constant 0.000000e+00 : f32
      %130 = vector.broadcast %cst_76 : f32 to vector<8x32xf32>
      %131 = arith.cmpf one, %1, %130 : vector<8x32xf32>
      %132 = arith.extui %131 : vector<8x32xi1> to vector<8x32xi32>
      %133 = arith.sitofp %132 : vector<8x32xi32> to vector<8x32xf32>
      %cst_77 = arith.constant dense<0xFF800000> : vector<8xf32>
      %134 = vector.multi_reduction <maximumf>, %133, %cst_77 [1] : vector<8x32xf32> to vector<8xf32>
      %135 = vector.shape_cast %134 : vector<8xf32> to vector<8x1xf32>
      %136 = vector.broadcast %135 : vector<8x1xf32> to vector<8x32xf32>
      %137 = arith.mulf %129, %136 : vector<8x32xf32>
      %c0_78 = arith.constant 0 : index
      %c0_79 = arith.constant 0 : index
      %c0_80 = arith.constant 0 : index
      %138 = vector.load %arg18[%c0_78, %c0_79, %c0_80] : memref<1x8x32xf32, #tpu.memory_space<vmem>>, vector<1x8x32xf32>
      %139 = vector.shape_cast %138 : vector<1x8x32xf32> to vector<8x32xf32>
      %140 = vector.shape_cast %137 : vector<8x32xf32> to vector<1x8x32xf32>
      tpu.vector_store %arg18[%c0_78, %c0_79, %c0_80], %140 {strides = array<i32>} : memref<1x8x32xf32, #tpu.memory_space<vmem>>, vector<1x8x32xf32>,
    } else {
    }
    return
  }
  func.func @transform_0(%arg0: i32, %arg1: i32) -> (i32, i32, i32) {
    %c0_i32 = arith.constant 0 : i32
    %c0_i32_0 = arith.constant 0 : i32
    %c0_i32_1 = arith.constant 0 : i32
    return %arg0, %c0_i32, %c0_i32_0 : i32, i32, i32
  }
  func.func @transform_1(%arg0: i32, %arg1: i32) -> (i32, i32, i32) {
    %c0_i32 = arith.constant 0 : i32
    %c0_i32_0 = arith.constant 0 : i32
    %c0_i32_1 = arith.constant 0 : i32
    return %arg0, %c0_i32, %c0_i32_0 : i32, i32, i32
  }
  func.func @transform_2(%arg0: i32, %arg1: i32) -> (i32, i32, i32) {
    %c0_i32 = arith.constant 0 : i32
    %c0_i32_0 = arith.constant 0 : i32
    %c0_i32_1 = arith.constant 0 : i32
    return %arg1, %c0_i32, %c0_i32_0 : i32, i32, i32
  }
  func.func @transform_3(%arg0: i32, %arg1: i32) -> (i32, i32, i32) {
    %c0_i32 = arith.constant 0 : i32
    %c0_i32_0 = arith.constant 0 : i32
    %c0_i32_1 = arith.constant 0 : i32
    return %arg1, %c0_i32, %c0_i32_0 : i32, i32, i32
  }
  func.func @transform_4(%arg0: i32, %arg1: i32) -> (i32, i32, i32) {
    %c0_i32 = arith.constant 0 : i32
    %c0_i32_0 = arith.constant 0 : i32
    %c0_i32_1 = arith.constant 0 : i32
    return %arg1, %c0_i32, %c0_i32_0 : i32, i32, i32
  }
  func.func @transform_5(%arg0: i32, %arg1: i32) -> (i32, i32, i32) {
    %c0_i32 = arith.constant 0 : i32
    %c0_i32_0 = arith.constant 0 : i32
    %c0_i32_1 = arith.constant 0 : i32
    return %arg1, %c0_i32, %c0_i32_0 : i32, i32, i32
  }
  func.func @transform_6(%arg0: i32, %arg1: i32) -> (i32, i32, i32) {
    %c0_i32 = arith.constant 0 : i32
    %c0_i32_0 = arith.constant 0 : i32
    %c0_i32_1 = arith.constant 0 : i32
    return %arg1, %c0_i32, %c0_i32_0 : i32, i32, i32
  }
  func.func @transform_7(%arg0: i32, %arg1: i32) -> (i32, i32) {
    %c0_i32 = arith.constant 0 : i32
    %c0_i32_0 = arith.constant 0 : i32
    %c0_i32_1 = arith.constant 0 : i32
    return %c0_i32, %c0_i32_0 : i32, i32
  }
  func.func @transform_8(%arg0: i32, %arg1: i32) -> (i32, i32) {
    %c0_i32 = arith.constant 0 : i32
    %c0_i32_0 = arith.constant 0 : i32
    %c0_i32_1 = arith.constant 0 : i32
    return %c0_i32, %c0_i32_0 : i32, i32
  }
  func.func @transform_9(%arg0: i32, %arg1: i32) -> (i32, i32) {
    %c0_i32 = arith.constant 0 : i32
    %c0_i32_0 = arith.constant 0 : i32
    %c0_i32_1 = arith.constant 0 : i32
    return %c0_i32, %c0_i32_0 : i32, i32
  }
  func.func @transform_10(%arg0: i32, %arg1: i32) -> (i32, i32) {
    %c0_i32 = arith.constant 0 : i32
    %c0_i32_0 = arith.constant 0 : i32
    %c0_i32_1 = arith.constant 0 : i32
    return %c0_i32, %c0_i32_0 : i32, i32
  }
  func.func @transform_11(%arg0: i32, %arg1: i32) -> (i32, i32) {
    %c0_i32 = arith.constant 0 : i32
    %c0_i32_0 = arith.constant 0 : i32
    %c0_i32_1 = arith.constant 0 : i32
    return %c0_i32, %c0_i32_0 : i32, i32
  }
  func.func @transform_12(%arg0: i32, %arg1: i32) -> (i32, i32) {
    %c0_i32 = arith.constant 0 : i32
    %c0_i32_0 = arith.constant 0 : i32
    %c0_i32_1 = arith.constant 0 : i32
    return %c0_i32, %c0_i32_0 : i32, i32
  }
  func.func @transform_13(%arg0: i32, %arg1: i32) -> (i32, i32) {
    %c0_i32 = arith.constant 0 : i32
    %c0_i32_0 = arith.constant 0 : i32
    %c0_i32_1 = arith.constant 0 : i32
    return %c0_i32, %c0_i32_0 : i32, i32
  }
  func.func @transform_14(%arg0: i32, %arg1: i32) -> (i32, i32) {
    %c0_i32 = arith.constant 0 : i32
    %c0_i32_0 = arith.constant 0 : i32
    %c0_i32_1 = arith.constant 0 : i32
    return %c0_i32, %c0_i32_0 : i32, i32
  }
  func.func @transform_15(%arg0: i32, %arg1: i32) -> (i32, i32) {
    %c0_i32 = arith.constant 0 : i32
    %c0_i32_0 = arith.constant 0 : i32
    %c0_i32_1 = arith.constant 0 : i32
    return %c0_i32, %c0_i32_0 : i32, i32
  }
  func.func @transform_16(%arg0: i32, %arg1: i32) -> (i32, i32, i32) {
    %c0_i32 = arith.constant 0 : i32
    %c0_i32_0 = arith.constant 0 : i32
    %c0_i32_1 = arith.constant 0 : i32
    return %arg0, %c0_i32, %c0_i32_0 : i32, i32, i32
  }
  func.func @transform_17(%arg0: i32, %arg1: i32) -> (i32, i32, i32, i32) {
    %c0_i32 = arith.constant 0 : i32
    %c0_i32_0 = arith.constant 0 : i32
    %c0_i32_1 = arith.constant 0 : i32
    return %arg0, %arg1, %c0_i32, %c0_i32_0 : i32, i32, i32, i32
  }
  func.func @transform_18(%arg0: i32, %arg1: i32) -> (i32, i32, i32, i32) {
    %c0_i32 = arith.constant 0 : i32
    %c0_i32_0 = arith.constant 0 : i32
    %c0_i32_1 = arith.constant 0 : i32
    return %arg0, %arg1, %c0_i32, %c0_i32_0 : i32, i32, i32, i32
  }
}

</mosaic_0001>

<llo_original>
// kernel: tpu_custom_call.1
$region0: #{tpu_custom_call.1}
  #allocation0 [shape = 'u32[]', space=smem, size = 0x4, offset = 0x4, fixed_abs, tag = 'smem constant byte address 0x4 - core index']
  #allocation1 [shape = 'u32[144,128]{1,0:T(1,128)}', space=vmem, size = 0x12000, scoped, tag = 'internal scratch']
  #allocation2 [shape = 'f32[8,32]{1,0:T(8,128)}', space=vmem, size = 0x1000, scoped, tag = 'scratch operand']
  %s0 = inlined_call_operand.vmem [shape: f32[2,8,32], index: 0, kind: input, shape index: {}]
  %s1 = inlined_call_operand.hbm [shape: f32[2,8,32], index: 1, kind: input, shape index: {}]
  %s2 = inlined_call_operand.vmem [shape: f32[2,32,56], index: 2, kind: input, shape index: {}]
  %s3 = inlined_call_operand.vmem [shape: f32[2,1,56], index: 3, kind: input, shape index: {}]
  %s4 = inlined_call_operand.vmem [shape: f32[2,32,16], index: 4, kind: input, shape index: {}]
  %s5 = inlined_call_operand.vmem [shape: f32[2,1,16], index: 5, kind: input, shape index: {}]
  %s6 = inlined_call_operand.vmem [shape: f32[2,24,32], index: 6, kind: input, shape index: {}]
  %s7 = inlined_call_operand.vmem [shape: f32[1,32], index: 7, kind: input, shape index: {}]
  %s8 = inlined_call_operand.vmem [shape: f32[1,32], index: 8, kind: input, shape index: {}]
  %s9 = inlined_call_operand.vmem [shape: f32[1,32], index: 9, kind: input, shape index: {}]
  %s10 = inlined_call_operand.vmem [shape: f32[32,64], index: 10, kind: input, shape index: {}]
  %s11 = inlined_call_operand.vmem [shape: f32[1,64], index: 11, kind: input, shape index: {}]
  %s12 = inlined_call_operand.vmem [shape: f32[64,32], index: 12, kind: input, shape index: {}]
  %s13 = inlined_call_operand.vmem [shape: f32[1,32], index: 13, kind: input, shape index: {}]
  %s14 = inlined_call_operand.vmem [shape: f32[1,32], index: 14, kind: input, shape index: {}]
  %s15 = inlined_call_operand.vmem [shape: f32[1,32], index: 15, kind: input, shape index: {}]
  %s16 = inlined_call_operand.hbm [shape: f32[2,8,32], index: 16, kind: output, shape index: {0}]
  %s17 = inlined_call_operand.hbm [shape: f32[2,2,8,8], index: 17, kind: output, shape index: {1}]
  %s18 = inlined_call_operand.hbm [shape: f32[2,2,8,8], index: 18, kind: output, shape index: {2}]
  %19 = xla_tuple %s16, %s17, %s18
  %s20 = sld [smem:[#allocation0]]
  $region125: #{tpu_custom_call.1} parent=0
    _
  %s22 = ssub.s32 1, %s20
  %s23 = scalar_select 0, %s22, %s20
  $region1: #{tpu_custom_call.1} parent=0
    #allocation3 [shape = 'u8[8192]{0}', space=vmem, size = 0x2000, scoped, tag = 'input window, operand 1']
    #allocation4 [shape = 's32[2]{0}', space=sflag, size = 0x8, scoped, tag = 'scoped memory for tpu_custom_call.1']
    #allocation5 [shape = 's32[2]{0}', space=sflag, size = 0x8, scoped, tag = 'scoped memory for tpu_custom_call.1']
    #allocation6 [shape = 'u8[8192]{0}', space=vmem, size = 0x2000, scoped, tag = 'output window, operand 0']
    #allocation7 [shape = 'u8[8192]{0}', space=vmem, size = 0x2000, scoped, tag = 'output window, operand 1']
    #allocation8 [shape = 's32[2]{0}', space=sflag, size = 0x8, scoped, tag = 'scoped memory for tpu_custom_call.1']
    #allocation9 [shape = 'u8[8192]{0}', space=vmem, size = 0x2000, scoped, tag = 'output window, operand 2']
    %24 = vsyncpa [#allocation4], 0
    %s25 = scalar_lea.sflag [#allocation4], 1
    %26 = vsyncpa %s25, 0
    %27 = vsyncpa [#allocation5], 0
    %s28 = scalar_lea.sflag [#allocation5], 1
    %29 = vsyncpa %s28, 0
    %30 = vsyncpa [#allocation8], 0
    %s31 = scalar_lea.sflag [#allocation8], 1
    %32 = vsyncpa %s31, 0
    loop: start=0, step=1, limit=6
    $region2: #{tpu_custom_call.1} parent=1 // loop_pre_header
      _
    $region3: #{tpu_custom_call.1} parent=1 // loop_header
      %s34 = sphi 0, %s38
      %p35 = scmp.ge.s32.totalorder %s34, 6
      %s41 = sphi 0, %s53
      %s42 = sphi 0, %s49
      %s43 = sphi 0, %s41
      %s44 = sphi 0, %s42
      %s45 = sphi 0, %s43
      %s46 = sphi 0, %s44
      %s56 = sphi 0, %s58
      %s59 = sphi 0, %s56
      %s60 = sphi 0, %s59
      %s76 = sphi 0, %s60
      %s82 = sphi 0, %s84
      %s85 = sphi 0, %s82
      %s86 = sphi 0, %s85
      %s102 = sphi 0, %s86
      %s108 = sphi 0, %s110
      %s111 = sphi 0, %s108
      %s112 = sphi 0, %s111
      %s128 = sphi 0, %s112
      %s134 = sphi 0, %s136
      %s137 = sphi 0, %s134
      %s138 = sphi 0, %s137
      %s154 = sphi 0, %s138
      %s160 = sphi 0, %s162
      %s163 = sphi 0, %s160
      %s164 = sphi 0, %s163
      %s180 = sphi 0, %s164
      %s186 = sphi 0, %s188
      %s189 = sphi 0, %s186
      %s190 = sphi 0, %s189
      %s206 = sphi 0, %s190
      %s212 = sphi 0, %s214
      %s215 = sphi 0, %s212
      %s216 = sphi 0, %s215
      %s232 = sphi 0, %s216
      %s236 = sphi 0, %s236
      %s238 = sphi 0, %s236
      %s239 = sphi 0, %s238
      %s253 = sphi 0, %s239
      %s257 = sphi 0, %s257
      %s259 = sphi 0, %s257
      %s260 = sphi 0, %s259
      %s274 = sphi 0, %s260
      %s278 = sphi 0, %s278
      %s280 = sphi 0, %s278
      %s281 = sphi 0, %s280
      %s295 = sphi 0, %s281
      %s299 = sphi 0, %s299
      %s301 = sphi 0, %s299
      %s302 = sphi 0, %s301
      %s316 = sphi 0, %s302
      %s320 = sphi 0, %s320
      %s322 = sphi 0, %s320
      %s323 = sphi 0, %s322
      %s337 = sphi 0, %s323
      %s341 = sphi 0, %s341
      %s343 = sphi 0, %s341
      %s344 = sphi 0, %s343
      %s358 = sphi 0, %s344
      %s362 = sphi 0, %s362
      %s364 = sphi 0, %s362
      %s365 = sphi 0, %s364
      %s379 = sphi 0, %s365
      %s383 = sphi 0, %s383
      %s385 = sphi 0, %s383
      %s386 = sphi 0, %s385
      %s400 = sphi 0, %s386
      %s404 = sphi 0, %s404
      %s406 = sphi 0, %s404
      %s407 = sphi 0, %s406
      %s421 = sphi 0, %s407
      %s427 = sphi 0, %s429
      %s430 = sphi 0, %s427
      %s431 = sphi 0, %s430
      %s447 = sphi 0, %s431
      %s455 = sphi 0, %s457
      %s458 = sphi 0, %s455
      %s459 = sphi 0, %s458
      %s475 = sphi 0, %s459
      %s483 = sphi 0, %s485
      %s486 = sphi 0, %s483
      %s487 = sphi 0, %s486
      %s503 = sphi 0, %s487
    $region4: #{tpu_custom_call.1} parent=1 // loop_header_branch
      %37 = sbr.rel (%p35) target = $region8
    $region5: #{tpu_custom_call.1} parent=1 // loop_body
      %s39 = ssub.s32 %s34, 1
      %s40 = ssub.s32 %s34, 2
      %s47 = sadd.s32 1, %s42
      %p48 = scmp.ge.s32.totalorder %s47, 2
      %s49 = scalar_select %p48, 0, %s47
      %s50 = sadd.s32 1, %s41
      %s51 = scalar_select %p48, %s50, %s41
      %p52 = scmp.ge.s32.totalorder %s51, 2
      %s53 = scalar_select %p52, 0, %s51
      %s54 = ssub.s32 %s41, %s53
      %p55 = scmp.eq.s32.totalorder %s54, 0
      %s57 = sadd.s32 %s56, 1
      %s58 = scalar_select %p55, %s56, %s57
      %p61 = pneg %p55
      %p62 = scmp.eq.s32.totalorder %s34, 3
      %p63 = por %p61, %p62
      %p64 = scmp.ne.s32.totalorder %s56, %s59
      %p65 = scmp.eq.s32.totalorder %s34, 0
      %p66 = por %p64, %p65
      %p67 = scmp.ne.s32.totalorder %s56, %s59
      %p68 = scmp.eq.s32.totalorder %s39, 3
      %p69 = por %p67, %p68
      %p70 = scmp.ne.s32.totalorder %s59, %s60
      %p71 = scmp.eq.s32.totalorder %s39, 0
      %p72 = por %p70, %p71
      %p73 = scmp.ne.s32.totalorder %s59, %s60
      %p74 = scmp.eq.s32.totalorder %s40, 3
      %p75 = por %p73, %p74
      %p77 = scmp.ne.s32.totalorder %s60, %s76
      %p78 = scmp.eq.s32.totalorder %s40, 0
      %p79 = por %p77, %p78
      %s80 = ssub.s32 %s41, %s53
      %p81 = scmp.eq.s32.totalorder %s80, 0
      %s83 = sadd.s32 %s82, 1
      %s84 = scalar_select %p81, %s82, %s83
      %p87 = pneg %p81
      %p88 = scmp.eq.s32.totalorder %s34, 3
      %p89 = por %p87, %p88
      %p90 = scmp.ne.s32.totalorder %s82, %s85
      %p91 = scmp.eq.s32.totalorder %s34, 0
      %p92 = por %p90, %p91
      %p93 = scmp.ne.s32.totalorder %s82, %s85
      %p94 = scmp.eq.s32.totalorder %s39, 3
      %p95 = por %p93, %p94
      %p96 = scmp.ne.s32.totalorder %s85, %s86
      %p97 = scmp.eq.s32.totalorder %s39, 0
      %p98 = por %p96, %p97
      %p99 = scmp.ne.s32.totalorder %s85, %s86
      %p100 = scmp.eq.s32.totalorder %s40, 3
      %p101 = por %p99, %p100
      %p103 = scmp.ne.s32.totalorder %s86, %s102
      %p104 = scmp.eq.s32.totalorder %s40, 0
      %p105 = por %p103, %p104
      %s106 = ssub.s32 %s42, %s49
      %p107 = scmp.eq.s32.totalorder %s106, 0
      %s109 = sadd.s32 %s108, 1
      %s110 = scalar_select %p107, %s108, %s109
      %p113 = pneg %p107
      %p114 = scmp.eq.s32.totalorder %s34, 3
      %p115 = por %p113, %p114
      %p116 = scmp.ne.s32.totalorder %s108, %s111
      %p117 = scmp.eq.s32.totalorder %s34, 0
      %p118 = por %p116, %p117
      %p119 = scmp.ne.s32.totalorder %s108, %s111
      %p120 = scmp.eq.s32.totalorder %s39, 3
      %p121 = por %p119, %p120
      %p122 = scmp.ne.s32.totalorder %s111, %s112
      %p123 = scmp.eq.s32.totalorder %s39, 0
      %p124 = por %p122, %p123
      %p125 = scmp.ne.s32.totalorder %s111, %s112
      %p126 = scmp.eq.s32.totalorder %s40, 3
      %p127 = por %p125, %p126
      %p129 = scmp.ne.s32.totalorder %s112, %s128
      %p130 = scmp.eq.s32.totalorder %s40, 0
      %p131 = por %p129, %p130
      %s132 = ssub.s32 %s42, %s49
      %p133 = scmp.eq.s32.totalorder %s132, 0
      %s135 = sadd.s32 %s134, 1
      %s136 = scalar_select %p133, %s134, %s135
      %p139 = pneg %p133
      %p140 = scmp.eq.s32.totalorder %s34, 3
      %p141 = por %p139, %p140
      %p142 = scmp.ne.s32.totalorder %s134, %s137
      %p143 = scmp.eq.s32.totalorder %s34, 0
      %p144 = por %p142, %p143
      %p145 = scmp.ne.s32.totalorder %s134, %s137
      %p146 = scmp.eq.s32.totalorder %s39, 3
      %p147 = por %p145, %p146
      %p148 = scmp.ne.s32.totalorder %s137, %s138
      %p149 = scmp.eq.s32.totalorder %s39, 0
      %p150 = por %p148, %p149
      %p151 = scmp.ne.s32.totalorder %s137, %s138
      %p152 = scmp.eq.s32.totalorder %s40, 3
      %p153 = por %p151, %p152
      %p155 = scmp.ne.s32.totalorder %s138, %s154
      %p156 = scmp.eq.s32.totalorder %s40, 0
      %p157 = por %p155, %p156
      %s158 = ssub.s32 %s42, %s49
      %p159 = scmp.eq.s32.totalorder %s158, 0
      %s161 = sadd.s32 %s160, 1
      %s162 = scalar_select %p159, %s160, %s161
      %p165 = pneg %p159
      %p166 = scmp.eq.s32.totalorder %s34, 3
      %p167 = por %p165, %p166
      %p168 = scmp.ne.s32.totalorder %s160, %s163
      %p169 = scmp.eq.s32.totalorder %s34, 0
      %p170 = por %p168, %p169
      %p171 = scmp.ne.s32.totalorder %s160, %s163
      %p172 = scmp.eq.s32.totalorder %s39, 3
      %p173 = por %p171, %p172
      %p174 = scmp.ne.s32.totalorder %s163, %s164
      %p175 = scmp.eq.s32.totalorder %s39, 0
      %p176 = por %p174, %p175
      %p177 = scmp.ne.s32.totalorder %s163, %s164
      %p178 = scmp.eq.s32.totalorder %s40, 3
      %p179 = por %p177, %p178
      %p181 = scmp.ne.s32.totalorder %s164, %s180
      %p182 = scmp.eq.s32.totalorder %s40, 0
      %p183 = por %p181, %p182
      %s184 = ssub.s32 %s42, %s49
      %p185 = scmp.eq.s32.totalorder %s184, 0
      %s187 = sadd.s32 %s186, 1
      %s188 = scalar_select %p185, %s186, %s187
      %p191 = pneg %p185
      %p192 = scmp.eq.s32.totalorder %s34, 3
      %p193 = por %p191, %p192
      %p194 = scmp.ne.s32.totalorder %s186, %s189
      %p195 = scmp.eq.s32.totalorder %s34, 0
      %p196 = por %p194, %p195
      %p197 = scmp.ne.s32.totalorder %s186, %s189
      %p198 = scmp.eq.s32.totalorder %s39, 3
      %p199 = por %p197, %p198
      %p200 = scmp.ne.s32.totalorder %s189, %s190
      %p201 = scmp.eq.s32.totalorder %s39, 0
      %p202 = por %p200, %p201
      %p203 = scmp.ne.s32.totalorder %s189, %s190
      %p204 = scmp.eq.s32.totalorder %s40, 3
      %p205 = por %p203, %p204
      %p207 = scmp.ne.s32.totalorder %s190, %s206
      %p208 = scmp.eq.s32.totalorder %s40, 0
      %p209 = por %p207, %p208
      %s210 = ssub.s32 %s42, %s49
      %p211 = scmp.eq.s32.totalorder %s210, 0
      %s213 = sadd.s32 %s212, 1
      %s214 = scalar_select %p211, %s212, %s213
      %p217 = pneg %p211
      %p218 = scmp.eq.s32.totalorder %s34, 3
      %p219 = por %p217, %p218
      %p220 = scmp.ne.s32.totalorder %s212, %s215
      %p221 = scmp.eq.s32.totalorder %s34, 0
      %p222 = por %p220, %p221
      %p223 = scmp.ne.s32.totalorder %s212, %s215
      %p224 = scmp.eq.s32.totalorder %s39, 3
      %p225 = por %p223, %p224
      %p226 = scmp.ne.s32.totalorder %s215, %s216
      %p227 = scmp.eq.s32.totalorder %s39, 0
      %p228 = por %p226, %p227
      %p229 = scmp.ne.s32.totalorder %s215, %s216
      %p230 = scmp.eq.s32.totalorder %s40, 3
      %p231 = por %p229, %p230
      %p233 = scmp.ne.s32.totalorder %s216, %s232
      %p234 = scmp.eq.s32.totalorder %s40, 0
      %p235 = por %p233, %p234
      %s237 = sadd.s32 %s236, 1
      %p240 = scmp.eq.s32.totalorder %s34, 3
      %p241 = scmp.ne.s32.totalorder %s236, %s238
      %p242 = scmp.eq.s32.totalorder %s34, 0
      %p243 = por %p241, %p242
      %p244 = scmp.ne.s32.totalorder %s236, %s238
      %p245 = scmp.eq.s32.totalorder %s39, 3
      %p246 = por %p244, %p245
      %p247 = scmp.ne.s32.totalorder %s238, %s239
      %p248 = scmp.eq.s32.totalorder %s39, 0
      %p249 = por %p247, %p248
      %p250 = scmp.ne.s32.totalorder %s238, %s239
      %p251 = scmp.eq.s32.totalorder %s40, 3
      %p252 = por %p250, %p251
      %p254 = scmp.ne.s32.totalorder %s239, %s253
      %p255 = scmp.eq.s32.totalorder %s40, 0
      %p256 = por %p254, %p255
      %s258 = sadd.s32 %s257, 1
      %p261 = scmp.eq.s32.totalorder %s34, 3
      %p262 = scmp.ne.s32.totalorder %s257, %s259
      %p263 = scmp.eq.s32.totalorder %s34, 0
      %p264 = por %p262, %p263
      %p265 = scmp.ne.s32.totalorder %s257, %s259
      %p266 = scmp.eq.s32.totalorder %s39, 3
      %p267 = por %p265, %p266
      %p268 = scmp.ne.s32.totalorder %s259, %s260
      %p269 = scmp.eq.s32.totalorder %s39, 0
      %p270 = por %p268, %p269
      %p271 = scmp.ne.s32.totalorder %s259, %s260
      %p272 = scmp.eq.s32.totalorder %s40, 3
      %p273 = por %p271, %p272
      %p275 = scmp.ne.s32.totalorder %s260, %s274
      %p276 = scmp.eq.s32.totalorder %s40, 0
      %p277 = por %p275, %p276
      %s279 = sadd.s32 %s278, 1
      %p282 = scmp.eq.s32.totalorder %s34, 3
      %p283 = scmp.ne.s32.totalorder %s278, %s280
      %p284 = scmp.eq.s32.totalorder %s34, 0
      %p285 = por %p283, %p284
      %p286 = scmp.ne.s32.totalorder %s278, %s280
      %p287 = scmp.eq.s32.totalorder %s39, 3
      %p288 = por %p286, %p287
      %p289 = scmp.ne.s32.totalorder %s280, %s281
      %p290 = scmp.eq.s32.totalorder %s39, 0
      %p291 = por %p289, %p290
      %p292 = scmp.ne.s32.totalorder %s280, %s281
      %p293 = scmp.eq.s32.totalorder %s40, 3
      %p294 = por %p292, %p293
      %p296 = scmp.ne.s32.totalorder %s281, %s295
      %p297 = scmp.eq.s32.totalorder %s40, 0
      %p298 = por %p296, %p297
      %s300 = sadd.s32 %s299, 1
      %p303 = scmp.eq.s32.totalorder %s34, 3
      %p304 = scmp.ne.s32.totalorder %s299, %s301
      %p305 = scmp.eq.s32.totalorder %s34, 0
      %p306 = por %p304, %p305
      %p307 = scmp.ne.s32.totalorder %s299, %s301
      %p308 = scmp.eq.s32.totalorder %s39, 3
      %p309 = por %p307, %p308
      %p310 = scmp.ne.s32.totalorder %s301, %s302
      %p311 = scmp.eq.s32.totalorder %s39, 0
      %p312 = por %p310, %p311
      %p313 = scmp.ne.s32.totalorder %s301, %s302
      %p314 = scmp.eq.s32.totalorder %s40, 3
      %p315 = por %p313, %p314
      %p317 = scmp.ne.s32.totalorder %s302, %s316
      %p318 = scmp.eq.s32.totalorder %s40, 0
      %p319 = por %p317, %p318
      %s321 = sadd.s32 %s320, 1
      %p324 = scmp.eq.s32.totalorder %s34, 3
      %p325 = scmp.ne.s32.totalorder %s320, %s322
      %p326 = scmp.eq.s32.totalorder %s34, 0
      %p327 = por %p325, %p326
      %p328 = scmp.ne.s32.totalorder %s320, %s322
      %p329 = scmp.eq.s32.totalorder %s39, 3
      %p330 = por %p328, %p329
      %p331 = scmp.ne.s32.totalorder %s322, %s323
      %p332 = scmp.eq.s32.totalorder %s39, 0
      %p333 = por %p331, %p332
      %p334 = scmp.ne.s32.totalorder %s322, %s323
      %p335 = scmp.eq.s32.totalorder %s40, 3
      %p336 = por %p334, %p335
      %p338 = scmp.ne.s32.totalorder %s323, %s337
      %p339 = scmp.eq.s32.totalorder %s40, 0
      %p340 = por %p338, %p339
      %s342 = sadd.s32 %s341, 1
      %p345 = scmp.eq.s32.totalorder %s34, 3
      %p346 = scmp.ne.s32.totalorder %s341, %s343
      %p347 = scmp.eq.s32.totalorder %s34, 0
      %p348 = por %p346, %p347
      %p349 = scmp.ne.s32.totalorder %s341, %s343
      %p350 = scmp.eq.s32.totalorder %s39, 3
      %p351 = por %p349, %p350
      %p352 = scmp.ne.s32.totalorder %s343, %s344
      %p353 = scmp.eq.s32.totalorder %s39, 0
      %p354 = por %p352, %p353
      %p355 = scmp.ne.s32.totalorder %s343, %s344
      %p356 = scmp.eq.s32.totalorder %s40, 3
      %p357 = por %p355, %p356
      %p359 = scmp.ne.s32.totalorder %s344, %s358
      %p360 = scmp.eq.s32.totalorder %s40, 0
      %p361 = por %p359, %p360
      %s363 = sadd.s32 %s362, 1
      %p366 = scmp.eq.s32.totalorder %s34, 3
      %p367 = scmp.ne.s32.totalorder %s362, %s364
      %p368 = scmp.eq.s32.totalorder %s34, 0
      %p369 = por %p367, %p368
      %p370 = scmp.ne.s32.totalorder %s362, %s364
      %p371 = scmp.eq.s32.totalorder %s39, 3
      %p372 = por %p370, %p371
      %p373 = scmp.ne.s32.totalorder %s364, %s365
      %p374 = scmp.eq.s32.totalorder %s39, 0
      %p375 = por %p373, %p374
      %p376 = scmp.ne.s32.totalorder %s364, %s365
      %p377 = scmp.eq.s32.totalorder %s40, 3
      %p378 = por %p376, %p377
      %p380 = scmp.ne.s32.totalorder %s365, %s379
      %p381 = scmp.eq.s32.totalorder %s40, 0
      %p382 = por %p380, %p381
      %s384 = sadd.s32 %s383, 1
      %p387 = scmp.eq.s32.totalorder %s34, 3
      %p388 = scmp.ne.s32.totalorder %s383, %s385
      %p389 = scmp.eq.s32.totalorder %s34, 0
      %p390 = por %p388, %p389
      %p391 = scmp.ne.s32.totalorder %s383, %s385
      %p392 = scmp.eq.s32.totalorder %s39, 3
      %p393 = por %p391, %p392
      %p394 = scmp.ne.s32.totalorder %s385, %s386
      %p395 = scmp.eq.s32.totalorder %s39, 0
      %p396 = por %p394, %p395
      %p397 = scmp.ne.s32.totalorder %s385, %s386
      %p398 = scmp.eq.s32.totalorder %s40, 3
      %p399 = por %p397, %p398
      %p401 = scmp.ne.s32.totalorder %s386, %s400
      %p402 = scmp.eq.s32.totalorder %s40, 0
      %p403 = por %p401, %p402
      %s405 = sadd.s32 %s404, 1
      %p408 = scmp.eq.s32.totalorder %s34, 3
      %p409 = scmp.ne.s32.totalorder %s404, %s406
      %p410 = scmp.eq.s32.totalorder %s34, 0
      %p411 = por %p409, %p410
      %p412 = scmp.ne.s32.totalorder %s404, %s406
      %p413 = scmp.eq.s32.totalorder %s39, 3
      %p414 = por %p412, %p413
      %p415 = scmp.ne.s32.totalorder %s406, %s407
      %p416 = scmp.eq.s32.totalorder %s39, 0
      %p417 = por %p415, %p416
      %p418 = scmp.ne.s32.totalorder %s406, %s407
      %p419 = scmp.eq.s32.totalorder %s40, 3
      %p420 = por %p418, %p419
      %p422 = scmp.ne.s32.totalorder %s407, %s421
      %p423 = scmp.eq.s32.totalorder %s40, 0
      %p424 = por %p422, %p423
      %s425 = ssub.s32 %s41, %s53
      %p426 = scmp.eq.s32.totalorder %s425, 0
      %s428 = sadd.s32 %s427, 1
      %s429 = scalar_select %p426, %s427, %s428
      %p432 = pneg %p426
      %p433 = scmp.eq.s32.totalorder %s34, 3
      %p434 = por %p432, %p433
      %p435 = scmp.ne.s32.totalorder %s427, %s430
      %p436 = scmp.eq.s32.totalorder %s34, 0
      %p437 = por %p435, %p436
      %p438 = scmp.ne.s32.totalorder %s427, %s430
      %p439 = scmp.eq.s32.totalorder %s39, 3
      %p440 = por %p438, %p439
      %p441 = scmp.ne.s32.totalorder %s430, %s431
      %p442 = scmp.eq.s32.totalorder %s39, 0
      %p443 = por %p441, %p442
      %p444 = scmp.ne.s32.totalorder %s430, %s431
      %p445 = scmp.eq.s32.totalorder %s40, 3
      %p446 = por %p444, %p445
      %p448 = scmp.ne.s32.totalorder %s431, %s447
      %p449 = scmp.eq.s32.totalorder %s40, 0
      %p450 = por %p448, %p449
      %s451 = ssub.s32 %s41, %s53
      %s452 = ssub.s32 %s42, %s49
      %s453 = sor.u32 %s451, %s452
      %p454 = scmp.eq.s32.totalorder %s453, 0
      %s456 = sadd.s32 %s455, 1
      %s457 = scalar_select %p454, %s455, %s456
      %p460 = pneg %p454
      %p461 = scmp.eq.s32.totalorder %s34, 3
      %p462 = por %p460, %p461
      %p463 = scmp.ne.s32.totalorder %s455, %s458
      %p464 = scmp.eq.s32.totalorder %s34, 0
      %p465 = por %p463, %p464
      %p466 = scmp.ne.s32.totalorder %s455, %s458
      %p467 = scmp.eq.s32.totalorder %s39, 3
      %p468 = por %p466, %p467
      %p469 = scmp.ne.s32.totalorder %s458, %s459
      %p470 = scmp.eq.s32.totalorder %s39, 0
      %p471 = por %p469, %p470
      %p472 = scmp.ne.s32.totalorder %s458, %s459
      %p473 = scmp.eq.s32.totalorder %s40, 3
      %p474 = por %p472, %p473
      %p476 = scmp.ne.s32.totalorder %s459, %s475
      %p477 = scmp.eq.s32.totalorder %s40, 0
      %p478 = por %p476, %p477
      %s479 = ssub.s32 %s41, %s53
      %s480 = ssub.s32 %s42, %s49
      %s481 = sor.u32 %s479, %s480
      %p482 = scmp.eq.s32.totalorder %s481, 0
      %s484 = sadd.s32 %s483, 1
      %s485 = scalar_select %p482, %s483, %s484
      %p488 = pneg %p482
      %p489 = scmp.eq.s32.totalorder %s34, 3
      %p490 = por %p488, %p489
      %p491 = scmp.ne.s32.totalorder %s483, %s486
      %p492 = scmp.eq.s32.totalorder %s34, 0
      %p493 = por %p491, %p492
      %p494 = scmp.ne.s32.totalorder %s483, %s486
      %p495 = scmp.eq.s32.totalorder %s39, 3
      %p496 = por %p494, %p495
      %p497 = scmp.ne.s32.totalorder %s486, %s487
      %p498 = scmp.eq.s32.totalorder %s39, 0
      %p499 = por %p497, %p498
      %p500 = scmp.ne.s32.totalorder %s486, %s487
      %p501 = scmp.eq.s32.totalorder %s40, 3
      %p502 = por %p500, %p501
      %p504 = scmp.ne.s32.totalorder %s487, %s503
      %p505 = scmp.eq.s32.totalorder %s40, 0
      %p506 = por %p504, %p505
      %p507 = scmp.le.s32.totalorder 1, %s34
      %p508 = scmp.lt.s32.totalorder %s34, 5
      %p509 = pnand %p507, %p508
      %p510 = pneg %p509
      // Predicated region
      $region9: #{tpu_custom_call.1} parent=5 // pred_check
        _
      $region10: #{tpu_custom_call.1} parent=5 // pred_check_branch
        %512 = sbr.rel (%p509) target = $region12
      $region11: #{tpu_custom_call.1} parent=5 // pred_region
        %s513 = ssub.s32 %s34, 1
        // Predicated region
        $region13: #{tpu_custom_call.1} parent=11 // pred_check
          %p514 = pneg %p249
        $region14: #{tpu_custom_call.1} parent=11 // pred_check_branch
          %516 = sbr.rel (%p514) target = $region16
        $region15: #{tpu_custom_call.1} parent=11 // pred_region
          _
        $region16: #{tpu_custom_call.1} parent=11 // pred_fallthru
          _
        // Predicated region
        $region17: #{tpu_custom_call.1} parent=11 // pred_check
          %p517 = pneg %p270
        $region18: #{tpu_custom_call.1} parent=11 // pred_check_branch
          %519 = sbr.rel (%p517) target = $region20
        $region19: #{tpu_custom_call.1} parent=11 // pred_region
          _
        $region20: #{tpu_custom_call.1} parent=11 // pred_fallthru
          _
        // Predicated region
        $region21: #{tpu_custom_call.1} parent=11 // pred_check
          %p520 = pneg %p291
        $region22: #{tpu_custom_call.1} parent=11 // pred_check_branch
          %522 = sbr.rel (%p520) target = $region24
        $region23: #{tpu_custom_call.1} parent=11 // pred_region
          _
        $region24: #{tpu_custom_call.1} parent=11 // pred_fallthru
          _
        // Predicated region
        $region25: #{tpu_custom_call.1} parent=11 // pred_check
          %p523 = pneg %p312
        $region26: #{tpu_custom_call.1} parent=11 // pred_check_branch
          %525 = sbr.rel (%p523) target = $region28
        $region27: #{tpu_custom_call.1} parent=11 // pred_region
          _
        $region28: #{tpu_custom_call.1} parent=11 // pred_fallthru
          _
        // Predicated region
        $region29: #{tpu_custom_call.1} parent=11 // pred_check
          %p526 = pneg %p333
        $region30: #{tpu_custom_call.1} parent=11 // pred_check_branch
          %528 = sbr.rel (%p526) target = $region32
        $region31: #{tpu_custom_call.1} parent=11 // pred_region
          _
        $region32: #{tpu_custom_call.1} parent=11 // pred_fallthru
          _
        // Predicated region
        $region33: #{tpu_custom_call.1} parent=11 // pred_check
          %p529 = pneg %p354
        $region34: #{tpu_custom_call.1} parent=11 // pred_check_branch
          %531 = sbr.rel (%p529) target = $region36
        $region35: #{tpu_custom_call.1} parent=11 // pred_region
          _
        $region36: #{tpu_custom_call.1} parent=11 // pred_fallthru
          _
        // Predicated region
        $region37: #{tpu_custom_call.1} parent=11 // pred_check
          %p532 = pneg %p375
        $region38: #{tpu_custom_call.1} parent=11 // pred_check_branch
          %534 = sbr.rel (%p532) target = $region40
        $region39: #{tpu_custom_call.1} parent=11 // pred_region
          _
        $region40: #{tpu_custom_call.1} parent=11 // pred_fallthru
          _
        // Predicated region
        $region41: #{tpu_custom_call.1} parent=11 // pred_check
          %p535 = pneg %p396
        $region42: #{tpu_custom_call.1} parent=11 // pred_check_branch
          %537 = sbr.rel (%p535) target = $region44
        $region43: #{tpu_custom_call.1} parent=11 // pred_region
          _
        $region44: #{tpu_custom_call.1} parent=11 // pred_fallthru
          _
        // Predicated region
        $region45: #{tpu_custom_call.1} parent=11 // pred_check
          %p538 = pneg %p417
        $region46: #{tpu_custom_call.1} parent=11 // pred_check_branch
          %540 = sbr.rel (%p538) target = $region48
        $region47: #{tpu_custom_call.1} parent=11 // pred_region
          _
        $region48: #{tpu_custom_call.1} parent=11 // pred_fallthru
          _
      $region12: #{tpu_custom_call.1} parent=5 // pred_fallthru
        _
      %p541 = scmp.lt.s32.totalorder %s34, 4
      // Predicated region
      $region49: #{tpu_custom_call.1} parent=5 // pred_check
        %p542 = pneg %p541
      $region50: #{tpu_custom_call.1} parent=5 // pred_check_branch
        %544 = sbr.rel (%p542) target = $region52
      $region51: #{tpu_custom_call.1} parent=5 // pred_region
        // Predicated region
        $region53: #{tpu_custom_call.1} parent=51 // pred_check
          %p545 = pneg %p66
        $region54: #{tpu_custom_call.1} parent=51 // pred_check_branch
          %547 = sbr.rel (%p545) target = $region56
        $region55: #{tpu_custom_call.1} parent=51 // pred_region
          %p548 = scmp.lt.s32.totalorder %s41, 1
          %s549 = scalar_select %p548, %s41, 1
          %s550 = smul.addr %s549, 8
          %s551 = scalar_lea.vmem %s0, %s550
        $region56: #{tpu_custom_call.1} parent=51 // pred_fallthru
          _
        // Predicated region
        $region57: #{tpu_custom_call.1} parent=51 // pred_check
          %p552 = pneg %p92
        $region58: #{tpu_custom_call.1} parent=51 // pred_check_branch
          %554 = sbr.rel (%p552) target = $region60
        $region59: #{tpu_custom_call.1} parent=51 // pred_region
          %s555 = sand.u32 %s82, 1
          %s556 = scalar_lea.sflag [#allocation4], %s555
          %s557 = sand.u32 %s82, 1
          %s558 = smul.addr %s557, 8
          %s559 = scalar_lea.vmem [#allocation3], %s558
          %s561 = ssub.s32 128, 128
          %562 = vsyncadd %s556, %s561
          %s563 = smul.addr %s41, 128
          %s564 = scalar_lea.hbm %s1, %s563
          %s566 = sshll.u32 %s559, 4
          %s567 = int_to_ptr.vmem [resolvable:$true] %s566
          %569 = dma.hbm_to_vmem [thread:$0]  %s564, 128, %s567, %s556
        $region60: #{tpu_custom_call.1} parent=51 // pred_fallthru
          _
        // Predicated region
        $region61: #{tpu_custom_call.1} parent=51 // pred_check
          %p570 = pneg %p118
        $region62: #{tpu_custom_call.1} parent=51 // pred_check_branch
          %572 = sbr.rel (%p570) target = $region64
        $region63: #{tpu_custom_call.1} parent=51 // pred_region
          %p573 = scmp.lt.s32.totalorder %s42, 1
          %s574 = scalar_select %p573, %s42, 1
          %s575 = smul.addr %s574, 4
          %s576 = smul.addr %s575, 8
          %s577 = scalar_lea.vmem %s2, %s576
        $region64: #{tpu_custom_call.1} parent=51 // pred_fallthru
          _
        // Predicated region
        $region65: #{tpu_custom_call.1} parent=51 // pred_check
          %p578 = pneg %p144
        $region66: #{tpu_custom_call.1} parent=51 // pred_check_branch
          %580 = sbr.rel (%p578) target = $region68
        $region67: #{tpu_custom_call.1} parent=51 // pred_region
          %p581 = scmp.lt.s32.totalorder %s42, 1
          %s582 = scalar_select %p581, %s42, 1
          %s583 = scalar_lea.vmem %s3, %s582
        $region68: #{tpu_custom_call.1} parent=51 // pred_fallthru
          _
        // Predicated region
        $region69: #{tpu_custom_call.1} parent=51 // pred_check
          %p584 = pneg %p170
        $region70: #{tpu_custom_call.1} parent=51 // pred_check_branch
          %586 = sbr.rel (%p584) target = $region72
        $region71: #{tpu_custom_call.1} parent=51 // pred_region
          %p587 = scmp.lt.s32.totalorder %s42, 1
          %s588 = scalar_select %p587, %s42, 1
          %s589 = smul.addr %s588, 4
          %s590 = smul.addr %s589, 8
          %s591 = scalar_lea.vmem %s4, %s590
        $region72: #{tpu_custom_call.1} parent=51 // pred_fallthru
          _
        // Predicated region
        $region73: #{tpu_custom_call.1} parent=51 // pred_check
          %p592 = pneg %p196
        $region74: #{tpu_custom_call.1} parent=51 // pred_check_branch
          %594 = sbr.rel (%p592) target = $region76
        $region75: #{tpu_custom_call.1} parent=51 // pred_region
          %p595 = scmp.lt.s32.totalorder %s42, 1
          %s596 = scalar_select %p595, %s42, 1
          %s597 = scalar_lea.vmem %s5, %s596
        $region76: #{tpu_custom_call.1} parent=51 // pred_fallthru
          _
        // Predicated region
        $region77: #{tpu_custom_call.1} parent=51 // pred_check
          %p598 = pneg %p222
        $region78: #{tpu_custom_call.1} parent=51 // pred_check_branch
          %600 = sbr.rel (%p598) target = $region80
        $region79: #{tpu_custom_call.1} parent=51 // pred_region
          %p601 = scmp.lt.s32.totalorder %s42, 1
          %s602 = scalar_select %p601, %s42, 1
          %s603 = smul.addr %s602, 3
          %s604 = smul.addr %s603, 8
          %s605 = scalar_lea.vmem %s6, %s604
        $region80: #{tpu_custom_call.1} parent=51 // pred_fallthru
          _
      $region52: #{tpu_custom_call.1} parent=5 // pred_fallthru
        _
      %p606 = scmp.le.s32.totalorder 1, %s34
      %p607 = scmp.lt.s32.totalorder %s34, 5
      %p608 = pnand %p606, %p607
      %p609 = pneg %p608
      // Predicated region
      $region81: #{tpu_custom_call.1} parent=5 // pred_check
        _
      $region82: #{tpu_custom_call.1} parent=5 // pred_check_branch
        %611 = sbr.rel (%p608) target = $region84
      $region83: #{tpu_custom_call.1} parent=5 // pred_region
        %s612 = ssub.s32 %s34, 1
        %s613 = sand.u32 %s85, 1
        %s614 = scalar_lea.sflag [#allocation4], %s613
        %s615 = sand.u32 %s85, 1
        %s616 = smul.addr %s615, 8
        %s617 = scalar_lea.vmem [#allocation3], %s616
        // Predicated region
        $region85: #{tpu_custom_call.1} parent=83 // pred_check
          %p618 = pneg %p98
        $region86: #{tpu_custom_call.1} parent=83 // pred_check_branch
          %620 = sbr.rel (%p618) target = $region88
        $region87: #{tpu_custom_call.1} parent=83 // pred_region
          %621 = dma.done %s614, 128
        $region88: #{tpu_custom_call.1} parent=83 // pred_fallthru
          _
        %p622 = scmp.lt.s32.totalorder %s43, 1
        %s623 = scalar_select %p622, %s43, 1
        %s624 = smul.addr %s623, 8
        %s625 = scalar_lea.vmem %s0, %s624
        %p626 = pneg %p72
        %p627 = pneg %p69
        %s628 = sand.u32 %s85, 1
        %s629 = scalar_lea.sflag [#allocation4], %s628
        %s630 = sand.u32 %s85, 1
        %s631 = smul.addr %s630, 8
        %s632 = scalar_lea.vmem [#allocation3], %s631
        %p633 = pneg %p98
        %p634 = pneg %p95
        %p635 = scmp.lt.s32.totalorder %s44, 1
        %s636 = scalar_select %p635, %s44, 1
        %s637 = smul.addr %s636, 4
        %s638 = smul.addr %s637, 8
        %s639 = scalar_lea.vmem %s2, %s638
        %p640 = pneg %p124
        %p641 = pneg %p121
        %p642 = scmp.lt.s32.totalorder %s44, 1
        %s643 = scalar_select %p642, %s44, 1
        %s644 = scalar_lea.vmem %s3, %s643
        %p645 = pneg %p150
        %p646 = pneg %p147
        %p647 = scmp.lt.s32.totalorder %s44, 1
        %s648 = scalar_select %p647, %s44, 1
        %s649 = smul.addr %s648, 4
        %s650 = smul.addr %s649, 8
        %s651 = scalar_lea.vmem %s4, %s650
        %p652 = pneg %p176
        %p653 = pneg %p173
        %p654 = scmp.lt.s32.totalorder %s44, 1
        %s655 = scalar_select %p654, %s44, 1
        %s656 = scalar_lea.vmem %s5, %s655
        %p657 = pneg %p202
        %p658 = pneg %p199
        %p659 = scmp.lt.s32.totalorder %s44, 1
        %s660 = scalar_select %p659, %s44, 1
        %s661 = smul.addr %s660, 3
        %s662 = smul.addr %s661, 8
        %s663 = scalar_lea.vmem %s6, %s662
        %p664 = pneg %p228
        %p665 = pneg %p225
        %p666 = pneg %p249
        %p667 = pneg %p246
        %p668 = pneg %p270
        %p669 = pneg %p267
        %p670 = pneg %p291
        %p671 = pneg %p288
        %p672 = pneg %p312
        %p673 = pneg %p309
        %p674 = pneg %p333
        %p675 = pneg %p330
        %p676 = pneg %p354
        %p677 = pneg %p351
        %p678 = pneg %p375
        %p679 = pneg %p372
        %p680 = pneg %p396
        %p681 = pneg %p393
        %p682 = pneg %p417
        %p683 = pneg %p414
        %p684 = pneg %p443
        %p685 = pneg %p440
        %s686 = sand.u32 %s430, 1
        %s687 = scalar_lea.sflag [#allocation5], %s686
        %s688 = sand.u32 %s430, 1
        %s689 = smul.addr %s688, 8
        %s690 = scalar_lea.vmem [#allocation6], %s689
        %p691 = pneg %p471
        %p692 = pneg %p468
        %s693 = sand.u32 %s39, 1
        %s694 = scalar_lea.sflag [#allocation8], %s693
        %s695 = sand.u32 %s458, 1
        %s696 = smul.addr %s695, 8
        %s697 = scalar_lea.vmem [#allocation7], %s696
        %p698 = pneg %p499
        %p699 = pneg %p496
        %s700 = sand.u32 %s39, 1
        %s701 = scalar_lea.sflag [#allocation8], %s700
        %s702 = sand.u32 %s486, 1
        %s703 = smul.addr %s702, 8
        %s704 = scalar_lea.vmem [#allocation9], %s703
        %p705 = scmp.lt.s32.totalorder %s43, 1
        %s706 = scalar_select %p705, %s43, 1
        %s707 = smul.addr %s706, 8
        %s708 = scalar_lea.vmem %s0, %s707
        %p709 = scmp.lt.s32.totalorder %s44, 1
        %s710 = scalar_select %p709, %s44, 1
        %s711 = smul.addr %s710, 4
        %s712 = smul.addr %s711, 8
        %s713 = scalar_lea.vmem %s2, %s712
        %p714 = scmp.lt.s32.totalorder %s44, 1
        %s715 = scalar_select %p714, %s44, 1
        %s716 = scalar_lea.vmem %s3, %s715
        %p717 = scmp.lt.s32.totalorder %s44, 1
        %s718 = scalar_select %p717, %s44, 1
        %s719 = smul.addr %s718, 4
        %s720 = smul.addr %s719, 8
        %s721 = scalar_lea.vmem %s4, %s720
        %p722 = scmp.lt.s32.totalorder %s44, 1
        %s723 = scalar_select %p722, %s44, 1
        %s724 = scalar_lea.vmem %s5, %s723
        %p725 = scmp.lt.s32.totalorder %s44, 1
        %s726 = scalar_select %p725, %s44, 1
        %s727 = smul.addr %s726, 3
        %s728 = smul.addr %s727, 8
        %s729 = scalar_lea.vmem %s6, %s728
        %v730 = vld [vmem:[%s708] sm:$0xff]
        %v731 = vld [vmem:[%s617] sm:$0xff]
        %v732 = vld [vmem:[%s713] sm:$0xff]
        %v733 = vld [vmem:[%s713 + $0x8] sm:$0xff]
        %v734 = vld [vmem:[%s713 + $0x10] sm:$0xff]
        %v735 = vld [vmem:[%s713 + $0x18] sm:$0xff]
        %v736 = vld [vmem:[%s716] sm:$0x1]
        %v738 = vlaneseq
        %v739 = vshrl.u32 %v738, 7
        %v740 = vsub.s32 0, %v739
        %v741 = vrot.slane %v736, %v740
        %vm743 = vcmask 261120
        %v745 = vsel %vm743, %v730, 0
        %747 = vmatprep.subr.mxu0 0.0
        %748 = vmatpush1.msra.mxu0 %v732
        %749 = vmatprep.subr.mxu0 0.0
        %750 = vmatpush1.msra.mxu0 %v733
        %751 = vmatprep.subr.mxu0 0.0
        %752 = vmatpush1.msra.mxu0 %v734
        %753 = vmatprep.subr.mxu0 0.0
        %754 = vmatpush1.msra.mxu0 %v735
        %755 = vmatprep.subr.mxu0 0.0
        %756 = vmatpush1.msra.mxu0 0.0
        %757 = vmatprep.subr.mxu0 0.0
        %758 = vmatpush1.msra.mxu0 0.0
        %759 = vmatprep.subr.mxu0 0.0
        %760 = vmatpush1.msra.mxu0 0.0
        %761 = vmatprep.subr.mxu0 0.0
        %762 = vmatpush1.msra.mxu0 0.0
        %763 = vmatprep.subr.mxu0 0.0
        %764 = vmatpush1.msra.mxu0 0.0
        %765 = vmatprep.subr.mxu0 0.0
        %766 = vmatpush1.msra.mxu0 0.0
        %767 = vmatprep.subr.mxu0 0.0
        %768 = vmatpush1.msra.mxu0 0.0
        %769 = vmatprep.subr.mxu0 0.0
        %770 = vmatpush1.msra.mxu0 0.0
        %771 = vmatprep.subr.mxu0 0.0
        %772 = vmatpush1.msra.mxu0 0.0
        %773 = vmatprep.subr.mxu0 0.0
        %774 = vmatpush1.msra.mxu0 0.0
        %775 = vmatprep.subr.mxu0 0.0
        %776 = vmatpush1.msra.mxu0 0.0
        %777 = vmatprep.subr.mxu0 0.0
        %778 = vmatpush1.msra.mxu0 0.0
        %779 = vmatprep.subr.mxu0 0.0
        %780 = vmatpush1.msra.mxu0 0.0
        %781 = vmatprep.subr.mxu0 0.0
        %782 = vmatpush1.msra.mxu0 0.0
        %783 = vmatprep.subr.mxu0 0.0
        %784 = vmatpush1.msra.mxu0 0.0
        %785 = vmatprep.subr.mxu0 0.0
        %786 = vmatpush1.msra.mxu0 0.0
        %787 = vmatprep.subr.mxu0 0.0
        %788 = vmatpush1.msra.mxu0 0.0
        %789 = vmatprep.subr.mxu0 0.0
        %790 = vmatpush1.msra.mxu0 0.0
        %791 = vmatprep.subr.mxu0 0.0
        %792 = vmatpush1.msra.mxu0 0.0
        %793 = vmatprep.subr.mxu0 0.0
        %794 = vmatpush1.msra.mxu0 0.0
        %795 = vmatprep.subr.mxu0 0.0
        %796 = vmatpush1.msra.mxu0 0.0
        %797 = vmatprep.subr.mxu0 0.0
        %798 = vmatpush1.msra.mxu0 0.0
        %799 = vmatprep.subr.mxu0 0.0
        %800 = vmatpush1.msra.mxu0 0.0
        %801 = vmatprep.subr.mxu0 0.0
        %802 = vmatpush1.msra.mxu0 0.0
        %803 = vmatprep.subr.mxu0 0.0
        %804 = vmatpush1.msra.mxu0 0.0
        %805 = vmatprep.subr.mxu0 0.0
        %806 = vmatpush1.msra.mxu0 0.0
        %807 = vmatprep.subr.mxu0 0.0
        %808 = vmatpush1.msra.mxu0 0.0
        %809 = vmatprep.subr.mxu0 0.0
        %810 = vmatpush1.msra.mxu0 0.0
        %811 = vmatprep.mubr.f32.mxu0 0.0
        %812 = vmatmul.mubr.f32.gmra.mrb[0].mxu0 %v745
        %v813 = vpop.f32.mrb[0].mxu0
        %v814 = vadd.f32 %v741, %v813
        %v815 = vpop.f32.mrb[0].mxu0
        %816 = vdwg.mxu0
        %v817 = vld [vmem:[%s721] sm:$0xff]
        %v818 = vld [vmem:[%s721 + $0x8] sm:$0xff]
        %v819 = vld [vmem:[%s721 + $0x10] sm:$0xff]
        %v820 = vld [vmem:[%s721 + $0x18] sm:$0xff]
        %v821 = vld [vmem:[%s724] sm:$0x1]
        %v823 = vlaneseq
        %v824 = vshrl.u32 %v823, 7
        %v825 = vsub.s32 0, %v824
        %v826 = vrot.slane %v821, %v825
        %v829 = vsel %vm743, %v731, 0
        %831 = vmatprep.subr.mxu0 0.0
        %832 = vmatpush1.msra.mxu0 %v817
        %833 = vmatprep.subr.mxu0 0.0
        %834 = vmatpush1.msra.mxu0 %v818
        %835 = vmatprep.subr.mxu0 0.0
        %836 = vmatpush1.msra.mxu0 %v819
        %837 = vmatprep.subr.mxu0 0.0
        %838 = vmatpush1.msra.mxu0 %v820
        %839 = vmatprep.subr.mxu0 0.0
        %840 = vmatpush1.msra.mxu0 0.0
        %841 = vmatprep.subr.mxu0 0.0
        %842 = vmatpush1.msra.mxu0 0.0
        %843 = vmatprep.subr.mxu0 0.0
        %844 = vmatpush1.msra.mxu0 0.0
        %845 = vmatprep.subr.mxu0 0.0
        %846 = vmatpush1.msra.mxu0 0.0
        %847 = vmatprep.subr.mxu0 0.0
        %848 = vmatpush1.msra.mxu0 0.0
        %849 = vmatprep.subr.mxu0 0.0
        %850 = vmatpush1.msra.mxu0 0.0
        %851 = vmatprep.subr.mxu0 0.0
        %852 = vmatpush1.msra.mxu0 0.0
        %853 = vmatprep.subr.mxu0 0.0
        %854 = vmatpush1.msra.mxu0 0.0
        %855 = vmatprep.subr.mxu0 0.0
        %856 = vmatpush1.msra.mxu0 0.0
        %857 = vmatprep.subr.mxu0 0.0
        %858 = vmatpush1.msra.mxu0 0.0
        %859 = vmatprep.subr.mxu0 0.0
        %860 = vmatpush1.msra.mxu0 0.0
        %861 = vmatprep.subr.mxu0 0.0
        %862 = vmatpush1.msra.mxu0 0.0
        %863 = vmatprep.subr.mxu0 0.0
        %864 = vmatpush1.msra.mxu0 0.0
        %865 = vmatprep.subr.mxu0 0.0
        %866 = vmatpush1.msra.mxu0 0.0
        %867 = vmatprep.subr.mxu0 0.0
        %868 = vmatpush1.msra.mxu0 0.0
        %869 = vmatprep.subr.mxu0 0.0
        %870 = vmatpush1.msra.mxu0 0.0
        %871 = vmatprep.subr.mxu0 0.0
        %872 = vmatpush1.msra.mxu0 0.0
        %873 = vmatprep.subr.mxu0 0.0
        %874 = vmatpush1.msra.mxu0 0.0
        %875 = vmatprep.subr.mxu0 0.0
        %876 = vmatpush1.msra.mxu0 0.0
        %877 = vmatprep.subr.mxu0 0.0
        %878 = vmatpush1.msra.mxu0 0.0
        %879 = vmatprep.subr.mxu0 0.0
        %880 = vmatpush1.msra.mxu0 0.0
        %881 = vmatprep.subr.mxu0 0.0
        %882 = vmatpush1.msra.mxu0 0.0
        %883 = vmatprep.subr.mxu0 0.0
        %884 = vmatpush1.msra.mxu0 0.0
        %885 = vmatprep.subr.mxu0 0.0
        %886 = vmatpush1.msra.mxu0 0.0
        %887 = vmatprep.subr.mxu0 0.0
        %888 = vmatpush1.msra.mxu0 0.0
        %889 = vmatprep.subr.mxu0 0.0
        %890 = vmatpush1.msra.mxu0 0.0
        %891 = vmatprep.subr.mxu0 0.0
        %892 = vmatpush1.msra.mxu0 0.0
        %893 = vmatprep.subr.mxu0 0.0
        %894 = vmatpush1.msra.mxu0 0.0
        %895 = vmatprep.mubr.f32.mxu0 0.0
        %896 = vmatmul.mubr.f32.gmra.mrb[0].mxu0 %v829
        %v897 = vpop.f32.mrb[0].mxu0
        %v898 = vadd.f32 %v826, %v897
        %v899 = vpop.f32.mrb[0].mxu0
        %900 = vdwg.mxu0
        %902 = vrot.lane.b32.xlu0 %v814, 112
        %v903 = vpop.permute.xlu0 %902
        %vm904 = vcmask 130048
        %v905 = vsel %vm904, %v814, 0
        %v907 = vsel %vm904, %v903, 0
        %909 = vmatprep.subr.mxu0 0.0
        %910 = vmatpush1.xpose.msra.mxu0 %v907
        %911 = vmatprep.subr.mxu0 0.0
        %912 = vmatpush1.xpose.msra.mxu0 0.0
        %913 = vmatprep.subr.mxu0 0.0
        %914 = vmatpush1.xpose.msra.mxu0 0.0
        %915 = vmatprep.subr.mxu0 0.0
        %916 = vmatpush1.xpose.msra.mxu0 0.0
        %917 = vmatprep.subr.mxu0 0.0
        %918 = vmatpush1.xpose.msra.mxu0 0.0
        %919 = vmatprep.subr.mxu0 0.0
        %920 = vmatpush1.xpose.msra.mxu0 0.0
        %921 = vmatprep.subr.mxu0 0.0
        %922 = vmatpush1.xpose.msra.mxu0 0.0
        %923 = vmatprep.subr.mxu0 0.0
        %924 = vmatpush1.xpose.msra.mxu0 0.0
        %925 = vmatprep.subr.mxu0 0.0
        %926 = vmatpush1.xpose.msra.mxu0 0.0
        %927 = vmatprep.subr.mxu0 0.0
        %928 = vmatpush1.xpose.msra.mxu0 0.0
        %929 = vmatprep.subr.mxu0 0.0
        %930 = vmatpush1.xpose.msra.mxu0 0.0
        %931 = vmatprep.subr.mxu0 0.0
        %932 = vmatpush1.xpose.msra.mxu0 0.0
        %933 = vmatprep.subr.mxu0 0.0
        %934 = vmatpush1.xpose.msra.mxu0 0.0
        %935 = vmatprep.subr.mxu0 0.0
        %936 = vmatpush1.xpose.msra.mxu0 0.0
        %937 = vmatprep.subr.mxu0 0.0
        %938 = vmatpush1.xpose.msra.mxu0 0.0
        %939 = vmatprep.subr.mxu0 0.0
        %940 = vmatpush1.xpose.msra.mxu0 0.0
        %941 = vmatprep.subr.mxu0 0.0
        %942 = vmatpush1.xpose.msra.mxu0 0.0
        %943 = vmatprep.subr.mxu0 0.0
        %944 = vmatpush1.xpose.msra.mxu0 0.0
        %945 = vmatprep.subr.mxu0 0.0
        %946 = vmatpush1.xpose.msra.mxu0 0.0
        %947 = vmatprep.subr.mxu0 0.0
        %948 = vmatpush1.xpose.msra.mxu0 0.0
        %949 = vmatprep.subr.mxu0 0.0
        %950 = vmatpush1.xpose.msra.mxu0 0.0
        %951 = vmatprep.subr.mxu0 0.0
        %952 = vmatpush1.xpose.msra.mxu0 0.0
        %953 = vmatprep.subr.mxu0 0.0
        %954 = vmatpush1.xpose.msra.mxu0 0.0
        %955 = vmatprep.subr.mxu0 0.0
        %956 = vmatpush1.xpose.msra.mxu0 0.0
        %957 = vmatprep.subr.mxu0 0.0
        %958 = vmatpush1.xpose.msra.mxu0 0.0
        %959 = vmatprep.subr.mxu0 0.0
        %960 = vmatpush1.xpose.msra.mxu0 0.0
        %961 = vmatprep.subr.mxu0 0.0
        %962 = vmatpush1.xpose.msra.mxu0 0.0
        %963 = vmatprep.subr.mxu0 0.0
        %964 = vmatpush1.xpose.msra.mxu0 0.0
        %965 = vmatprep.subr.mxu0 0.0
        %966 = vmatpush1.xpose.msra.mxu0 0.0
        %967 = vmatprep.subr.mxu0 0.0
        %968 = vmatpush1.xpose.msra.mxu0 0.0
        %969 = vmatprep.subr.mxu0 0.0
        %970 = vmatpush1.xpose.msra.mxu0 0.0
        %971 = vmatprep.subr.mxu0 0.0
        %972 = vmatpush1.xpose.msra.mxu0 0.0
        %973 = vmatprep.mubr.f32.mxu0 0.0
        %974 = vmatmul.mubr.f32.gmra.mrb[0].mxu0 %v905
        %v975 = vpop.f32.mrb[0].mxu0
        %v976 = vadd.f32 0.0, %v975
        %v977 = vpop.f32.mrb[0].mxu0
        %978 = vdwg.mxu0
        %vm979 = vcmask 64512
        %v980 = vsel %vm979, %v976, -inf
        %981 = vmax.xlane.f32.xlu0 %v980
        %v982 = vpop.xlane.xlu0 %981
        %v983 = vsub.f32 %v976, %v982
        %v984 = vmul.f32 %v983, 1.442695
        %v985 = vpow.pop %v984
        %v986 = vsel %vm979, %v985, 0.0
        %987 = vadd.xlane.f32.xlu0 %v986
        %v988 = vpop.xlane.xlu0 %987
        %v989 = vrcp.pop %v988
        %v990 = vmul.f32 %v985, %v989
        %991 = vst.msk [vmem:[%s697] sm:$0xff] %vm979, %v990
        %992 = vrot.lane.b32.xlu0 %v814, 96
        %v993 = vpop.permute.xlu0 %992
        %v996 = vsel %vm979, %v990, 0
        %998 = vmatprep.subr.mxu0 0.0
        %999 = vmatpush1.msra.mxu0 %v993
        %1000 = vmatprep.subr.mxu0 0.0
        %1001 = vmatpush1.msra.mxu0 0.0
        %1002 = vmatprep.subr.mxu0 0.0
        %1003 = vmatpush1.msra.mxu0 0.0
        %1004 = vmatprep.subr.mxu0 0.0
        %1005 = vmatpush1.msra.mxu0 0.0
        %1006 = vmatprep.subr.mxu0 0.0
        %1007 = vmatpush1.msra.mxu0 0.0
        %1008 = vmatprep.subr.mxu0 0.0
        %1009 = vmatpush1.msra.mxu0 0.0
        %1010 = vmatprep.subr.mxu0 0.0
        %1011 = vmatpush1.msra.mxu0 0.0
        %1012 = vmatprep.subr.mxu0 0.0
        %1013 = vmatpush1.msra.mxu0 0.0
        %1014 = vmatprep.subr.mxu0 0.0
        %1015 = vmatpush1.msra.mxu0 0.0
        %1016 = vmatprep.subr.mxu0 0.0
        %1017 = vmatpush1.msra.mxu0 0.0
        %1018 = vmatprep.subr.mxu0 0.0
        %1019 = vmatpush1.msra.mxu0 0.0
        %1020 = vmatprep.subr.mxu0 0.0
        %1021 = vmatpush1.msra.mxu0 0.0
        %1022 = vmatprep.subr.mxu0 0.0
        %1023 = vmatpush1.msra.mxu0 0.0
        %1024 = vmatprep.subr.mxu0 0.0
        %1025 = vmatpush1.msra.mxu0 0.0
        %1026 = vmatprep.subr.mxu0 0.0
        %1027 = vmatpush1.msra.mxu0 0.0
        %1028 = vmatprep.subr.mxu0 0.0
        %1029 = vmatpush1.msra.mxu0 0.0
        %1030 = vmatprep.subr.mxu0 0.0
        %1031 = vmatpush1.msra.mxu0 0.0
        %1032 = vmatprep.subr.mxu0 0.0
        %1033 = vmatpush1.msra.mxu0 0.0
        %1034 = vmatprep.subr.mxu0 0.0
        %1035 = vmatpush1.msra.mxu0 0.0
        %1036 = vmatprep.subr.mxu0 0.0
        %1037 = vmatpush1.msra.mxu0 0.0
        %1038 = vmatprep.subr.mxu0 0.0
        %1039 = vmatpush1.msra.mxu0 0.0
        %1040 = vmatprep.subr.mxu0 0.0
        %1041 = vmatpush1.msra.mxu0 0.0
        %1042 = vmatprep.subr.mxu0 0.0
        %1043 = vmatpush1.msra.mxu0 0.0
        %1044 = vmatprep.subr.mxu0 0.0
        %1045 = vmatpush1.msra.mxu0 0.0
        %1046 = vmatprep.subr.mxu0 0.0
        %1047 = vmatpush1.msra.mxu0 0.0
        %1048 = vmatprep.subr.mxu0 0.0
        %1049 = vmatpush1.msra.mxu0 0.0
        %1050 = vmatprep.subr.mxu0 0.0
        %1051 = vmatpush1.msra.mxu0 0.0
        %1052 = vmatprep.subr.mxu0 0.0
        %1053 = vmatpush1.msra.mxu0 0.0
        %1054 = vmatprep.subr.mxu0 0.0
        %1055 = vmatpush1.msra.mxu0 0.0
        %1056 = vmatprep.subr.mxu0 0.0
        %1057 = vmatpush1.msra.mxu0 0.0
        %1058 = vmatprep.subr.mxu0 0.0
        %1059 = vmatpush1.msra.mxu0 0.0
        %1060 = vmatprep.subr.mxu0 0.0
        %1061 = vmatpush1.msra.mxu0 0.0
        %1062 = vmatprep.mubr.f32.mxu0 0.0
        %1063 = vmatmul.mubr.f32.gmra.mrb[0].mxu0 %v996
        %v1064 = vpop.f32.mrb[0].mxu0
        %v1065 = vadd.f32 0.0, %v1064
        %v1066 = vpop.f32.mrb[0].mxu0
        %1067 = vdwg.mxu0
        %1068 = vrot.lane.b32.xlu0 %v814, 80
        %v1069 = vpop.permute.xlu0 %1068
        %v1070 = vsel %vm979, %v1069, 0
        %v1073 = vsel %vm979, %v898, 0
        %1075 = vmatprep.subr.mxu0 0.0
        %1076 = vmatpush1.xpose.msra.mxu0 %v1073
        %1077 = vmatprep.subr.mxu0 0.0
        %1078 = vmatpush1.xpose.msra.mxu0 0.0
        %1079 = vmatprep.subr.mxu0 0.0
        %1080 = vmatpush1.xpose.msra.mxu0 0.0
        %1081 = vmatprep.subr.mxu0 0.0
        %1082 = vmatpush1.xpose.msra.mxu0 0.0
        %1083 = vmatprep.subr.mxu0 0.0
        %1084 = vmatpush1.xpose.msra.mxu0 0.0
        %1085 = vmatprep.subr.mxu0 0.0
        %1086 = vmatpush1.xpose.msra.mxu0 0.0
        %1087 = vmatprep.subr.mxu0 0.0
        %1088 = vmatpush1.xpose.msra.mxu0 0.0
        %1089 = vmatprep.subr.mxu0 0.0
        %1090 = vmatpush1.xpose.msra.mxu0 0.0
        %1091 = vmatprep.subr.mxu0 0.0
        %1092 = vmatpush1.xpose.msra.mxu0 0.0
        %1093 = vmatprep.subr.mxu0 0.0
        %1094 = vmatpush1.xpose.msra.mxu0 0.0
        %1095 = vmatprep.subr.mxu0 0.0
        %1096 = vmatpush1.xpose.msra.mxu0 0.0
        %1097 = vmatprep.subr.mxu0 0.0
        %1098 = vmatpush1.xpose.msra.mxu0 0.0
        %1099 = vmatprep.subr.mxu0 0.0
        %1100 = vmatpush1.xpose.msra.mxu0 0.0
        %1101 = vmatprep.subr.mxu0 0.0
        %1102 = vmatpush1.xpose.msra.mxu0 0.0
        %1103 = vmatprep.subr.mxu0 0.0
        %1104 = vmatpush1.xpose.msra.mxu0 0.0
        %1105 = vmatprep.subr.mxu0 0.0
        %1106 = vmatpush1.xpose.msra.mxu0 0.0
        %1107 = vmatprep.subr.mxu0 0.0
        %1108 = vmatpush1.xpose.msra.mxu0 0.0
        %1109 = vmatprep.subr.mxu0 0.0
        %1110 = vmatpush1.xpose.msra.mxu0 0.0
        %1111 = vmatprep.subr.mxu0 0.0
        %1112 = vmatpush1.xpose.msra.mxu0 0.0
        %1113 = vmatprep.subr.mxu0 0.0
        %1114 = vmatpush1.xpose.msra.mxu0 0.0
        %1115 = vmatprep.subr.mxu0 0.0
        %1116 = vmatpush1.xpose.msra.mxu0 0.0
        %1117 = vmatprep.subr.mxu0 0.0
        %1118 = vmatpush1.xpose.msra.mxu0 0.0
        %1119 = vmatprep.subr.mxu0 0.0
        %1120 = vmatpush1.xpose.msra.mxu0 0.0
        %1121 = vmatprep.subr.mxu0 0.0
        %1122 = vmatpush1.xpose.msra.mxu0 0.0
        %1123 = vmatprep.subr.mxu0 0.0
        %1124 = vmatpush1.xpose.msra.mxu0 0.0
        %1125 = vmatprep.subr.mxu0 0.0
        %1126 = vmatpush1.xpose.msra.mxu0 0.0
        %1127 = vmatprep.subr.mxu0 0.0
        %1128 = vmatpush1.xpose.msra.mxu0 0.0
        %1129 = vmatprep.subr.mxu0 0.0
        %1130 = vmatpush1.xpose.msra.mxu0 0.0
        %1131 = vmatprep.subr.mxu0 0.0
        %1132 = vmatpush1.xpose.msra.mxu0 0.0
        %1133 = vmatprep.subr.mxu0 0.0
        %1134 = vmatpush1.xpose.msra.mxu0 0.0
        %1135 = vmatprep.subr.mxu0 0.0
        %1136 = vmatpush1.xpose.msra.mxu0 0.0
        %1137 = vmatprep.subr.mxu0 0.0
        %1138 = vmatpush1.xpose.msra.mxu0 0.0
        %1139 = vmatprep.mubr.f32.mxu0 0.0
        %1140 = vmatmul.mubr.f32.gmra.mrb[0].mxu0 %v1070
        %v1141 = vpop.f32.mrb[0].mxu0
        %v1142 = vadd.f32 0.0, %v1141
        %v1143 = vpop.f32.mrb[0].mxu0
        %1144 = vdwg.mxu0
        %v1145 = vsel %vm979, %v1142, -inf
        %1146 = vmax.xlane.f32.xlu0 %v1145
        %v1147 = vpop.xlane.xlu0 %1146
        %v1148 = vsub.f32 %v1142, %v1147
        %v1149 = vmul.f32 %v1148, 1.442695
        %v1150 = vpow.pop %v1149
        %v1151 = vsel %vm979, %v1150, 0.0
        %1152 = vadd.xlane.f32.xlu0 %v1151
        %v1153 = vpop.xlane.xlu0 %1152
        %v1154 = vrcp.pop %v1153
        %v1155 = vmul.f32 %v1150, %v1154
        %1156 = vst.msk [vmem:[%s704] sm:$0xff] %vm979, %v1155
        %1157 = vrot.lane.b32.xlu0 %v898, 120
        %v1158 = vpop.permute.xlu0 %1157
        %v1161 = vsel %vm979, %v1155, 0
        %1163 = vmatprep.subr.mxu0 0.0
        %1164 = vmatpush1.msra.mxu0 %v1158
        %1165 = vmatprep.subr.mxu0 0.0
        %1166 = vmatpush1.msra.mxu0 0.0
        %1167 = vmatprep.subr.mxu0 0.0
        %1168 = vmatpush1.msra.mxu0 0.0
        %1169 = vmatprep.subr.mxu0 0.0
        %1170 = vmatpush1.msra.mxu0 0.0
        %1171 = vmatprep.subr.mxu0 0.0
        %1172 = vmatpush1.msra.mxu0 0.0
        %1173 = vmatprep.subr.mxu0 0.0
        %1174 = vmatpush1.msra.mxu0 0.0
        %1175 = vmatprep.subr.mxu0 0.0
        %1176 = vmatpush1.msra.mxu0 0.0
        %1177 = vmatprep.subr.mxu0 0.0
        %1178 = vmatpush1.msra.mxu0 0.0
        %1179 = vmatprep.subr.mxu0 0.0
        %1180 = vmatpush1.msra.mxu0 0.0
        %1181 = vmatprep.subr.mxu0 0.0
        %1182 = vmatpush1.msra.mxu0 0.0
        %1183 = vmatprep.subr.mxu0 0.0
        %1184 = vmatpush1.msra.mxu0 0.0
        %1185 = vmatprep.subr.mxu0 0.0
        %1186 = vmatpush1.msra.mxu0 0.0
        %1187 = vmatprep.subr.mxu0 0.0
        %1188 = vmatpush1.msra.mxu0 0.0
        %1189 = vmatprep.subr.mxu0 0.0
        %1190 = vmatpush1.msra.mxu0 0.0
        %1191 = vmatprep.subr.mxu0 0.0
        %1192 = vmatpush1.msra.mxu0 0.0
        %1193 = vmatprep.subr.mxu0 0.0
        %1194 = vmatpush1.msra.mxu0 0.0
        %1195 = vmatprep.subr.mxu0 0.0
        %1196 = vmatpush1.msra.mxu0 0.0
        %1197 = vmatprep.subr.mxu0 0.0
        %1198 = vmatpush1.msra.mxu0 0.0
        %1199 = vmatprep.subr.mxu0 0.0
        %1200 = vmatpush1.msra.mxu0 0.0
        %1201 = vmatprep.subr.mxu0 0.0
        %1202 = vmatpush1.msra.mxu0 0.0
        %1203 = vmatprep.subr.mxu0 0.0
        %1204 = vmatpush1.msra.mxu0 0.0
        %1205 = vmatprep.subr.mxu0 0.0
        %1206 = vmatpush1.msra.mxu0 0.0
        %1207 = vmatprep.subr.mxu0 0.0
        %1208 = vmatpush1.msra.mxu0 0.0
        %1209 = vmatprep.subr.mxu0 0.0
        %1210 = vmatpush1.msra.mxu0 0.0
        %1211 = vmatprep.subr.mxu0 0.0
        %1212 = vmatpush1.msra.mxu0 0.0
        %1213 = vmatprep.subr.mxu0 0.0
        %1214 = vmatpush1.msra.mxu0 0.0
        %1215 = vmatprep.subr.mxu0 0.0
        %1216 = vmatpush1.msra.mxu0 0.0
        %1217 = vmatprep.subr.mxu0 0.0
        %1218 = vmatpush1.msra.mxu0 0.0
        %1219 = vmatprep.subr.mxu0 0.0
        %1220 = vmatpush1.msra.mxu0 0.0
        %1221 = vmatprep.subr.mxu0 0.0
        %1222 = vmatpush1.msra.mxu0 0.0
        %1223 = vmatprep.subr.mxu0 0.0
        %1224 = vmatpush1.msra.mxu0 0.0
        %1225 = vmatprep.subr.mxu0 0.0
        %1226 = vmatpush1.msra.mxu0 0.0
        %1227 = vmatprep.mubr.f32.mxu0 0.0
        %1228 = vmatmul.mubr.f32.gmra.mrb[0].mxu0 %v1161
        %v1229 = vpop.f32.mrb[0].mxu0
        %v1230 = vadd.f32 0.0, %v1229
        %v1231 = vpop.f32.mrb[0].mxu0
        %1232 = vdwg.mxu0
        %v1233 = vld [vmem:[%s729] sm:$0xff]
        %v1234 = vld [vmem:[%s729 + $0x8] sm:$0xff]
        %v1235 = vld [vmem:[%s729 + $0x10] sm:$0xff]
        %v1237 = vsel %vm979, %v1230, 0
        %1239 = vmatprep.subr.mxu0 0.0
        %1240 = vmatpush1.msra.mxu0 %v1235
        %1241 = vmatprep.subr.mxu0 0.0
        %1242 = vmatpush1.msra.mxu0 0.0
        %1243 = vmatprep.subr.mxu0 0.0
        %1244 = vmatpush1.msra.mxu0 0.0
        %1245 = vmatprep.subr.mxu0 0.0
        %1246 = vmatpush1.msra.mxu0 0.0
        %1247 = vmatprep.subr.mxu0 0.0
        %1248 = vmatpush1.msra.mxu0 0.0
        %1249 = vmatprep.subr.mxu0 0.0
        %1250 = vmatpush1.msra.mxu0 0.0
        %1251 = vmatprep.subr.mxu0 0.0
        %1252 = vmatpush1.msra.mxu0 0.0
        %1253 = vmatprep.subr.mxu0 0.0
        %1254 = vmatpush1.msra.mxu0 0.0
        %1255 = vmatprep.subr.mxu0 0.0
        %1256 = vmatpush1.msra.mxu0 0.0
        %1257 = vmatprep.subr.mxu0 0.0
        %1258 = vmatpush1.msra.mxu0 0.0
        %1259 = vmatprep.subr.mxu0 0.0
        %1260 = vmatpush1.msra.mxu0 0.0
        %1261 = vmatprep.subr.mxu0 0.0
        %1262 = vmatpush1.msra.mxu0 0.0
        %1263 = vmatprep.subr.mxu0 0.0
        %1264 = vmatpush1.msra.mxu0 0.0
        %1265 = vmatprep.subr.mxu0 0.0
        %1266 = vmatpush1.msra.mxu0 0.0
        %1267 = vmatprep.subr.mxu0 0.0
        %1268 = vmatpush1.msra.mxu0 0.0
        %1269 = vmatprep.subr.mxu0 0.0
        %1270 = vmatpush1.msra.mxu0 0.0
        %1271 = vmatprep.subr.mxu0 0.0
        %1272 = vmatpush1.msra.mxu0 0.0
        %1273 = vmatprep.subr.mxu0 0.0
        %1274 = vmatpush1.msra.mxu0 0.0
        %1275 = vmatprep.subr.mxu0 0.0
        %1276 = vmatpush1.msra.mxu0 0.0
        %1277 = vmatprep.subr.mxu0 0.0
        %1278 = vmatpush1.msra.mxu0 0.0
        %1279 = vmatprep.subr.mxu0 0.0
        %1280 = vmatpush1.msra.mxu0 0.0
        %1281 = vmatprep.subr.mxu0 0.0
        %1282 = vmatpush1.msra.mxu0 0.0
        %1283 = vmatprep.subr.mxu0 0.0
        %1284 = vmatpush1.msra.mxu0 0.0
        %1285 = vmatprep.subr.mxu0 0.0
        %1286 = vmatpush1.msra.mxu0 0.0
        %1287 = vmatprep.subr.mxu0 0.0
        %1288 = vmatpush1.msra.mxu0 0.0
        %1289 = vmatprep.subr.mxu0 0.0
        %1290 = vmatpush1.msra.mxu0 0.0
        %1291 = vmatprep.subr.mxu0 0.0
        %1292 = vmatpush1.msra.mxu0 0.0
        %1293 = vmatprep.subr.mxu0 0.0
        %1294 = vmatpush1.msra.mxu0 0.0
        %1295 = vmatprep.subr.mxu0 0.0
        %1296 = vmatpush1.msra.mxu0 0.0
        %1297 = vmatprep.subr.mxu0 0.0
        %1298 = vmatpush1.msra.mxu0 0.0
        %1299 = vmatprep.subr.mxu0 0.0
        %1300 = vmatpush1.msra.mxu0 0.0
        %1301 = vmatprep.subr.mxu0 0.0
        %1302 = vmatpush1.msra.mxu0 0.0
        %1303 = vmatprep.mubr.f32.mxu0 0.0
        %1304 = vmatmul.mubr.f32.gmra.mrb[0].mxu0 %v1237
        %v1305 = vpop.f32.mrb[0].mxu0
        %v1306 = vadd.f32 0.0, %v1305
        %v1307 = vpop.f32.mrb[0].mxu0
        %1308 = vdwg.mxu0
        %v1310 = vsel %vm904, %v1065, 0
        %1312 = vmatprep.subr.mxu0 0.0
        %1313 = vmatpush1.msra.mxu0 %v1233
        %1314 = vmatprep.subr.mxu0 0.0
        %1315 = vmatpush1.msra.mxu0 %v1234
        %1316 = vmatprep.subr.mxu0 0.0
        %1317 = vmatpush1.msra.mxu0 0.0
        %1318 = vmatprep.subr.mxu0 0.0
        %1319 = vmatpush1.msra.mxu0 0.0
        %1320 = vmatprep.subr.mxu0 0.0
        %1321 = vmatpush1.msra.mxu0 0.0
        %1322 = vmatprep.subr.mxu0 0.0
        %1323 = vmatpush1.msra.mxu0 0.0
        %1324 = vmatprep.subr.mxu0 0.0
        %1325 = vmatpush1.msra.mxu0 0.0
        %1326 = vmatprep.subr.mxu0 0.0
        %1327 = vmatpush1.msra.mxu0 0.0
        %1328 = vmatprep.subr.mxu0 0.0
        %1329 = vmatpush1.msra.mxu0 0.0
        %1330 = vmatprep.subr.mxu0 0.0
        %1331 = vmatpush1.msra.mxu0 0.0
        %1332 = vmatprep.subr.mxu0 0.0
        %1333 = vmatpush1.msra.mxu0 0.0
        %1334 = vmatprep.subr.mxu0 0.0
        %1335 = vmatpush1.msra.mxu0 0.0
        %1336 = vmatprep.subr.mxu0 0.0
        %1337 = vmatpush1.msra.mxu0 0.0
        %1338 = vmatprep.subr.mxu0 0.0
        %1339 = vmatpush1.msra.mxu0 0.0
        %1340 = vmatprep.subr.mxu0 0.0
        %1341 = vmatpush1.msra.mxu0 0.0
        %1342 = vmatprep.subr.mxu0 0.0
        %1343 = vmatpush1.msra.mxu0 0.0
        %1344 = vmatprep.subr.mxu0 0.0
        %1345 = vmatpush1.msra.mxu0 0.0
        %1346 = vmatprep.subr.mxu0 0.0
        %1347 = vmatpush1.msra.mxu0 0.0
        %1348 = vmatprep.subr.mxu0 0.0
        %1349 = vmatpush1.msra.mxu0 0.0
        %1350 = vmatprep.subr.mxu0 0.0
        %1351 = vmatpush1.msra.mxu0 0.0
        %1352 = vmatprep.subr.mxu0 0.0
        %1353 = vmatpush1.msra.mxu0 0.0
        %1354 = vmatprep.subr.mxu0 0.0
        %1355 = vmatpush1.msra.mxu0 0.0
        %1356 = vmatprep.subr.mxu0 0.0
        %1357 = vmatpush1.msra.mxu0 0.0
        %1358 = vmatprep.subr.mxu0 0.0
        %1359 = vmatpush1.msra.mxu0 0.0
        %1360 = vmatprep.subr.mxu0 0.0
        %1361 = vmatpush1.msra.mxu0 0.0
        %1362 = vmatprep.subr.mxu0 0.0
        %1363 = vmatpush1.msra.mxu0 0.0
        %1364 = vmatprep.subr.mxu0 0.0
        %1365 = vmatpush1.msra.mxu0 0.0
        %1366 = vmatprep.subr.mxu0 0.0
        %1367 = vmatpush1.msra.mxu0 0.0
        %1368 = vmatprep.subr.mxu0 0.0
        %1369 = vmatpush1.msra.mxu0 0.0
        %1370 = vmatprep.subr.mxu0 0.0
        %1371 = vmatpush1.msra.mxu0 0.0
        %1372 = vmatprep.subr.mxu0 0.0
        %1373 = vmatpush1.msra.mxu0 0.0
        %1374 = vmatprep.subr.mxu0 0.0
        %1375 = vmatpush1.msra.mxu0 0.0
        %1376 = vmatprep.mubr.f32.mxu0 0.0
        %1377 = vmatmul.mubr.f32.gmra.mrb[0].mxu0 %v1310
        %v1378 = vpop.f32.mrb[0].mxu0
        %v1379 = vadd.f32 %v1306, %v1378
        %v1380 = vpop.f32.mrb[0].mxu0
        %1381 = vdwg.mxu0
        %p1382 = scmp.eq.s32.totalorder %s44, 0
        // Predicated region
        $region89: #{tpu_custom_call.1} parent=83 // pred_check
          %p1383 = pneg %p1382
        $region90: #{tpu_custom_call.1} parent=83 // pred_check_branch
          %1385 = sbr.rel (%p1383) target = $region92
        $region91: #{tpu_custom_call.1} parent=83 // pred_region
          %v1386 = vld [vmem:[%s7] sm:$0x1]
          %v1388 = vlaneseq
          %v1389 = vshrl.u32 %v1388, 7
          %v1390 = vsub.s32 0, %v1389
          %v1391 = vrot.slane %v1386, %v1390
          %v1393 = vadd.f32 %v730, %v1391
          %1394 = vst.msk [vmem:[#allocation2] sm:$0xff] %vm743, %v1393
        $region92: #{tpu_custom_call.1} parent=83 // pred_fallthru
          _
        %v1395 = vld [vmem:[#allocation2] sm:$0xff]
        %v1396 = vadd.f32 %v1395, %v1379
        %1397 = vst.msk [vmem:[#allocation2] sm:$0xff] %vm743, %v1396
        %p1398 = scmp.eq.s32.totalorder %s44, 1
        // Predicated region
        $region93: #{tpu_custom_call.1} parent=83 // pred_check
          %p1399 = pneg %p1398
        $region94: #{tpu_custom_call.1} parent=83 // pred_check_branch
          %1401 = sbr.rel (%p1399) target = $region96
        $region95: #{tpu_custom_call.1} parent=83 // pred_region
          %v1402 = vld [vmem:[#allocation2] sm:$0xff]
          %v1403 = vld [vmem:[%s8] sm:$0x1]
          %v1404 = vld [vmem:[%s9] sm:$0x1]
          %v1405 = vsel %vm743, %v1402, 0.0
          %1406 = vadd.xlane.f32.xlu0 %v1405
          %v1407 = vpop.xlane.xlu0 %1406
          %v1408 = vrcp.pop 32.0
          %v1409 = vmul.f32 %v1407, %v1408
          %v1410 = vsub.f32 %v1402, %v1409
          %v1411 = vmul.f32 %v1410, %v1410
          %v1412 = vsel %vm743, %v1411, 0.0
          %1413 = vadd.xlane.f32.xlu0 %v1412
          %v1414 = vpop.xlane.xlu0 %1413
          %v1415 = vmul.f32 %v1414, %v1408
          %v1416 = vadd.f32 %v1415, 1e-05
          %v1417 = vrsqrt.pop %v1416
          %v1418 = vmul.f32 %v1410, %v1417
          %v1420 = vlaneseq
          %v1421 = vshrl.u32 %v1420, 7
          %v1422 = vsub.s32 0, %v1421
          %v1423 = vrot.slane %v1403, %v1422
          %v1425 = vmul.f32 %v1418, %v1423
          %v1427 = vlaneseq
          %v1428 = vshrl.u32 %v1427, 7
          %v1429 = vsub.s32 0, %v1428
          %v1430 = vrot.slane %v1404, %v1429
          %v1432 = vadd.f32 %v1425, %v1430
          %v1433 = vld [vmem:[%s10] sm:$0xff]
          %v1434 = vld [vmem:[%s10 + $0x8] sm:$0xff]
          %v1435 = vld [vmem:[%s10 + $0x10] sm:$0xff]
          %v1436 = vld [vmem:[%s10 + $0x18] sm:$0xff]
          %v1437 = vld [vmem:[%s11] sm:$0x1]
          %v1439 = vlaneseq
          %v1440 = vshrl.u32 %v1439, 7
          %v1441 = vsub.s32 0, %v1440
          %v1442 = vrot.slane %v1437, %v1441
          %v1445 = vsel %vm743, %v1432, 0
          %1447 = vmatprep.subr.mxu0 0.0
          %1448 = vmatpush1.msra.mxu0 %v1433
          %1449 = vmatprep.subr.mxu0 0.0
          %1450 = vmatpush1.msra.mxu0 %v1434
          %1451 = vmatprep.subr.mxu0 0.0
          %1452 = vmatpush1.msra.mxu0 %v1435
          %1453 = vmatprep.subr.mxu0 0.0
          %1454 = vmatpush1.msra.mxu0 %v1436
          %1455 = vmatprep.subr.mxu0 0.0
          %1456 = vmatpush1.msra.mxu0 0.0
          %1457 = vmatprep.subr.mxu0 0.0
          %1458 = vmatpush1.msra.mxu0 0.0
          %1459 = vmatprep.subr.mxu0 0.0
          %1460 = vmatpush1.msra.mxu0 0.0
          %1461 = vmatprep.subr.mxu0 0.0
          %1462 = vmatpush1.msra.mxu0 0.0
          %1463 = vmatprep.subr.mxu0 0.0
          %1464 = vmatpush1.msra.mxu0 0.0
          %1465 = vmatprep.subr.mxu0 0.0
          %1466 = vmatpush1.msra.mxu0 0.0
          %1467 = vmatprep.subr.mxu0 0.0
          %1468 = vmatpush1.msra.mxu0 0.0
          %1469 = vmatprep.subr.mxu0 0.0
          %1470 = vmatpush1.msra.mxu0 0.0
          %1471 = vmatprep.subr.mxu0 0.0
          %1472 = vmatpush1.msra.mxu0 0.0
          %1473 = vmatprep.subr.mxu0 0.0
          %1474 = vmatpush1.msra.mxu0 0.0
          %1475 = vmatprep.subr.mxu0 0.0
          %1476 = vmatpush1.msra.mxu0 0.0
          %1477 = vmatprep.subr.mxu0 0.0
          %1478 = vmatpush1.msra.mxu0 0.0
          %1479 = vmatprep.subr.mxu0 0.0
          %1480 = vmatpush1.msra.mxu0 0.0
          %1481 = vmatprep.subr.mxu0 0.0
          %1482 = vmatpush1.msra.mxu0 0.0
          %1483 = vmatprep.subr.mxu0 0.0
          %1484 = vmatpush1.msra.mxu0 0.0
          %1485 = vmatprep.subr.mxu0 0.0
          %1486 = vmatpush1.msra.mxu0 0.0
          %1487 = vmatprep.subr.mxu0 0.0
          %1488 = vmatpush1.msra.mxu0 0.0
          %1489 = vmatprep.subr.mxu0 0.0
          %1490 = vmatpush1.msra.mxu0 0.0
          %1491 = vmatprep.subr.mxu0 0.0
          %1492 = vmatpush1.msra.mxu0 0.0
          %1493 = vmatprep.subr.mxu0 0.0
          %1494 = vmatpush1.msra.mxu0 0.0
          %1495 = vmatprep.subr.mxu0 0.0
          %1496 = vmatpush1.msra.mxu0 0.0
          %1497 = vmatprep.subr.mxu0 0.0
          %1498 = vmatpush1.msra.mxu0 0.0
          %1499 = vmatprep.subr.mxu0 0.0
          %1500 = vmatpush1.msra.mxu0 0.0
          %1501 = vmatprep.subr.mxu0 0.0
          %1502 = vmatpush1.msra.mxu0 0.0
          %1503 = vmatprep.subr.mxu0 0.0
          %1504 = vmatpush1.msra.mxu0 0.0
          %1505 = vmatprep.subr.mxu0 0.0
          %1506 = vmatpush1.msra.mxu0 0.0
          %1507 = vmatprep.subr.mxu0 0.0
          %1508 = vmatpush1.msra.mxu0 0.0
          %1509 = vmatprep.subr.mxu0 0.0
          %1510 = vmatpush1.msra.mxu0 0.0
          %1511 = vmatprep.mubr.f32.mxu0 0.0
          %1512 = vmatmul.mubr.f32.gmra.mrb[0].mxu0 %v1445
          %v1513 = vpop.f32.mrb[0].mxu0
          %v1514 = vadd.f32 %v1442, %v1513
          %v1515 = vpop.f32.mrb[0].mxu0
          %1516 = vdwg.mxu0
          %v1517 = vmax.f32 %v1514, 0.0
          %v1518 = vld [vmem:[%s12] sm:$0xff]
          %v1519 = vld [vmem:[%s12 + $0x8] sm:$0xff]
          %v1520 = vld [vmem:[%s12 + $0x10] sm:$0xff]
          %v1521 = vld [vmem:[%s12 + $0x18] sm:$0xff]
          %v1522 = vld [vmem:[%s12 + $0x20] sm:$0xff]
          %v1523 = vld [vmem:[%s12 + $0x28] sm:$0xff]
          %v1524 = vld [vmem:[%s12 + $0x30] sm:$0xff]
          %v1525 = vld [vmem:[%s12 + $0x38] sm:$0xff]
          %v1526 = vld [vmem:[%s13] sm:$0x1]
          %v1528 = vlaneseq
          %v1529 = vshrl.u32 %v1528, 7
          %v1530 = vsub.s32 0, %v1529
          %v1531 = vrot.slane %v1526, %v1530
          %vm1533 = vcmask 523264
          %v1535 = vsel %vm1533, %v1517, 0
          %1537 = vmatprep.subr.mxu0 0.0
          %1538 = vmatpush1.msra.mxu0 %v1518
          %1539 = vmatprep.subr.mxu0 0.0
          %1540 = vmatpush1.msra.mxu0 %v1519
          %1541 = vmatprep.subr.mxu0 0.0
          %1542 = vmatpush1.msra.mxu0 %v1520
          %1543 = vmatprep.subr.mxu0 0.0
          %1544 = vmatpush1.msra.mxu0 %v1521
          %1545 = vmatprep.subr.mxu0 0.0
          %1546 = vmatpush1.msra.mxu0 %v1522
          %1547 = vmatprep.subr.mxu0 0.0
          %1548 = vmatpush1.msra.mxu0 %v1523
          %1549 = vmatprep.subr.mxu0 0.0
          %1550 = vmatpush1.msra.mxu0 %v1524
          %1551 = vmatprep.subr.mxu0 0.0
          %1552 = vmatpush1.msra.mxu0 %v1525
          %1553 = vmatprep.subr.mxu0 0.0
          %1554 = vmatpush1.msra.mxu0 0.0
          %1555 = vmatprep.subr.mxu0 0.0
          %1556 = vmatpush1.msra.mxu0 0.0
          %1557 = vmatprep.subr.mxu0 0.0
          %1558 = vmatpush1.msra.mxu0 0.0
          %1559 = vmatprep.subr.mxu0 0.0
          %1560 = vmatpush1.msra.mxu0 0.0
          %1561 = vmatprep.subr.mxu0 0.0
          %1562 = vmatpush1.msra.mxu0 0.0
          %1563 = vmatprep.subr.mxu0 0.0
          %1564 = vmatpush1.msra.mxu0 0.0
          %1565 = vmatprep.subr.mxu0 0.0
          %1566 = vmatpush1.msra.mxu0 0.0
          %1567 = vmatprep.subr.mxu0 0.0
          %1568 = vmatpush1.msra.mxu0 0.0
          %1569 = vmatprep.subr.mxu0 0.0
          %1570 = vmatpush1.msra.mxu0 0.0
          %1571 = vmatprep.subr.mxu0 0.0
          %1572 = vmatpush1.msra.mxu0 0.0
          %1573 = vmatprep.subr.mxu0 0.0
          %1574 = vmatpush1.msra.mxu0 0.0
          %1575 = vmatprep.subr.mxu0 0.0
          %1576 = vmatpush1.msra.mxu0 0.0
          %1577 = vmatprep.subr.mxu0 0.0
          %1578 = vmatpush1.msra.mxu0 0.0
          %1579 = vmatprep.subr.mxu0 0.0
          %1580 = vmatpush1.msra.mxu0 0.0
          %1581 = vmatprep.subr.mxu0 0.0
          %1582 = vmatpush1.msra.mxu0 0.0
          %1583 = vmatprep.subr.mxu0 0.0
          %1584 = vmatpush1.msra.mxu0 0.0
          %1585 = vmatprep.subr.mxu0 0.0
          %1586 = vmatpush1.msra.mxu0 0.0
          %1587 = vmatprep.subr.mxu0 0.0
          %1588 = vmatpush1.msra.mxu0 0.0
          %1589 = vmatprep.subr.mxu0 0.0
          %1590 = vmatpush1.msra.mxu0 0.0
          %1591 = vmatprep.subr.mxu0 0.0
          %1592 = vmatpush1.msra.mxu0 0.0
          %1593 = vmatprep.subr.mxu0 0.0
          %1594 = vmatpush1.msra.mxu0 0.0
          %1595 = vmatprep.subr.mxu0 0.0
          %1596 = vmatpush1.msra.mxu0 0.0
          %1597 = vmatprep.subr.mxu0 0.0
          %1598 = vmatpush1.msra.mxu0 0.0
          %1599 = vmatprep.subr.mxu0 0.0
          %1600 = vmatpush1.msra.mxu0 0.0
          %1601 = vmatprep.mubr.f32.mxu0 0.0
          %1602 = vmatmul.mubr.f32.gmra.mrb[0].mxu0 %v1535
          %v1603 = vpop.f32.mrb[0].mxu0
          %v1604 = vadd.f32 %v1531, %v1603
          %v1605 = vpop.f32.mrb[0].mxu0
          %1606 = vdwg.mxu0
          %v1607 = vadd.f32 %v1604, %v1432
          %v1608 = vld [vmem:[%s14] sm:$0x1]
          %v1609 = vld [vmem:[%s15] sm:$0x1]
          %v1610 = vsel %vm743, %v1607, 0.0
          %1611 = vadd.xlane.f32.xlu0 %v1610
          %v1612 = vpop.xlane.xlu0 %1611
          %v1613 = vmul.f32 %v1612, %v1408
          %v1614 = vsub.f32 %v1607, %v1613
          %v1615 = vmul.f32 %v1614, %v1614
          %v1616 = vsel %vm743, %v1615, 0.0
          %1617 = vadd.xlane.f32.xlu0 %v1616
          %v1618 = vpop.xlane.xlu0 %1617
          %v1619 = vmul.f32 %v1618, %v1408
          %v1620 = vadd.f32 %v1619, 1e-05
          %v1621 = vrsqrt.pop %v1620
          %v1622 = vmul.f32 %v1614, %v1621
          %v1624 = vlaneseq
          %v1625 = vshrl.u32 %v1624, 7
          %v1626 = vsub.s32 0, %v1625
          %v1627 = vrot.slane %v1608, %v1626
          %v1629 = vmul.f32 %v1622, %v1627
          %v1631 = vlaneseq
          %v1632 = vshrl.u32 %v1631, 7
          %v1633 = vsub.s32 0, %v1632
          %v1634 = vrot.slane %v1609, %v1633
          %v1636 = vadd.f32 %v1629, %v1634
          %vm1637 = vcmp.ne.f32.partialorder %v730, 0.0
          %v1638 = vsel %vm1637, 1, 0
          %v1639 = vcvt.s32.f32 %v1638
          %v1640 = vsel %vm743, %v1639, -inf
          %1641 = vmax.xlane.f32.xlu0 %v1640
          %v1642 = vpop.xlane.xlu0 %1641
          %v1643 = vmul.f32 %v1636, %v1642
          %1644 = vst.msk [vmem:[%s690] sm:$0xff] %vm743, %v1643
        $region96: #{tpu_custom_call.1} parent=83 // pred_fallthru
          _
        %s1645 = sand.u32 %s430, 1
        %s1646 = scalar_lea.sflag [#allocation5], %s1645
        %s1647 = sand.u32 %s430, 1
        %s1648 = smul.addr %s1647, 8
        %s1649 = scalar_lea.vmem [#allocation6], %s1648
        %s1650 = sand.u32 %s39, 1
        %s1651 = scalar_lea.sflag [#allocation8], %s1650
        %s1652 = sand.u32 %s458, 1
        %s1653 = smul.addr %s1652, 8
        %s1654 = scalar_lea.vmem [#allocation7], %s1653
        %s1655 = sand.u32 %s39, 1
        %s1656 = scalar_lea.sflag [#allocation8], %s1655
        %s1657 = sand.u32 %s486, 1
        %s1658 = smul.addr %s1657, 8
        %s1659 = scalar_lea.vmem [#allocation9], %s1658
        // Predicated region
        $region97: #{tpu_custom_call.1} parent=83 // pred_check
          %p1660 = pneg %p440
        $region98: #{tpu_custom_call.1} parent=83 // pred_check_branch
          %1662 = sbr.rel (%p1660) target = $region100
        $region99: #{tpu_custom_call.1} parent=83 // pred_region
          %s1664 = ssub.s32 128, 128
          %1665 = vsyncadd %s1646, %s1664
          %s1666 = smul.addr %s43, 128
          %s1667 = scalar_lea.hbm %s16, %s1666
          %s1669 = sshll.u32 %s1649, 4
          %s1670 = int_to_ptr.vmem [resolvable:$true] %s1669
          %1672 = dma.vmem_to_hbm [thread:$0]  %s1670, 128, %s1667, %s1646
        $region100: #{tpu_custom_call.1} parent=83 // pred_fallthru
          _
        // Predicated region
        $region101: #{tpu_custom_call.1} parent=83 // pred_check
          %p1673 = pneg %p468
        $region102: #{tpu_custom_call.1} parent=83 // pred_check_branch
          %1675 = sbr.rel (%p1673) target = $region104
        $region103: #{tpu_custom_call.1} parent=83 // pred_region
          %s1677 = ssub.s32 128, 128
          %1678 = vsyncadd %s1651, %s1677
          %s1679 = smul.addr %s43, 2
          %s1680 = sadd.s32 %s44, %s1679
          %s1681 = smul.addr %s1680, 128
          %s1682 = scalar_lea.hbm %s17, %s1681
          %s1684 = sshll.u32 %s1654, 4
          %s1685 = int_to_ptr.vmem [resolvable:$true] %s1684
          %1687 = dma.vmem_to_hbm [thread:$0]  %s1685, 128, %s1682, %s1651
        $region104: #{tpu_custom_call.1} parent=83 // pred_fallthru
          _
        // Predicated region
        $region105: #{tpu_custom_call.1} parent=83 // pred_check
          %p1688 = pneg %p496
        $region106: #{tpu_custom_call.1} parent=83 // pred_check_branch
          %1690 = sbr.rel (%p1688) target = $region108
        $region107: #{tpu_custom_call.1} parent=83 // pred_region
          %s1692 = ssub.s32 128, 128
          %1693 = vsyncadd %s1656, %s1692
          %s1694 = smul.addr %s43, 2
          %s1695 = sadd.s32 %s44, %s1694
          %s1696 = smul.addr %s1695, 128
          %s1697 = scalar_lea.hbm %s18, %s1696
          %s1699 = sshll.u32 %s1659, 4
          %s1700 = int_to_ptr.vmem [resolvable:$true] %s1699
          %1702 = dma.vmem_to_hbm [thread:$0]  %s1700, 128, %s1697, %s1656
        $region108: #{tpu_custom_call.1} parent=83 // pred_fallthru
          _
      $region84: #{tpu_custom_call.1} parent=5 // pred_fallthru
        _
      %p1703 = scmp.le.s32.totalorder 2, %s34
      // Predicated region
      $region109: #{tpu_custom_call.1} parent=5 // pred_check
        %p1704 = pneg %p1703
      $region110: #{tpu_custom_call.1} parent=5 // pred_check_branch
        %1706 = sbr.rel (%p1704) target = $region112
      $region111: #{tpu_custom_call.1} parent=5 // pred_region
        %s1707 = ssub.s32 %s34, 2
        // Predicated region
        $region113: #{tpu_custom_call.1} parent=111 // pred_check
          %p1708 = pneg %p446
        $region114: #{tpu_custom_call.1} parent=111 // pred_check_branch
          %1710 = sbr.rel (%p1708) target = $region116
        $region115: #{tpu_custom_call.1} parent=111 // pred_region
          %s1711 = sand.u32 %s431, 1
          %s1712 = scalar_lea.sflag [#allocation5], %s1711
          %s1713 = sand.u32 %s431, 1
          %s1714 = smul.addr %s1713, 8
          %s1715 = scalar_lea.vmem [#allocation6], %s1714
          %1716 = dma.done %s1712, 128
        $region116: #{tpu_custom_call.1} parent=111 // pred_fallthru
          _
        // Predicated region
        $region117: #{tpu_custom_call.1} parent=111 // pred_check
          %p1717 = pneg %p474
        $region118: #{tpu_custom_call.1} parent=111 // pred_check_branch
          %1719 = sbr.rel (%p1717) target = $region120
        $region119: #{tpu_custom_call.1} parent=111 // pred_region
          %s1720 = sand.u32 %s40, 1
          %s1721 = scalar_lea.sflag [#allocation8], %s1720
          %s1722 = sand.u32 %s459, 1
          %s1723 = smul.addr %s1722, 8
          %s1724 = scalar_lea.vmem [#allocation7], %s1723
          %1725 = dma.done %s1721, 128
        $region120: #{tpu_custom_call.1} parent=111 // pred_fallthru
          _
        // Predicated region
        $region121: #{tpu_custom_call.1} parent=111 // pred_check
          %p1726 = pneg %p502
        $region122: #{tpu_custom_call.1} parent=111 // pred_check_branch
          %1728 = sbr.rel (%p1726) target = $region124
        $region123: #{tpu_custom_call.1} parent=111 // pred_region
          %s1729 = sand.u32 %s40, 1
          %s1730 = scalar_lea.sflag [#allocation8], %s1729
          %s1731 = sand.u32 %s487, 1
          %s1732 = smul.addr %s1731, 8
          %s1733 = scalar_lea.vmem [#allocation9], %s1732
          %1734 = dma.done %s1730, 128
        $region124: #{tpu_custom_call.1} parent=111 // pred_fallthru
          _
      $region112: #{tpu_custom_call.1} parent=5 // pred_fallthru
        _
    $region6: #{tpu_custom_call.1} parent=1 // loop_footer
      %s38 = sadd.s32 1, %s34
    $region7: #{tpu_custom_call.1} parent=1 // loop_footer_branch
      %33 = sbr.rel target = $region3
    $region8: #{tpu_custom_call.1} parent=1 // loop_exit
      _
    %1735 = vsyncpa [#allocation4], 1
    %s1736 = scalar_lea.sflag [#allocation4], 1
    %1737 = vsyncpa %s1736, 1
    %1738 = vsyncpa [#allocation5], 1
    %s1739 = scalar_lea.sflag [#allocation5], 1
    %1740 = vsyncpa %s1739, 1
    %1741 = vsyncpa [#allocation8], 1
    %s1742 = scalar_lea.sflag [#allocation8], 1
    %1743 = vsyncpa %s1742, 1

// kernel: tpu_custom_call.1
$region0: #{tpu_custom_call.1}
  #allocation0 [shape = 'u32[]', space=smem, size = 0x4, offset = 0x4, fixed_abs, tag = 'smem constant byte address 0x4 - core index']
  #allocation1 [shape = 'u32[144,128]{1,0:T(1,128)}', space=vmem, size = 0x12000, scoped, tag = 'internal scratch']
  #allocation2 [shape = 'f32[8,32]{1,0:T(8,128)}', space=vmem, size = 0x1000, scoped, tag = 'scratch operand']
  %s0 = inlined_call_operand.vmem [shape: f32[2,8,32], index: 0, kind: input, shape index: {}]
  %s1 = inlined_call_operand.hbm [shape: f32[2,8,32], index: 1, kind: input, shape index: {}]
  %s2 = inlined_call_operand.vmem [shape: f32[2,32,56], index: 2, kind: input, shape index: {}]
  %s3 = inlined_call_operand.vmem [shape: f32[2,1,56], index: 3, kind: input, shape index: {}]
  %s4 = inlined_call_operand.vmem [shape: f32[2,32,16], index: 4, kind: input, shape index: {}]
  %s5 = inlined_call_operand.vmem [shape: f32[2,1,16], index: 5, kind: input, shape index: {}]
  %s6 = inlined_call_operand.vmem [shape: f32[2,24,32], index: 6, kind: input, shape index: {}]
  %s7 = inlined_call_operand.vmem [shape: f32[1,32], index: 7, kind: input, shape index: {}]
  %s8 = inlined_call_operand.vmem [shape: f32[1,32], index: 8, kind: input, shape index: {}]
  %s9 = inlined_call_operand.vmem [shape: f32[1,32], index: 9, kind: input, shape index: {}]
  %s10 = inlined_call_operand.vmem [shape: f32[32,64], index: 10, kind: input, shape index: {}]
  %s11 = inlined_call_operand.vmem [shape: f32[1,64], index: 11, kind: input, shape index: {}]
  %s12 = inlined_call_operand.vmem [shape: f32[64,32], index: 12, kind: input, shape index: {}]
  %s13 = inlined_call_operand.vmem [shape: f32[1,32], index: 13, kind: input, shape index: {}]
  %s14 = inlined_call_operand.vmem [shape: f32[1,32], index: 14, kind: input, shape index: {}]
  %s15 = inlined_call_operand.vmem [shape: f32[1,32], index: 15, kind: input, shape index: {}]
  %s16 = inlined_call_operand.hbm [shape: f32[2,8,32], index: 16, kind: output, shape index: {0}]
  %s17 = inlined_call_operand.hbm [shape: f32[2,2,8,8], index: 17, kind: output, shape index: {1}]
  %s18 = inlined_call_operand.hbm [shape: f32[2,2,8,8], index: 18, kind: output, shape index: {2}]
  %19 = xla_tuple %s16, %s17, %s18
  %s20 = sld [smem:[#allocation0]]
  $region125: #{tpu_custom_call.1} parent=0
    _
  %s22 = ssub.s32 1, %s20
  %s23 = scalar_select 0, %s22, %s20
  $region1: #{tpu_custom_call.1} parent=0
    #allocation3 [shape = 'u8[8192]{0}', space=vmem, size = 0x2000, scoped, tag = 'input window, operand 1']
    #allocation4 [shape = 's32[2]{0}', space=sflag, size = 0x8, scoped, tag = 'scoped memory for tpu_custom_call.1']
    #allocation5 [shape = 's32[2]{0}', space=sflag, size = 0x8, scoped, tag = 'scoped memory for tpu_custom_call.1']
    #allocation6 [shape = 'u8[8192]{0}', space=vmem, size = 0x2000, scoped, tag = 'output window, operand 0']
    #allocation7 [shape = 'u8[8192]{0}', space=vmem, size = 0x2000, scoped, tag = 'output window, operand 1']
    #allocation8 [shape = 's32[2]{0}', space=sflag, size = 0x8, scoped, tag = 'scoped memory for tpu_custom_call.1']
    #allocation9 [shape = 'u8[8192]{0}', space=vmem, size = 0x2000, scoped, tag = 'output window, operand 2']
    %24 = vsyncpa [#allocation4], 0
    %s25 = scalar_lea.sflag [#allocation4], 1
    %26 = vsyncpa %s25, 0
    %27 = vsyncpa [#allocation5], 0
    %s28 = scalar_lea.sflag [#allocation5], 1
    %29 = vsyncpa %s28, 0
    %30 = vsyncpa [#allocation8], 0
    %s31 = scalar_lea.sflag [#allocation8], 1
    %32 = vsyncpa %s31, 0
    loop: start=0, step=1, limit=6
    $region2: #{tpu_custom_call.1} parent=1 // loop_pre_header
      _
    $region3: #{tpu_custom_call.1} parent=1 // loop_header
      %s34 = sphi 0, %s38
      %p35 = scmp.ge.s32.totalorder %s34, 6
      %s41 = sphi 0, %s53
      %s42 = sphi 0, %s49
      %s43 = sphi 0, %s41
      %s44 = sphi 0, %s42
      %s45 = sphi 0, %s43
      %s46 = sphi 0, %s44
      %s56 = sphi 0, %s58
      %s59 = sphi 0, %s56
      %s60 = sphi 0, %s59
      %s76 = sphi 0, %s60
      %s82 = sphi 0, %s84
      %s85 = sphi 0, %s82
      %s86 = sphi 0, %s85
      %s102 = sphi 0, %s86
      %s108 = sphi 0, %s110
      %s111 = sphi 0, %s108
      %s112 = sphi 0, %s111
      %s128 = sphi 0, %s112
      %s134 = sphi 0, %s136
      %s137 = sphi 0, %s134
      %s138 = sphi 0, %s137
      %s154 = sphi 0, %s138
      %s160 = sphi 0, %s162
      %s163 = sphi 0, %s160
      %s164 = sphi 0, %s163
      %s180 = sphi 0, %s164
      %s186 = sphi 0, %s188
      %s189 = sphi 0, %s186
      %s190 = sphi 0, %s189
      %s206 = sphi 0, %s190
      %s212 = sphi 0, %s214
      %s215 = sphi 0, %s212
      %s216 = sphi 0, %s215
      %s232 = sphi 0, %s216
      %s236 = sphi 0, %s236
      %s238 = sphi 0, %s236
      %s239 = sphi 0, %s238
      %s253 = sphi 0, %s239
      %s257 = sphi 0, %s257
      %s259 = sphi 0, %s257
      %s260 = sphi 0, %s259
      %s274 = sphi 0, %s260
      %s278 = sphi 0, %s278
      %s280 = sphi 0, %s278
      %s281 = sphi 0, %s280
      %s295 = sphi 0, %s281
      %s299 = sphi 0, %s299
      %s301 = sphi 0, %s299
      %s302 = sphi 0, %s301
      %s316 = sphi 0, %s302
      %s320 = sphi 0, %s320
      %s322 = sphi 0, %s320
      %s323 = sphi 0, %s322
      %s337 = sphi 0, %s323
      %s341 = sphi 0, %s341
      %s343 = sphi 0, %s341
      %s344 = sphi 0, %s343
      %s358 = sphi 0, %s344
      %s362 = sphi 0, %s362
      %s364 = sphi 0, %s362
      %s365 = sphi 0, %s364
      %s379 = sphi 0, %s365
      %s383 = sphi 0, %s383
      %s385 = sphi 0, %s383
      %s386 = sphi 0, %s385
      %s400 = sphi 0, %s386
      %s404 = sphi 0, %s404
      %s406 = sphi 0, %s404
      %s407 = sphi 0, %s406
      %s421 = sphi 0, %s407
      %s427 = sphi 0, %s429
      %s430 = sphi 0, %s427
      %s431 = sphi 0, %s430
      %s447 = sphi 0, %s431
      %s455 = sphi 0, %s457
      %s458 = sphi 0, %s455
      %s459 = sphi 0, %s458
      %s475 = sphi 0, %s459
      %s483 = sphi 0, %s485
      %s486 = sphi 0, %s483
      %s487 = sphi 0, %s486
      %s503 = sphi 0, %s487
    $region4: #{tpu_custom_call.1} parent=1 // loop_header_branch
      %37 = sbr.rel (%p35) target = $region8
    $region5: #{tpu_custom_call.1} parent=1 // loop_body
      %s39 = ssub.s32 %s34, 1
      %s40 = ssub.s32 %s34, 2
      %s47 = sadd.s32 1, %s42
      %p48 = scmp.ge.s32.totalorder %s47, 2
      %s49 = scalar_select %p48, 0, %s47
      %s50 = sadd.s32 1, %s41
      %s51 = scalar_select %p48, %s50, %s41
      %p52 = scmp.ge.s32.totalorder %s51, 2
      %s53 = scalar_select %p52, 0, %s51
      %s54 = ssub.s32 %s41, %s53
      %p55 = scmp.eq.s32.totalorder %s54, 0
      %s57 = sadd.s32 %s56, 1
      %s58 = scalar_select %p55, %s56, %s57
      %p61 = pneg %p55
      %p62 = scmp.eq.s32.totalorder %s34, 3
      %p63 = por %p61, %p62
      %p64 = scmp.ne.s32.totalorder %s56, %s59
      %p65 = scmp.eq.s32.totalorder %s34, 0
      %p66 = por %p64, %p65
      %p67 = scmp.ne.s32.totalorder %s56, %s59
      %p68 = scmp.eq.s32.totalorder %s39, 3
      %p69 = por %p67, %p68
      %p70 = scmp.ne.s32.totalorder %s59, %s60
      %p71 = scmp.eq.s32.totalorder %s39, 0
      %p72 = por %p70, %p71
      %p73 = scmp.ne.s32.totalorder %s59, %s60
      %p74 = scmp.eq.s32.totalorder %s40, 3
      %p75 = por %p73, %p74
      %p77 = scmp.ne.s32.totalorder %s60, %s76
      %p78 = scmp.eq.s32.totalorder %s40, 0
      %p79 = por %p77, %p78
      %s80 = ssub.s32 %s41, %s53
      %p81 = scmp.eq.s32.totalorder %s80, 0
      %s83 = sadd.s32 %s82, 1
      %s84 = scalar_select %p81, %s82, %s83
      %p87 = pneg %p81
      %p88 = scmp.eq.s32.totalorder %s34, 3
      %p89 = por %p87, %p88
      %p90 = scmp.ne.s32.totalorder %s82, %s85
      %p91 = scmp.eq.s32.totalorder %s34, 0
      %p92 = por %p90, %p91
      %p93 = scmp.ne.s32.totalorder %s82, %s85
      %p94 = scmp.eq.s32.totalorder %s39, 3
      %p95 = por %p93, %p94
      %p96 = scmp.ne.s32.totalorder %s85, %s86
      %p97 = scmp.eq.s32.totalorder %s39, 0
      %p98 = por %p96, %p97
      %p99 = scmp.ne.s32.totalorder %s85, %s86
      %p100 = scmp.eq.s32.totalorder %s40, 3
      %p101 = por %p99, %p100
      %p103 = scmp.ne.s32.totalorder %s86, %s102
      %p104 = scmp.eq.s32.totalorder %s40, 0
      %p105 = por %p103, %p104
      %s106 = ssub.s32 %s42, %s49
      %p107 = scmp.eq.s32.totalorder %s106, 0
      %s109 = sadd.s32 %s108, 1
      %s110 = scalar_select %p107, %s108, %s109
      %p113 = pneg %p107
      %p114 = scmp.eq.s32.totalorder %s34, 3
      %p115 = por %p113, %p114
      %p116 = scmp.ne.s32.totalorder %s108, %s111
      %p117 = scmp.eq.s32.totalorder %s34, 0
      %p118 = por %p116, %p117
      %p119 = scmp.ne.s32.totalorder %s108, %s111
      %p120 = scmp.eq.s32.totalorder %s39, 3
      %p121 = por %p119, %p120
      %p122 = scmp.ne.s32.totalorder %s111, %s112
      %p123 = scmp.eq.s32.totalorder %s39, 0
      %p124 = por %p122, %p123
      %p125 = scmp.ne.s32.totalorder %s111, %s112
      %p126 = scmp.eq.s32.totalorder %s40, 3
      %p127 = por %p125, %p126
      %p129 = scmp.ne.s32.totalorder %s112, %s128
      %p130 = scmp.eq.s32.totalorder %s40, 0
      %p131 = por %p129, %p130
      %s132 = ssub.s32 %s42, %s49
      %p133 = scmp.eq.s32.totalorder %s132, 0
      %s135 = sadd.s32 %s134, 1
      %s136 = scalar_select %p133, %s134, %s135
      %p139 = pneg %p133
      %p140 = scmp.eq.s32.totalorder %s34, 3
      %p141 = por %p139, %p140
      %p142 = scmp.ne.s32.totalorder %s134, %s137
      %p143 = scmp.eq.s32.totalorder %s34, 0
      %p144 = por %p142, %p143
      %p145 = scmp.ne.s32.totalorder %s134, %s137
      %p146 = scmp.eq.s32.totalorder %s39, 3
      %p147 = por %p145, %p146
      %p148 = scmp.ne.s32.totalorder %s137, %s138
      %p149 = scmp.eq.s32.totalorder %s39, 0
      %p150 = por %p148, %p149
      %p151 = scmp.ne.s32.totalorder %s137, %s138
      %p152 = scmp.eq.s32.totalorder %s40, 3
      %p153 = por %p151, %p152
      %p155 = scmp.ne.s32.totalorder %s138, %s154
      %p156 = scmp.eq.s32.totalorder %s40, 0
      %p157 = por %p155, %p156
      %s158 = ssub.s32 %s42, %s49
      %p159 = scmp.eq.s32.totalorder %s158, 0
      %s161 = sadd.s32 %s160, 1
      %s162 = scalar_select %p159, %s160, %s161
      %p165 = pneg %p159
      %p166 = scmp.eq.s32.totalorder %s34, 3
      %p167 = por %p165, %p166
      %p168 = scmp.ne.s32.totalorder %s160, %s163
      %p169 = scmp.eq.s32.totalorder %s34, 0
      %p170 = por %p168, %p169
      %p171 = scmp.ne.s32.totalorder %s160, %s163
      %p172 = scmp.eq.s32.totalorder %s39, 3
      %p173 = por %p171, %p172
      %p174 = scmp.ne.s32.totalorder %s163, %s164
      %p175 = scmp.eq.s32.totalorder %s39, 0
      %p176 = por %p174, %p175
      %p177 = scmp.ne.s32.totalorder %s163, %s164
      %p178 = scmp.eq.s32.totalorder %s40, 3
      %p179 = por %p177, %p178
      %p181 = scmp.ne.s32.totalorder %s164, %s180
      %p182 = scmp.eq.s32.totalorder %s40, 0
      %p183 = por %p181, %p182
      %s184 = ssub.s32 %s42, %s49
      %p185 = scmp.eq.s32.totalorder %s184, 0
      %s187 = sadd.s32 %s186, 1
      %s188 = scalar_select %p185, %s186, %s187
      %p191 = pneg %p185
      %p192 = scmp.eq.s32.totalorder %s34, 3
      %p193 = por %p191, %p192
      %p194 = scmp.ne.s32.totalorder %s186, %s189
      %p195 = scmp.eq.s32.totalorder %s34, 0
      %p196 = por %p194, %p195
      %p197 = scmp.ne.s32.totalorder %s186, %s189
      %p198 = scmp.eq.s32.totalorder %s39, 3
      %p199 = por %p197, %p198
      %p200 = scmp.ne.s32.totalorder %s189, %s190
      %p201 = scmp.eq.s32.totalorder %s39, 0
      %p202 = por %p200, %p201
      %p203 = scmp.ne.s32.totalorder %s189, %s190
      %p204 = scmp.eq.s32.totalorder %s40, 3
      %p205 = por %p203, %p204
      %p207 = scmp.ne.s32.totalorder %s190, %s206
      %p208 = scmp.eq.s32.totalorder %s40, 0
      %p209 = por %p207, %p208
      %s210 = ssub.s32 %s42, %s49
      %p211 = scmp.eq.s32.totalorder %s210, 0
      %s213 = sadd.s32 %s212, 1
      %s214 = scalar_select %p211, %s212, %s213
      %p217 = pneg %p211
      %p218 = scmp.eq.s32.totalorder %s34, 3
      %p219 = por %p217, %p218
      %p220 = scmp.ne.s32.totalorder %s212, %s215
      %p221 = scmp.eq.s32.totalorder %s34, 0
      %p222 = por %p220, %p221
      %p223 = scmp.ne.s32.totalorder %s212, %s215
      %p224 = scmp.eq.s32.totalorder %s39, 3
      %p225 = por %p223, %p224
      %p226 = scmp.ne.s32.totalorder %s215, %s216
      %p227 = scmp.eq.s32.totalorder %s39, 0
      %p228 = por %p226, %p227
      %p229 = scmp.ne.s32.totalorder %s215, %s216
      %p230 = scmp.eq.s32.totalorder %s40, 3
      %p231 = por %p229, %p230
      %p233 = scmp.ne.s32.totalorder %s216, %s232
      %p234 = scmp.eq.s32.totalorder %s40, 0
      %p235 = por %p233, %p234
      %s237 = sadd.s32 %s236, 1
      %p240 = scmp.eq.s32.totalorder %s34, 3
      %p241 = scmp.ne.s32.totalorder %s236, %s238
      %p242 = scmp.eq.s32.totalorder %s34, 0
      %p243 = por %p241, %p242
      %p244 = scmp.ne.s32.totalorder %s236, %s238
      %p245 = scmp.eq.s32.totalorder %s39, 3
      %p246 = por %p244, %p245
      %p247 = scmp.ne.s32.totalorder %s238, %s239
      %p248 = scmp.eq.s32.totalorder %s39, 0
      %p249 = por %p247, %p248
      %p250 = scmp.ne.s32.totalorder %s238, %s239
      %p251 = scmp.eq.s32.totalorder %s40, 3
      %p252 = por %p250, %p251
      %p254 = scmp.ne.s32.totalorder %s239, %s253
      %p255 = scmp.eq.s32.totalorder %s40, 0
      %p256 = por %p254, %p255
      %s258 = sadd.s32 %s257, 1
      %p261 = scmp.eq.s32.totalorder %s34, 3
      %p262 = scmp.ne.s32.totalorder %s257, %s259
      %p263 = scmp.eq.s32.totalorder %s34, 0
      %p264 = por %p262, %p263
      %p265 = scmp.ne.s32.totalorder %s257, %s259
      %p266 = scmp.eq.s32.totalorder %s39, 3
      %p267 = por %p265, %p266
      %p268 = scmp.ne.s32.totalorder %s259, %s260
      %p269 = scmp.eq.s32.totalorder %s39, 0
      %p270 = por %p268, %p269
      %p271 = scmp.ne.s32.totalorder %s259, %s260
      %p272 = scmp.eq.s32.totalorder %s40, 3
      %p273 = por %p271, %p272
      %p275 = scmp.ne.s32.totalorder %s260, %s274
      %p276 = scmp.eq.s32.totalorder %s40, 0
      %p277 = por %p275, %p276
      %s279 = sadd.s32 %s278, 1
      %p282 = scmp.eq.s32.totalorder %s34, 3
      %p283 = scmp.ne.s32.totalorder %s278, %s280
      %p284 = scmp.eq.s32.totalorder %s34, 0
      %p285 = por %p283, %p284
      %p286 = scmp.ne.s32.totalorder %s278, %s280
      %p287 = scmp.eq.s32.totalorder %s39, 3
      %p288 = por %p286, %p287
      %p289 = scmp.ne.s32.totalorder %s280, %s281
      %p290 = scmp.eq.s32.totalorder %s39, 0
      %p291 = por %p289, %p290
      %p292 = scmp.ne.s32.totalorder %s280, %s281
      %p293 = scmp.eq.s32.totalorder %s40, 3
      %p294 = por %p292, %p293
      %p296 = scmp.ne.s32.totalorder %s281, %s295
      %p297 = scmp.eq.s32.totalorder %s40, 0
      %p298 = por %p296, %p297
      %s300 = sadd.s32 %s299, 1
      %p303 = scmp.eq.s32.totalorder %s34, 3
      %p304 = scmp.ne.s32.totalorder %s299, %s301
      %p305 = scmp.eq.s32.totalorder %s34, 0
      %p306 = por %p304, %p305
      %p307 = scmp.ne.s32.totalorder %s299, %s301
      %p308 = scmp.eq.s32.totalorder %s39, 3
      %p309 = por %p307, %p308
      %p310 = scmp.ne.s32.totalorder %s301, %s302
      %p311 = scmp.eq.s32.totalorder %s39, 0
      %p312 = por %p310, %p311
      %p313 = scmp.ne.s32.totalorder %s301, %s302
      %p314 = scmp.eq.s32.totalorder %s40, 3
      %p315 = por %p313, %p314
      %p317 = scmp.ne.s32.totalorder %s302, %s316
      %p318 = scmp.eq.s32.totalorder %s40, 0
      %p319 = por %p317, %p318
      %s321 = sadd.s32 %s320, 1
      %p324 = scmp.eq.s32.totalorder %s34, 3
      %p325 = scmp.ne.s32.totalorder %s320, %s322
      %p326 = scmp.eq.s32.totalorder %s34, 0
      %p327 = por %p325, %p326
      %p328 = scmp.ne.s32.totalorder %s320, %s322
      %p329 = scmp.eq.s32.totalorder %s39, 3
      %p330 = por %p328, %p329
      %p331 = scmp.ne.s32.totalorder %s322, %s323
      %p332 = scmp.eq.s32.totalorder %s39, 0
      %p333 = por %p331, %p332
      %p334 = scmp.ne.s32.totalorder %s322, %s323
      %p335 = scmp.eq.s32.totalorder %s40, 3
      %p336 = por %p334, %p335
      %p338 = scmp.ne.s32.totalorder %s323, %s337
      %p339 = scmp.eq.s32.totalorder %s40, 0
      %p340 = por %p338, %p339
      %s342 = sadd.s32 %s341, 1
      %p345 = scmp.eq.s32.totalorder %s34, 3
      %p346 = scmp.ne.s32.totalorder %s341, %s343
      %p347 = scmp.eq.s32.totalorder %s34, 0
      %p348 = por %p346, %p347
      %p349 = scmp.ne.s32.totalorder %s341, %s343
      %p350 = scmp.eq.s32.totalorder %s39, 3
      %p351 = por %p349, %p350
      %p352 = scmp.ne.s32.totalorder %s343, %s344
      %p353 = scmp.eq.s32.totalorder %s39, 0
      %p354 = por %p352, %p353
      %p355 = scmp.ne.s32.totalorder %s343, %s344
      %p356 = scmp.eq.s32.totalorder %s40, 3
      %p357 = por %p355, %p356
      %p359 = scmp.ne.s32.totalorder %s344, %s358
      %p360 = scmp.eq.s32.totalorder %s40, 0
      %p361 = por %p359, %p360
      %s363 = sadd.s32 %s362, 1
      %p366 = scmp.eq.s32.totalorder %s34, 3
      %p367 = scmp.ne.s32.totalorder %s362, %s364
      %p368 = scmp.eq.s32.totalorder %s34, 0
      %p369 = por %p367, %p368
      %p370 = scmp.ne.s32.totalorder %s362, %s364
      %p371 = scmp.eq.s32.totalorder %s39, 3
      %p372 = por %p370, %p371
      %p373 = scmp.ne.s32.totalorder %s364, %s365
      %p374 = scmp.eq.s32.totalorder %s39, 0
      %p375 = por %p373, %p374
      %p376 = scmp.ne.s32.totalorder %s364, %s365
      %p377 = scmp.eq.s32.totalorder %s40, 3
      %p378 = por %p376, %p377
      %p380 = scmp.ne.s32.totalorder %s365, %s379
      %p381 = scmp.eq.s32.totalorder %s40, 0
      %p382 = por %p380, %p381
      %s384 = sadd.s32 %s383, 1
      %p387 = scmp.eq.s32.totalorder %s34, 3
      %p388 = scmp.ne.s32.totalorder %s383, %s385
      %p389 = scmp.eq.s32.totalorder %s34, 0
      %p390 = por %p388, %p389
      %p391 = scmp.ne.s32.totalorder %s383, %s385
      %p392 = scmp.eq.s32.totalorder %s39, 3
      %p393 = por %p391, %p392
      %p394 = scmp.ne.s32.totalorder %s385, %s386
      %p395 = scmp.eq.s32.totalorder %s39, 0
      %p396 = por %p394, %p395
      %p397 = scmp.ne.s32.totalorder %s385, %s386
      %p398 = scmp.eq.s32.totalorder %s40, 3
      %p399 = por %p397, %p398
      %p401 = scmp.ne.s32.totalorder %s386, %s400
      %p402 = scmp.eq.s32.totalorder %s40, 0
      %p403 = por %p401, %p402
      %s405 = sadd.s32 %s404, 1
      %p408 = scmp.eq.s32.totalorder %s34, 3
      %p409 = scmp.ne.s32.totalorder %s404, %s406
      %p410 = scmp.eq.s32.totalorder %s34, 0
      %p411 = por %p409, %p410
      %p412 = scmp.ne.s32.totalorder %s404, %s406
      %p413 = scmp.eq.s32.totalorder %s39, 3
      %p414 = por %p412, %p413
      %p415 = scmp.ne.s32.totalorder %s406, %s407
      %p416 = scmp.eq.s32.totalorder %s39, 0
      %p417 = por %p415, %p416
      %p418 = scmp.ne.s32.totalorder %s406, %s407
      %p419 = scmp.eq.s32.totalorder %s40, 3
      %p420 = por %p418, %p419
      %p422 = scmp.ne.s32.totalorder %s407, %s421
      %p423 = scmp.eq.s32.totalorder %s40, 0
      %p424 = por %p422, %p423
      %s425 = ssub.s32 %s41, %s53
      %p426 = scmp.eq.s32.totalorder %s425, 0
      %s428 = sadd.s32 %s427, 1
      %s429 = scalar_select %p426, %s427, %s428
      %p432 = pneg %p426
      %p433 = scmp.eq.s32.totalorder %s34, 3
      %p434 = por %p432, %p433
      %p435 = scmp.ne.s32.totalorder %s427, %s430
      %p436 = scmp.eq.s32.totalorder %s34, 0
      %p437 = por %p435, %p436
      %p438 = scmp.ne.s32.totalorder %s427, %s430
      %p439 = scmp.eq.s32.totalorder %s39, 3
      %p440 = por %p438, %p439
      %p441 = scmp.ne.s32.totalorder %s430, %s431
      %p442 = scmp.eq.s32.totalorder %s39, 0
      %p443 = por %p441, %p442
      %p444 = scmp.ne.s32.totalorder %s430, %s431
      %p445 = scmp.eq.s32.totalorder %s40, 3
      %p446 = por %p444, %p445
      %p448 = scmp.ne.s32.totalorder %s431, %s447
      %p449 = scmp.eq.s32.totalorder %s40, 0
      %p450 = por %p448, %p449
      %s451 = ssub.s32 %s41, %s53
      %s452 = ssub.s32 %s42, %s49
      %s453 = sor.u32 %s451, %s452
      %p454 = scmp.eq.s32.totalorder %s453, 0
      %s456 = sadd.s32 %s455, 1
      %s457 = scalar_select %p454, %s455, %s456
      %p460 = pneg %p454
      %p461 = scmp.eq.s32.totalorder %s34, 3
      %p462 = por %p460, %p461
      %p463 = scmp.ne.s32.totalorder %s455, %s458
      %p464 = scmp.eq.s32.totalorder %s34, 0
      %p465 = por %p463, %p464
      %p466 = scmp.ne.s32.totalorder %s455, %s458
      %p467 = scmp.eq.s32.totalorder %s39, 3
      %p468 = por %p466, %p467
      %p469 = scmp.ne.s32.totalorder %s458, %s459
      %p470 = scmp.eq.s32.totalorder %s39, 0
      %p471 = por %p469, %p470
      %p472 = scmp.ne.s32.totalorder %s458, %s459
      %p473 = scmp.eq.s32.totalorder %s40, 3
      %p474 = por %p472, %p473
      %p476 = scmp.ne.s32.totalorder %s459, %s475
      %p477 = scmp.eq.s32.totalorder %s40, 0
      %p478 = por %p476, %p477
      %s479 = ssub.s32 %s41, %s53
      %s480 = ssub.s32 %s42, %s49
      %s481 = sor.u32 %s479, %s480
      %p482 = scmp.eq.s32.totalorder %s481, 0
      %s484 = sadd.s32 %s483, 1
      %s485 = scalar_select %p482, %s483, %s484
      %p488 = pneg %p482
      %p489 = scmp.eq.s32.totalorder %s34, 3
      %p490 = por %p488, %p489
      %p491 = scmp.ne.s32.totalorder %s483, %s486
      %p492 = scmp.eq.s32.totalorder %s34, 0
      %p493 = por %p491, %p492
      %p494 = scmp.ne.s32.totalorder %s483, %s486
      %p495 = scmp.eq.s32.totalorder %s39, 3
      %p496 = por %p494, %p495
      %p497 = scmp.ne.s32.totalorder %s486, %s487
      %p498 = scmp.eq.s32.totalorder %s39, 0
      %p499 = por %p497, %p498
      %p500 = scmp.ne.s32.totalorder %s486, %s487
      %p501 = scmp.eq.s32.totalorder %s40, 3
      %p502 = por %p500, %p501
      %p504 = scmp.ne.s32.totalorder %s487, %s503
      %p505 = scmp.eq.s32.totalorder %s40, 0
      %p506 = por %p504, %p505
      %p507 = scmp.le.s32.totalorder 1, %s34
      %p508 = scmp.lt.s32.totalorder %s34, 5
      %p509 = pnand %p507, %p508
      %p510 = pneg %p509
      // Predicated region
      $region9: #{tpu_custom_call.1} parent=5 // pred_check
        _
      $region10: #{tpu_custom_call.1} parent=5 // pred_check_branch
        %512 = sbr.rel (%p509) target = $region12
      $region11: #{tpu_custom_call.1} parent=5 // pred_region
        %s513 = ssub.s32 %s34, 1
        // Predicated region
        $region13: #{tpu_custom_call.1} parent=11 // pred_check
          %p514 = pneg %p249
        $region14: #{tpu_custom_call.1} parent=11 // pred_check_branch
          %516 = sbr.rel (%p514) target = $region16
        $region15: #{tpu_custom_call.1} parent=11 // pred_region
          _
        $region16: #{tpu_custom_call.1} parent=11 // pred_fallthru
          _
        // Predicated region
        $region17: #{tpu_custom_call.1} parent=11 // pred_check
          %p517 = pneg %p270
        $region18: #{tpu_custom_call.1} parent=11 // pred_check_branch
          %519 = sbr.rel (%p517) target = $region20
        $region19: #{tpu_custom_call.1} parent=11 // pred_region
          _
        $region20: #{tpu_custom_call.1} parent=11 // pred_fallthru
          _
        // Predicated region
        $region21: #{tpu_custom_call.1} parent=11 // pred_check
          %p520 = pneg %p291
        $region22: #{tpu_custom_call.1} parent=11 // pred_check_branch
          %522 = sbr.rel (%p520) target = $region24
        $region23: #{tpu_custom_call.1} parent=11 // pred_region
          _
        $region24: #{tpu_custom_call.1} parent=11 // pred_fallthru
          _
        // Predicated region
        $region25: #{tpu_custom_call.1} parent=11 // pred_check
          %p523 = pneg %p312
        $region26: #{tpu_custom_call.1} parent=11 // pred_check_branch
          %525 = sbr.rel (%p523) target = $region28
        $region27: #{tpu_custom_call.1} parent=11 // pred_region
          _
        $region28: #{tpu_custom_call.1} parent=11 // pred_fallthru
          _
        // Predicated region
        $region29: #{tpu_custom_call.1} parent=11 // pred_check
          %p526 = pneg %p333
        $region30: #{tpu_custom_call.1} parent=11 // pred_check_branch
          %528 = sbr.rel (%p526) target = $region32
        $region31: #{tpu_custom_call.1} parent=11 // pred_region
          _
        $region32: #{tpu_custom_call.1} parent=11 // pred_fallthru
          _
        // Predicated region
        $region33: #{tpu_custom_call.1} parent=11 // pred_check
          %p529 = pneg %p354
        $region34: #{tpu_custom_call.1} parent=11 // pred_check_branch
          %531 = sbr.rel (%p529) target = $region36
        $region35: #{tpu_custom_call.1} parent=11 // pred_region
          _
        $region36: #{tpu_custom_call.1} parent=11 // pred_fallthru
          _
        // Predicated region
        $region37: #{tpu_custom_call.1} parent=11 // pred_check
          %p532 = pneg %p375
        $region38: #{tpu_custom_call.1} parent=11 // pred_check_branch
          %534 = sbr.rel (%p532) target = $region40
        $region39: #{tpu_custom_call.1} parent=11 // pred_region
          _
        $region40: #{tpu_custom_call.1} parent=11 // pred_fallthru
          _
        // Predicated region
        $region41: #{tpu_custom_call.1} parent=11 // pred_check
          %p535 = pneg %p396
        $region42: #{tpu_custom_call.1} parent=11 // pred_check_branch
          %537 = sbr.rel (%p535) target = $region44
        $region43: #{tpu_custom_call.1} parent=11 // pred_region
          _
        $region44: #{tpu_custom_call.1} parent=11 // pred_fallthru
          _
        // Predicated region
        $region45: #{tpu_custom_call.1} parent=11 // pred_check
          %p538 = pneg %p417
        $region46: #{tpu_custom_call.1} parent=11 // pred_check_branch
          %540 = sbr.rel (%p538) target = $region48
        $region47: #{tpu_custom_call.1} parent=11 // pred_region
          _
        $region48: #{tpu_custom_call.1} parent=11 // pred_fallthru
          _
      $region12: #{tpu_custom_call.1} parent=5 // pred_fallthru
        _
      %p541 = scmp.lt.s32.totalorder %s34, 4
      // Predicated region
      $region49: #{tpu_custom_call.1} parent=5 // pred_check
        %p542 = pneg %p541
      $region50: #{tpu_custom_call.1} parent=5 // pred_check_branch
        %544 = sbr.rel (%p542) target = $region52
      $region51: #{tpu_custom_call.1} parent=5 // pred_region
        // Predicated region
        $region53: #{tpu_custom_call.1} parent=51 // pred_check
          %p545 = pneg %p66
        $region54: #{tpu_custom_call.1} parent=51 // pred_check_branch
          %547 = sbr.rel (%p545) target = $region56
        $region55: #{tpu_custom_call.1} parent=51 // pred_region
          %p548 = scmp.lt.s32.totalorder %s41, 1
          %s549 = scalar_select %p548, %s41, 1
          %s550 = smul.addr %s549, 8
          %s551 = scalar_lea.vmem %s0, %s550
        $region56: #{tpu_custom_call.1} parent=51 // pred_fallthru
          _
        // Predicated region
        $region57: #{tpu_custom_call.1} parent=51 // pred_check
          %p552 = pneg %p92
        $region58: #{tpu_custom_call.1} parent=51 // pred_check_branch
          %554 = sbr.rel (%p552) target = $region60
        $region59: #{tpu_custom_call.1} parent=51 // pred_region
          %s555 = sand.u32 %s82, 1
          %s556 = scalar_lea.sflag [#allocation4], %s555
          %s557 = sand.u32 %s82, 1
          %s558 = smul.addr %s557, 8
          %s559 = scalar_lea.vmem [#allocation3], %s558
          %s561 = ssub.s32 128, 128
          %562 = vsyncadd %s556, %s561
          %s563 = smul.addr %s41, 128
          %s564 = scalar_lea.hbm %s1, %s563
          %s566 = sshll.u32 %s559, 4
          %s567 = int_to_ptr.vmem [resolvable:$true] %s566
          %569 = dma.hbm_to_vmem [thread:$0]  %s564, 128, %s567, %s556
        $region60: #{tpu_custom_call.1} parent=51 // pred_fallthru
          _
        // Predicated region
        $region61: #{tpu_custom_call.1} parent=51 // pred_check
          %p570 = pneg %p118
        $region62: #{tpu_custom_call.1} parent=51 // pred_check_branch
          %572 = sbr.rel (%p570) target = $region64
        $region63: #{tpu_custom_call.1} parent=51 // pred_region
          %p573 = scmp.lt.s32.totalorder %s42, 1
          %s574 = scalar_select %p573, %s42, 1
          %s575 = smul.addr %s574, 4
          %s576 = smul.addr %s575, 8
          %s577 = scalar_lea.vmem %s2, %s576
        $region64: #{tpu_custom_call.1} parent=51 // pred_fallthru
          _
        // Predicated region
        $region65: #{tpu_custom_call.1} parent=51 // pred_check
          %p578 = pneg %p144
        $region66: #{tpu_custom_call.1} parent=51 // pred_check_branch
          %580 = sbr.rel (%p578) target = $region68
        $region67: #{tpu_custom_call.1} parent=51 // pred_region
          %p581 = scmp.lt.s32.totalorder %s42, 1
          %s582 = scalar_select %p581, %s42, 1
          %s583 = scalar_lea.vmem %s3, %s582
        $region68: #{tpu_custom_call.1} parent=51 // pred_fallthru
          _
        // Predicated region
        $region69: #{tpu_custom_call.1} parent=51 // pred_check
          %p584 = pneg %p170
        $region70: #{tpu_custom_call.1} parent=51 // pred_check_branch
          %586 = sbr.rel (%p584) target = $region72
        $region71: #{tpu_custom_call.1} parent=51 // pred_region
          %p587 = scmp.lt.s32.totalorder %s42, 1
          %s588 = scalar_select %p587, %s42, 1
          %s589 = smul.addr %s588, 4
          %s590 = smul.addr %s589, 8
          %s591 = scalar_lea.vmem %s4, %s590
        $region72: #{tpu_custom_call.1} parent=51 // pred_fallthru
          _
        // Predicated region
        $region73: #{tpu_custom_call.1} parent=51 // pred_check
          %p592 = pneg %p196
        $region74: #{tpu_custom_call.1} parent=51 // pred_check_branch
          %594 = sbr.rel (%p592) target = $region76
        $region75: #{tpu_custom_call.1} parent=51 // pred_region
          %p595 = scmp.lt.s32.totalorder %s42, 1
          %s596 = scalar_select %p595, %s42, 1
          %s597 = scalar_lea.vmem %s5, %s596
        $region76: #{tpu_custom_call.1} parent=51 // pred_fallthru
          _
        // Predicated region
        $region77: #{tpu_custom_call.1} parent=51 // pred_check
          %p598 = pneg %p222
        $region78: #{tpu_custom_call.1} parent=51 // pred_check_branch
          %600 = sbr.rel (%p598) target = $region80
        $region79: #{tpu_custom_call.1} parent=51 // pred_region
          %p601 = scmp.lt.s32.totalorder %s42, 1
          %s602 = scalar_select %p601, %s42, 1
          %s603 = smul.addr %s602, 3
          %s604 = smul.addr %s603, 8
          %s605 = scalar_lea.vmem %s6, %s604
        $region80: #{tpu_custom_call.1} parent=51 // pred_fallthru
          _
      $region52: #{tpu_custom_call.1} parent=5 // pred_fallthru
        _
      %p606 = scmp.le.s32.totalorder 1, %s34
      %p607 = scmp.lt.s32.totalorder %s34, 5
      %p608 = pnand %p606, %p607
      %p609 = pneg %p608
      // Predicated region
      $region81: #{tpu_custom_call.1} parent=5 // pred_check
        _
      $region82: #{tpu_custom_call.1} parent=5 // pred_check_branch
        %611 = sbr.rel (%p608) target = $region84
      $region83: #{tpu_custom_call.1} parent=5 // pred_region
        %s612 = ssub.s32 %s34, 1
        %s613 = sand.u32 %s85, 1
        %s614 = scalar_lea.sflag [#allocation4], %s613
        %s615 = sand.u32 %s85, 1
        %s616 = smul.addr %s615, 8
        %s617 = scalar_lea.vmem [#allocation3], %s616
        // Predicated region
        $region85: #{tpu_custom_call.1} parent=83 // pred_check
          %p618 = pneg %p98
        $region86: #{tpu_custom_call.1} parent=83 // pred_check_branch
          %620 = sbr.rel (%p618) target = $region88
        $region87: #{tpu_custom_call.1} parent=83 // pred_region
          %621 = dma.done %s614, 128
        $region88: #{tpu_custom_call.1} parent=83 // pred_fallthru
          _
        %p622 = scmp.lt.s32.totalorder %s43, 1
        %s623 = scalar_select %p622, %s43, 1
        %s624 = smul.addr %s623, 8
        %s625 = scalar_lea.vmem %s0, %s624
        %p626 = pneg %p72
        %p627 = pneg %p69
        %s628 = sand.u32 %s85, 1
        %s629 = scalar_lea.sflag [#allocation4], %s628
        %s630 = sand.u32 %s85, 1
        %s631 = smul.addr %s630, 8
        %s632 = scalar_lea.vmem [#allocation3], %s631
        %p633 = pneg %p98
        %p634 = pneg %p95
        %p635 = scmp.lt.s32.totalorder %s44, 1
        %s636 = scalar_select %p635, %s44, 1
        %s637 = smul.addr %s636, 4
        %s638 = smul.addr %s637, 8
        %s639 = scalar_lea.vmem %s2, %s638
        %p640 = pneg %p124
        %p641 = pneg %p121
        %p642 = scmp.lt.s32.totalorder %s44, 1
        %s643 = scalar_select %p642, %s44, 1
        %s644 = scalar_lea.vmem %s3, %s643
        %p645 = pneg %p150
        %p646 = pneg %p147
        %p647 = scmp.lt.s32.totalorder %s44, 1
        %s648 = scalar_select %p647, %s44, 1
        %s649 = smul.addr %s648, 4
        %s650 = smul.addr %s649, 8
        %s651 = scalar_lea.vmem %s4, %s650
        %p652 = pneg %p176
        %p653 = pneg %p173
        %p654 = scmp.lt.s32.totalorder %s44, 1
        %s655 = scalar_select %p654, %s44, 1
        %s656 = scalar_lea.vmem %s5, %s655
        %p657 = pneg %p202
        %p658 = pneg %p199
        %p659 = scmp.lt.s32.totalorder %s44, 1
        %s660 = scalar_select %p659, %s44, 1
        %s661 = smul.addr %s660, 3
        %s662 = smul.addr %s661, 8
        %s663 = scalar_lea.vmem %s6, %s662
        %p664 = pneg %p228
        %p665 = pneg %p225
        %p666 = pneg %p249
        %p667 = pneg %p246
        %p668 = pneg %p270
        %p669 = pneg %p267
        %p670 = pneg %p291
        %p671 = pneg %p288
        %p672 = pneg %p312
        %p673 = pneg %p309
        %p674 = pneg %p333
        %p675 = pneg %p330
        %p676 = pneg %p354
        %p677 = pneg %p351
        %p678 = pneg %p375
        %p679 = pneg %p372
        %p680 = pneg %p396
        %p681 = pneg %p393
        %p682 = pneg %p417
        %p683 = pneg %p414
        %p684 = pneg %p443
        %p685 = pneg %p440
        %s686 = sand.u32 %s430, 1
        %s687 = scalar_lea.sflag [#allocation5], %s686
        %s688 = sand.u32 %s430, 1
        %s689 = smul.addr %s688, 8
        %s690 = scalar_lea.vmem [#allocation6], %s689
        %p691 = pneg %p471
        %p692 = pneg %p468
        %s693 = sand.u32 %s39, 1
        %s694 = scalar_lea.sflag [#allocation8], %s693
        %s695 = sand.u32 %s458, 1
        %s696 = smul.addr %s695, 8
        %s697 = scalar_lea.vmem [#allocation7], %s696
        %p698 = pneg %p499
        %p699 = pneg %p496
        %s700 = sand.u32 %s39, 1
        %s701 = scalar_lea.sflag [#allocation8], %s700
        %s702 = sand.u32 %s486, 1
        %s703 = smul.addr %s702, 8
        %s704 = scalar_lea.vmem [#allocation9], %s703
        %p705 = scmp.lt.s32.totalorder %s43, 1
        %s706 = scalar_select %p705, %s43, 1
        %s707 = smul.addr %s706, 8
        %s708 = scalar_lea.vmem %s0, %s707
        %p709 = scmp.lt.s32.totalorder %s44, 1
        %s710 = scalar_select %p709, %s44, 1
        %s711 = smul.addr %s710, 4
        %s712 = smul.addr %s711, 8
        %s713 = scalar_lea.vmem %s2, %s712
        %p714 = scmp.lt.s32.totalorder %s44, 1
        %s715 = scalar_select %p714, %s44, 1
        %s716 = scalar_lea.vmem %s3, %s715
        %p717 = scmp.lt.s32.totalorder %s44, 1
        %s718 = scalar_select %p717, %s44, 1
        %s719 = smul.addr %s718, 4
        %s720 = smul.addr %s719, 8
        %s721 = scalar_lea.vmem %s4, %s720
        %p722 = scmp.lt.s32.totalorder %s44, 1
        %s723 = scalar_select %p722, %s44, 1
        %s724 = scalar_lea.vmem %s5, %s723
        %p725 = scmp.lt.s32.totalorder %s44, 1
        %s726 = scalar_select %p725, %s44, 1
        %s727 = smul.addr %s726, 3
        %s728 = smul.addr %s727, 8
        %s729 = scalar_lea.vmem %s6, %s728
        %v730 = vld [vmem:[%s708] sm:$0xff]
        %v731 = vld [vmem:[%s617] sm:$0xff]
        %v732 = vld [vmem:[%s713] sm:$0xff]
        %v733 = vld [vmem:[%s713 + $0x8] sm:$0xff]
        %v734 = vld [vmem:[%s713 + $0x10] sm:$0xff]
        %v735 = vld [vmem:[%s713 + $0x18] sm:$0xff]
        %v736 = vld [vmem:[%s716] sm:$0x1]
        %v738 = vlaneseq
        %v739 = vshrl.u32 %v738, 7
        %v740 = vsub.s32 0, %v739
        %v741 = vrot.slane %v736, %v740
        %vm743 = vcmask 261120
        %v745 = vsel %vm743, %v730, 0
        %747 = vmatprep.subr.mxu0 0.0
        %748 = vmatpush1.msra.mxu0 %v732
        %749 = vmatprep.subr.mxu0 0.0
        %750 = vmatpush1.msra.mxu0 %v733
        %751 = vmatprep.subr.mxu0 0.0
        %752 = vmatpush1.msra.mxu0 %v734
        %753 = vmatprep.subr.mxu0 0.0
        %754 = vmatpush1.msra.mxu0 %v735
        %755 = vmatprep.subr.mxu0 0.0
        %756 = vmatpush1.msra.mxu0 0.0
        %757 = vmatprep.subr.mxu0 0.0
        %758 = vmatpush1.msra.mxu0 0.0
        %759 = vmatprep.subr.mxu0 0.0
        %760 = vmatpush1.msra.mxu0 0.0
        %761 = vmatprep.subr.mxu0 0.0
        %762 = vmatpush1.msra.mxu0 0.0
        %763 = vmatprep.subr.mxu0 0.0
        %764 = vmatpush1.msra.mxu0 0.0
        %765 = vmatprep.subr.mxu0 0.0
        %766 = vmatpush1.msra.mxu0 0.0
        %767 = vmatprep.subr.mxu0 0.0
        %768 = vmatpush1.msra.mxu0 0.0
        %769 = vmatprep.subr.mxu0 0.0
        %770 = vmatpush1.msra.mxu0 0.0
        %771 = vmatprep.subr.mxu0 0.0
        %772 = vmatpush1.msra.mxu0 0.0
        %773 = vmatprep.subr.mxu0 0.0
        %774 = vmatpush1.msra.mxu0 0.0
        %775 = vmatprep.subr.mxu0 0.0
        %776 = vmatpush1.msra.mxu0 0.0
        %777 = vmatprep.subr.mxu0 0.0
        %778 = vmatpush1.msra.mxu0 0.0
        %779 = vmatprep.subr.mxu0 0.0
        %780 = vmatpush1.msra.mxu0 0.0
        %781 = vmatprep.subr.mxu0 0.0
        %782 = vmatpush1.msra.mxu0 0.0
        %783 = vmatprep.subr.mxu0 0.0
        %784 = vmatpush1.msra.mxu0 0.0
        %785 = vmatprep.subr.mxu0 0.0
        %786 = vmatpush1.msra.mxu0 0.0
        %787 = vmatprep.subr.mxu0 0.0
        %788 = vmatpush1.msra.mxu0 0.0
        %789 = vmatprep.subr.mxu0 0.0
        %790 = vmatpush1.msra.mxu0 0.0
        %791 = vmatprep.subr.mxu0 0.0
        %792 = vmatpush1.msra.mxu0 0.0
        %793 = vmatprep.subr.mxu0 0.0
        %794 = vmatpush1.msra.mxu0 0.0
        %795 = vmatprep.subr.mxu0 0.0
        %796 = vmatpush1.msra.mxu0 0.0
        %797 = vmatprep.subr.mxu0 0.0
        %798 = vmatpush1.msra.mxu0 0.0
        %799 = vmatprep.subr.mxu0 0.0
        %800 = vmatpush1.msra.mxu0 0.0
        %801 = vmatprep.subr.mxu0 0.0
        %802 = vmatpush1.msra.mxu0 0.0
        %803 = vmatprep.subr.mxu0 0.0
        %804 = vmatpush1.msra.mxu0 0.0
        %805 = vmatprep.subr.mxu0 0.0
        %806 = vmatpush1.msra.mxu0 0.0
        %807 = vmatprep.subr.mxu0 0.0
        %808 = vmatpush1.msra.mxu0 0.0
        %809 = vmatprep.subr.mxu0 0.0
        %810 = vmatpush1.msra.mxu0 0.0
        %811 = vmatprep.mubr.f32.mxu0 0.0
        %812 = vmatmul.mubr.f32.gmra.mrb[0].mxu0 %v745
        %v813 = vpop.f32.mrb[0].mxu0
        %v814 = vadd.f32 %v741, %v813
        %v815 = vpop.f32.mrb[0].mxu0
        %816 = vdwg.mxu0
        %v817 = vld [vmem:[%s721] sm:$0xff]
        %v818 = vld [vmem:[%s721 + $0x8] sm:$0xff]
        %v819 = vld [vmem:[%s721 + $0x10] sm:$0xff]
        %v820 = vld [vmem:[%s721 + $0x18] sm:$0xff]
        %v821 = vld [vmem:[%s724] sm:$0x1]
        %v823 = vlaneseq
        %v824 = vshrl.u32 %v823, 7
        %v825 = vsub.s32 0, %v824
        %v826 = vrot.slane %v821, %v825
        %v829 = vsel %vm743, %v731, 0
        %831 = vmatprep.subr.mxu0 0.0
        %832 = vmatpush1.msra.mxu0 %v817
        %833 = vmatprep.subr.mxu0 0.0
        %834 = vmatpush1.msra.mxu0 %v818
        %835 = vmatprep.subr.mxu0 0.0
        %836 = vmatpush1.msra.mxu0 %v819
        %837 = vmatprep.subr.mxu0 0.0
        %838 = vmatpush1.msra.mxu0 %v820
        %839 = vmatprep.subr.mxu0 0.0
        %840 = vmatpush1.msra.mxu0 0.0
        %841 = vmatprep.subr.mxu0 0.0
        %842 = vmatpush1.msra.mxu0 0.0
        %843 = vmatprep.subr.mxu0 0.0
        %844 = vmatpush1.msra.mxu0 0.0
        %845 = vmatprep.subr.mxu0 0.0
        %846 = vmatpush1.msra.mxu0 0.0
        %847 = vmatprep.subr.mxu0 0.0
        %848 = vmatpush1.msra.mxu0 0.0
        %849 = vmatprep.subr.mxu0 0.0
        %850 = vmatpush1.msra.mxu0 0.0
        %851 = vmatprep.subr.mxu0 0.0
        %852 = vmatpush1.msra.mxu0 0.0
        %853 = vmatprep.subr.mxu0 0.0
        %854 = vmatpush1.msra.mxu0 0.0
        %855 = vmatprep.subr.mxu0 0.0
        %856 = vmatpush1.msra.mxu0 0.0
        %857 = vmatprep.subr.mxu0 0.0
        %858 = vmatpush1.msra.mxu0 0.0
        %859 = vmatprep.subr.mxu0 0.0
        %860 = vmatpush1.msra.mxu0 0.0
        %861 = vmatprep.subr.mxu0 0.0
        %862 = vmatpush1.msra.mxu0 0.0
        %863 = vmatprep.subr.mxu0 0.0
        %864 = vmatpush1.msra.mxu0 0.0
        %865 = vmatprep.subr.mxu0 0.0
        %866 = vmatpush1.msra.mxu0 0.0
        %867 = vmatprep.subr.mxu0 0.0
        %868 = vmatpush1.msra.mxu0 0.0
        %869 = vmatprep.subr.mxu0 0.0
        %870 = vmatpush1.msra.mxu0 0.0
        %871 = vmatprep.subr.mxu0 0.0
        %872 = vmatpush1.msra.mxu0 0.0
        %873 = vmatprep.subr.mxu0 0.0
        %874 = vmatpush1.msra.mxu0 0.0
        %875 = vmatprep.subr.mxu0 0.0
        %876 = vmatpush1.msra.mxu0 0.0
        %877 = vmatprep.subr.mxu0 0.0
        %878 = vmatpush1.msra.mxu0 0.0
        %879 = vmatprep.subr.mxu0 0.0
        %880 = vmatpush1.msra.mxu0 0.0
        %881 = vmatprep.subr.mxu0 0.0
        %882 = vmatpush1.msra.mxu0 0.0
        %883 = vmatprep.subr.mxu0 0.0
        %884 = vmatpush1.msra.mxu0 0.0
        %885 = vmatprep.subr.mxu0 0.0
        %886 = vmatpush1.msra.mxu0 0.0
        %887 = vmatprep.subr.mxu0 0.0
        %888 = vmatpush1.msra.mxu0 0.0
        %889 = vmatprep.subr.mxu0 0.0
        %890 = vmatpush1.msra.mxu0 0.0
        %891 = vmatprep.subr.mxu0 0.0
        %892 = vmatpush1.msra.mxu0 0.0
        %893 = vmatprep.subr.mxu0 0.0
        %894 = vmatpush1.msra.mxu0 0.0
        %895 = vmatprep.mubr.f32.mxu0 0.0
        %896 = vmatmul.mubr.f32.gmra.mrb[0].mxu0 %v829
        %v897 = vpop.f32.mrb[0].mxu0
        %v898 = vadd.f32 %v826, %v897
        %v899 = vpop.f32.mrb[0].mxu0
        %900 = vdwg.mxu0
        %902 = vrot.lane.b32.xlu0 %v814, 112
        %v903 = vpop.permute.xlu0 %902
        %vm904 = vcmask 130048
        %v905 = vsel %vm904, %v814, 0
        %v907 = vsel %vm904, %v903, 0
        %909 = vmatprep.subr.mxu0 0.0
        %910 = vmatpush1.xpose.msra.mxu0 %v907
        %911 = vmatprep.subr.mxu0 0.0
        %912 = vmatpush1.xpose.msra.mxu0 0.0
        %913 = vmatprep.subr.mxu0 0.0
        %914 = vmatpush1.xpose.msra.mxu0 0.0
        %915 = vmatprep.subr.mxu0 0.0
        %916 = vmatpush1.xpose.msra.mxu0 0.0
        %917 = vmatprep.subr.mxu0 0.0
        %918 = vmatpush1.xpose.msra.mxu0 0.0
        %919 = vmatprep.subr.mxu0 0.0
        %920 = vmatpush1.xpose.msra.mxu0 0.0
        %921 = vmatprep.subr.mxu0 0.0
        %922 = vmatpush1.xpose.msra.mxu0 0.0
        %923 = vmatprep.subr.mxu0 0.0
        %924 = vmatpush1.xpose.msra.mxu0 0.0
        %925 = vmatprep.subr.mxu0 0.0
        %926 = vmatpush1.xpose.msra.mxu0 0.0
        %927 = vmatprep.subr.mxu0 0.0
        %928 = vmatpush1.xpose.msra.mxu0 0.0
        %929 = vmatprep.subr.mxu0 0.0
        %930 = vmatpush1.xpose.msra.mxu0 0.0
        %931 = vmatprep.subr.mxu0 0.0
        %932 = vmatpush1.xpose.msra.mxu0 0.0
        %933 = vmatprep.subr.mxu0 0.0
        %934 = vmatpush1.xpose.msra.mxu0 0.0
        %935 = vmatprep.subr.mxu0 0.0
        %936 = vmatpush1.xpose.msra.mxu0 0.0
        %937 = vmatprep.subr.mxu0 0.0
        %938 = vmatpush1.xpose.msra.mxu0 0.0
        %939 = vmatprep.subr.mxu0 0.0
        %940 = vmatpush1.xpose.msra.mxu0 0.0
        %941 = vmatprep.subr.mxu0 0.0
        %942 = vmatpush1.xpose.msra.mxu0 0.0
        %943 = vmatprep.subr.mxu0 0.0
        %944 = vmatpush1.xpose.msra.mxu0 0.0
        %945 = vmatprep.subr.mxu0 0.0
        %946 = vmatpush1.xpose.msra.mxu0 0.0
        %947 = vmatprep.subr.mxu0 0.0
        %948 = vmatpush1.xpose.msra.mxu0 0.0
        %949 = vmatprep.subr.mxu0 0.0
        %950 = vmatpush1.xpose.msra.mxu0 0.0
        %951 = vmatprep.subr.mxu0 0.0
        %952 = vmatpush1.xpose.msra.mxu0 0.0
        %953 = vmatprep.subr.mxu0 0.0
        %954 = vmatpush1.xpose.msra.mxu0 0.0
        %955 = vmatprep.subr.mxu0 0.0
        %956 = vmatpush1.xpose.msra.mxu0 0.0
        %957 = vmatprep.subr.mxu0 0.0
        %958 = vmatpush1.xpose.msra.mxu0 0.0
        %959 = vmatprep.subr.mxu0 0.0
        %960 = vmatpush1.xpose.msra.mxu0 0.0
        %961 = vmatprep.subr.mxu0 0.0
        %962 = vmatpush1.xpose.msra.mxu0 0.0
        %963 = vmatprep.subr.mxu0 0.0
        %964 = vmatpush1.xpose.msra.mxu0 0.0
        %965 = vmatprep.subr.mxu0 0.0
        %966 = vmatpush1.xpose.msra.mxu0 0.0
        %967 = vmatprep.subr.mxu0 0.0
        %968 = vmatpush1.xpose.msra.mxu0 0.0
        %969 = vmatprep.subr.mxu0 0.0
        %970 = vmatpush1.xpose.msra.mxu0 0.0
        %971 = vmatprep.subr.mxu0 0.0
        %972 = vmatpush1.xpose.msra.mxu0 0.0
        %973 = vmatprep.mubr.f32.mxu0 0.0
        %974 = vmatmul.mubr.f32.gmra.mrb[0].mxu0 %v905
        %v975 = vpop.f32.mrb[0].mxu0
        %v976 = vadd.f32 0.0, %v975
        %v977 = vpop.f32.mrb[0].mxu0
        %978 = vdwg.mxu0
        %vm979 = vcmask 64512
        %v980 = vsel %vm979, %v976, -inf
        %981 = vmax.xlane.f32.xlu0 %v980
        %v982 = vpop.xlane.xlu0 %981
        %v983 = vsub.f32 %v976, %v982
        %v984 = vmul.f32 %v983, 1.442695
        %v985 = vpow.pop %v984
        %v986 = vsel %vm979, %v985, 0.0
        %987 = vadd.xlane.f32.xlu0 %v986
        %v988 = vpop.xlane.xlu0 %987
        %v989 = vrcp.pop %v988
        %v990 = vmul.f32 %v985, %v989
        %991 = vst.msk [vmem:[%s697] sm:$0xff] %vm979, %v990
        %992 = vrot.lane.b32.xlu0 %v814, 96
        %v993 = vpop.permute.xlu0 %992
        %v996 = vsel %vm979, %v990, 0
        %998 = vmatprep.subr.mxu0 0.0
        %999 = vmatpush1.msra.mxu0 %v993
        %1000 = vmatprep.subr.mxu0 0.0
        %1001 = vmatpush1.msra.mxu0 0.0
        %1002 = vmatprep.subr.mxu0 0.0
        %1003 = vmatpush1.msra.mxu0 0.0
        %1004 = vmatprep.subr.mxu0 0.0
        %1005 = vmatpush1.msra.mxu0 0.0
        %1006 = vmatprep.subr.mxu0 0.0
        %1007 = vmatpush1.msra.mxu0 0.0
        %1008 = vmatprep.subr.mxu0 0.0
        %1009 = vmatpush1.msra.mxu0 0.0
        %1010 = vmatprep.subr.mxu0 0.0
        %1011 = vmatpush1.msra.mxu0 0.0
        %1012 = vmatprep.subr.mxu0 0.0
        %1013 = vmatpush1.msra.mxu0 0.0
        %1014 = vmatprep.subr.mxu0 0.0
        %1015 = vmatpush1.msra.mxu0 0.0
        %1016 = vmatprep.subr.mxu0 0.0
        %1017 = vmatpush1.msra.mxu0 0.0
        %1018 = vmatprep.subr.mxu0 0.0
        %1019 = vmatpush1.msra.mxu0 0.0
        %1020 = vmatprep.subr.mxu0 0.0
        %1021 = vmatpush1.msra.mxu0 0.0
        %1022 = vmatprep.subr.mxu0 0.0
        %1023 = vmatpush1.msra.mxu0 0.0
        %1024 = vmatprep.subr.mxu0 0.0
        %1025 = vmatpush1.msra.mxu0 0.0
        %1026 = vmatprep.subr.mxu0 0.0
        %1027 = vmatpush1.msra.mxu0 0.0
        %1028 = vmatprep.subr.mxu0 0.0
        %1029 = vmatpush1.msra.mxu0 0.0
        %1030 = vmatprep.subr.mxu0 0.0
        %1031 = vmatpush1.msra.mxu0 0.0
        %1032 = vmatprep.subr.mxu0 0.0
        %1033 = vmatpush1.msra.mxu0 0.0
        %1034 = vmatprep.subr.mxu0 0.0
        %1035 = vmatpush1.msra.mxu0 0.0
        %1036 = vmatprep.subr.mxu0 0.0
        %1037 = vmatpush1.msra.mxu0 0.0
        %1038 = vmatprep.subr.mxu0 0.0
        %1039 = vmatpush1.msra.mxu0 0.0
        %1040 = vmatprep.subr.mxu0 0.0
        %1041 = vmatpush1.msra.mxu0 0.0
        %1042 = vmatprep.subr.mxu0 0.0
        %1043 = vmatpush1.msra.mxu0 0.0
        %1044 = vmatprep.subr.mxu0 0.0
        %1045 = vmatpush1.msra.mxu0 0.0
        %1046 = vmatprep.subr.mxu0 0.0
        %1047 = vmatpush1.msra.mxu0 0.0
        %1048 = vmatprep.subr.mxu0 0.0
        %1049 = vmatpush1.msra.mxu0 0.0
        %1050 = vmatprep.subr.mxu0 0.0
        %1051 = vmatpush1.msra.mxu0 0.0
        %1052 = vmatprep.subr.mxu0 0.0
        %1053 = vmatpush1.msra.mxu0 0.0
        %1054 = vmatprep.subr.mxu0 0.0
        %1055 = vmatpush1.msra.mxu0 0.0
        %1056 = vmatprep.subr.mxu0 0.0
        %1057 = vmatpush1.msra.mxu0 0.0
        %1058 = vmatprep.subr.mxu0 0.0
        %1059 = vmatpush1.msra.mxu0 0.0
        %1060 = vmatprep.subr.mxu0 0.0
        %1061 = vmatpush1.msra.mxu0 0.0
        %1062 = vmatprep.mubr.f32.mxu0 0.0
        %1063 = vmatmul.mubr.f32.gmra.mrb[0].mxu0 %v996
        %v1064 = vpop.f32.mrb[0].mxu0
        %v1065 = vadd.f32 0.0, %v1064
        %v1066 = vpop.f32.mrb[0].mxu0
        %1067 = vdwg.mxu0
        %1068 = vrot.lane.b32.xlu0 %v814, 80
        %v1069 = vpop.permute.xlu0 %1068
        %v1070 = vsel %vm979, %v1069, 0
        %v1073 = vsel %vm979, %v898, 0
        %1075 = vmatprep.subr.mxu0 0.0
        %1076 = vmatpush1.xpose.msra.mxu0 %v1073
        %1077 = vmatprep.subr.mxu0 0.0
        %1078 = vmatpush1.xpose.msra.mxu0 0.0
        %1079 = vmatprep.subr.mxu0 0.0
        %1080 = vmatpush1.xpose.msra.mxu0 0.0
        %1081 = vmatprep.subr.mxu0 0.0
        %1082 = vmatpush1.xpose.msra.mxu0 0.0
        %1083 = vmatprep.subr.mxu0 0.0
        %1084 = vmatpush1.xpose.msra.mxu0 0.0
        %1085 = vmatprep.subr.mxu0 0.0
        %1086 = vmatpush1.xpose.msra.mxu0 0.0
        %1087 = vmatprep.subr.mxu0 0.0
        %1088 = vmatpush1.xpose.msra.mxu0 0.0
        %1089 = vmatprep.subr.mxu0 0.0
        %1090 = vmatpush1.xpose.msra.mxu0 0.0
        %1091 = vmatprep.subr.mxu0 0.0
        %1092 = vmatpush1.xpose.msra.mxu0 0.0
        %1093 = vmatprep.subr.mxu0 0.0
        %1094 = vmatpush1.xpose.msra.mxu0 0.0
        %1095 = vmatprep.subr.mxu0 0.0
        %1096 = vmatpush1.xpose.msra.mxu0 0.0
        %1097 = vmatprep.subr.mxu0 0.0
        %1098 = vmatpush1.xpose.msra.mxu0 0.0
        %1099 = vmatprep.subr.mxu0 0.0
        %1100 = vmatpush1.xpose.msra.mxu0 0.0
        %1101 = vmatprep.subr.mxu0 0.0
        %1102 = vmatpush1.xpose.msra.mxu0 0.0
        %1103 = vmatprep.subr.mxu0 0.0
        %1104 = vmatpush1.xpose.msra.mxu0 0.0
        %1105 = vmatprep.subr.mxu0 0.0
        %1106 = vmatpush1.xpose.msra.mxu0 0.0
        %1107 = vmatprep.subr.mxu0 0.0
        %1108 = vmatpush1.xpose.msra.mxu0 0.0
        %1109 = vmatprep.subr.mxu0 0.0
        %1110 = vmatpush1.xpose.msra.mxu0 0.0
        %1111 = vmatprep.subr.mxu0 0.0
        %1112 = vmatpush1.xpose.msra.mxu0 0.0
        %1113 = vmatprep.subr.mxu0 0.0
        %1114 = vmatpush1.xpose.msra.mxu0 0.0
        %1115 = vmatprep.subr.mxu0 0.0
        %1116 = vmatpush1.xpose.msra.mxu0 0.0
        %1117 = vmatprep.subr.mxu0 0.0
        %1118 = vmatpush1.xpose.msra.mxu0 0.0
        %1119 = vmatprep.subr.mxu0 0.0
        %1120 = vmatpush1.xpose.msra.mxu0 0.0
        %1121 = vmatprep.subr.mxu0 0.0
        %1122 = vmatpush1.xpose.msra.mxu0 0.0
        %1123 = vmatprep.subr.mxu0 0.0
        %1124 = vmatpush1.xpose.msra.mxu0 0.0
        %1125 = vmatprep.subr.mxu0 0.0
        %1126 = vmatpush1.xpose.msra.mxu0 0.0
        %1127 = vmatprep.subr.mxu0 0.0
        %1128 = vmatpush1.xpose.msra.mxu0 0.0
        %1129 = vmatprep.subr.mxu0 0.0
        %1130 = vmatpush1.xpose.msra.mxu0 0.0
        %1131 = vmatprep.subr.mxu0 0.0
        %1132 = vmatpush1.xpose.msra.mxu0 0.0
        %1133 = vmatprep.subr.mxu0 0.0
        %1134 = vmatpush1.xpose.msra.mxu0 0.0
        %1135 = vmatprep.subr.mxu0 0.0
        %1136 = vmatpush1.xpose.msra.mxu0 0.0
        %1137 = vmatprep.subr.mxu0 0.0
        %1138 = vmatpush1.xpose.msra.mxu0 0.0
        %1139 = vmatprep.mubr.f32.mxu0 0.0
        %1140 = vmatmul.mubr.f32.gmra.mrb[0].mxu0 %v1070
        %v1141 = vpop.f32.mrb[0].mxu0
        %v1142 = vadd.f32 0.0, %v1141
        %v1143 = vpop.f32.mrb[0].mxu0
        %1144 = vdwg.mxu0
        %v1145 = vsel %vm979, %v1142, -inf
        %1146 = vmax.xlane.f32.xlu0 %v1145
        %v1147 = vpop.xlane.xlu0 %1146
        %v1148 = vsub.f32 %v1142, %v1147
        %v1149 = vmul.f32 %v1148, 1.442695
        %v1150 = vpow.pop %v1149
        %v1151 = vsel %vm979, %v1150, 0.0
        %1152 = vadd.xlane.f32.xlu0 %v1151
        %v1153 = vpop.xlane.xlu0 %1152
        %v1154 = vrcp.pop %v1153
        %v1155 = vmul.f32 %v1150, %v1154
        %1156 = vst.msk [vmem:[%s704] sm:$0xff] %vm979, %v1155
        %1157 = vrot.lane.b32.xlu0 %v898, 120
        %v1158 = vpop.permute.xlu0 %1157
        %v1161 = vsel %vm979, %v1155, 0
        %1163 = vmatprep.subr.mxu0 0.0
        %1164 = vmatpush1.msra.mxu0 %v1158
        %1165 = vmatprep.subr.mxu0 0.0
        %1166 = vmatpush1.msra.mxu0 0.0
        %1167 = vmatprep.subr.mxu0 0.0
        %1168 = vmatpush1.msra.mxu0 0.0
        %1169 = vmatprep.subr.mxu0 0.0
        %1170 = vmatpush1.msra.mxu0 0.0
        %1171 = vmatprep.subr.mxu0 0.0
        %1172 = vmatpush1.msra.mxu0 0.0
        %1173 = vmatprep.subr.mxu0 0.0
        %1174 = vmatpush1.msra.mxu0 0.0
        %1175 = vmatprep.subr.mxu0 0.0
        %1176 = vmatpush1.msra.mxu0 0.0
        %1177 = vmatprep.subr.mxu0 0.0
        %1178 = vmatpush1.msra.mxu0 0.0
        %1179 = vmatprep.subr.mxu0 0.0
        %1180 = vmatpush1.msra.mxu0 0.0
        %1181 = vmatprep.subr.mxu0 0.0
        %1182 = vmatpush1.msra.mxu0 0.0
        %1183 = vmatprep.subr.mxu0 0.0
        %1184 = vmatpush1.msra.mxu0 0.0
        %1185 = vmatprep.subr.mxu0 0.0
        %1186 = vmatpush1.msra.mxu0 0.0
        %1187 = vmatprep.subr.mxu0 0.0
        %1188 = vmatpush1.msra.mxu0 0.0
        %1189 = vmatprep.subr.mxu0 0.0
        %1190 = vmatpush1.msra.mxu0 0.0
        %1191 = vmatprep.subr.mxu0 0.0
        %1192 = vmatpush1.msra.mxu0 0.0
        %1193 = vmatprep.subr.mxu0 0.0
        %1194 = vmatpush1.msra.mxu0 0.0
        %1195 = vmatprep.subr.mxu0 0.0
        %1196 = vmatpush1.msra.mxu0 0.0
        %1197 = vmatprep.subr.mxu0 0.0
        %1198 = vmatpush1.msra.mxu0 0.0
        %1199 = vmatprep.subr.mxu0 0.0
        %1200 = vmatpush1.msra.mxu0 0.0
        %1201 = vmatprep.subr.mxu0 0.0
        %1202 = vmatpush1.msra.mxu0 0.0
        %1203 = vmatprep.subr.mxu0 0.0
        %1204 = vmatpush1.msra.mxu0 0.0
        %1205 = vmatprep.subr.mxu0 0.0
        %1206 = vmatpush1.msra.mxu0 0.0
        %1207 = vmatprep.subr.mxu0 0.0
        %1208 = vmatpush1.msra.mxu0 0.0
        %1209 = vmatprep.subr.mxu0 0.0
        %1210 = vmatpush1.msra.mxu0 0.0
        %1211 = vmatprep.subr.mxu0 0.0
        %1212 = vmatpush1.msra.mxu0 0.0
        %1213 = vmatprep.subr.mxu0 0.0
        %1214 = vmatpush1.msra.mxu0 0.0
        %1215 = vmatprep.subr.mxu0 0.0
        %1216 = vmatpush1.msra.mxu0 0.0
        %1217 = vmatprep.subr.mxu0 0.0
        %1218 = vmatpush1.msra.mxu0 0.0
        %1219 = vmatprep.subr.mxu0 0.0
        %1220 = vmatpush1.msra.mxu0 0.0
        %1221 = vmatprep.subr.mxu0 0.0
        %1222 = vmatpush1.msra.mxu0 0.0
        %1223 = vmatprep.subr.mxu0 0.0
        %1224 = vmatpush1.msra.mxu0 0.0
        %1225 = vmatprep.subr.mxu0 0.0
        %1226 = vmatpush1.msra.mxu0 0.0
        %1227 = vmatprep.mubr.f32.mxu0 0.0
        %1228 = vmatmul.mubr.f32.gmra.mrb[0].mxu0 %v1161
        %v1229 = vpop.f32.mrb[0].mxu0
        %v1230 = vadd.f32 0.0, %v1229
        %v1231 = vpop.f32.mrb[0].mxu0
        %1232 = vdwg.mxu0
        %v1233 = vld [vmem:[%s729] sm:$0xff]
        %v1234 = vld [vmem:[%s729 + $0x8] sm:$0xff]
        %v1235 = vld [vmem:[%s729 + $0x10] sm:$0xff]
        %v1237 = vsel %vm979, %v1230, 0
        %1239 = vmatprep.subr.mxu0 0.0
        %1240 = vmatpush1.msra.mxu0 %v1235
        %1241 = vmatprep.subr.mxu0 0.0
        %1242 = vmatpush1.msra.mxu0 0.0
        %1243 = vmatprep.subr.mxu0 0.0
        %1244 = vmatpush1.msra.mxu0 0.0
        %1245 = vmatprep.subr.mxu0 0.0
        %1246 = vmatpush1.msra.mxu0 0.0
        %1247 = vmatprep.subr.mxu0 0.0
        %1248 = vmatpush1.msra.mxu0 0.0
        %1249 = vmatprep.subr.mxu0 0.0
        %1250 = vmatpush1.msra.mxu0 0.0
        %1251 = vmatprep.subr.mxu0 0.0
        %1252 = vmatpush1.msra.mxu0 0.0
        %1253 = vmatprep.subr.mxu0 0.0
        %1254 = vmatpush1.msra.mxu0 0.0
        %1255 = vmatprep.subr.mxu0 0.0
        %1256 = vmatpush1.msra.mxu0 0.0
        %1257 = vmatprep.subr.mxu0 0.0
        %1258 = vmatpush1.msra.mxu0 0.0
        %1259 = vmatprep.subr.mxu0 0.0
        %1260 = vmatpush1.msra.mxu0 0.0
        %1261 = vmatprep.subr.mxu0 0.0
        %1262 = vmatpush1.msra.mxu0 0.0
        %1263 = vmatprep.subr.mxu0 0.0
        %1264 = vmatpush1.msra.mxu0 0.0
        %1265 = vmatprep.subr.mxu0 0.0
        %1266 = vmatpush1.msra.mxu0 0.0
        %1267 = vmatprep.subr.mxu0 0.0
        %1268 = vmatpush1.msra.mxu0 0.0
        %1269 = vmatprep.subr.mxu0 0.0
        %1270 = vmatpush1.msra.mxu0 0.0
        %1271 = vmatprep.subr.mxu0 0.0
        %1272 = vmatpush1.msra.mxu0 0.0
        %1273 = vmatprep.subr.mxu0 0.0
        %1274 = vmatpush1.msra.mxu0 0.0
        %1275 = vmatprep.subr.mxu0 0.0
        %1276 = vmatpush1.msra.mxu0 0.0
        %1277 = vmatprep.subr.mxu0 0.0
        %1278 = vmatpush1.msra.mxu0 0.0
        %1279 = vmatprep.subr.mxu0 0.0
        %1280 = vmatpush1.msra.mxu0 0.0
        %1281 = vmatprep.subr.mxu0 0.0
        %1282 = vmatpush1.msra.mxu0 0.0
        %1283 = vmatprep.subr.mxu0 0.0
        %1284 = vmatpush1.msra.mxu0 0.0
        %1285 = vmatprep.subr.mxu0 0.0
        %1286 = vmatpush1.msra.mxu0 0.0
        %1287 = vmatprep.subr.mxu0 0.0
        %1288 = vmatpush1.msra.mxu0 0.0
        %1289 = vmatprep.subr.mxu0 0.0
        %1290 = vmatpush1.msra.mxu0 0.0
        %1291 = vmatprep.subr.mxu0 0.0
        %1292 = vmatpush1.msra.mxu0 0.0
        %1293 = vmatprep.subr.mxu0 0.0
        %1294 = vmatpush1.msra.mxu0 0.0
        %1295 = vmatprep.subr.mxu0 0.0
        %1296 = vmatpush1.msra.mxu0 0.0
        %1297 = vmatprep.subr.mxu0 0.0
        %1298 = vmatpush1.msra.mxu0 0.0
        %1299 = vmatprep.subr.mxu0 0.0
        %1300 = vmatpush1.msra.mxu0 0.0
        %1301 = vmatprep.subr.mxu0 0.0
        %1302 = vmatpush1.msra.mxu0 0.0
        %1303 = vmatprep.mubr.f32.mxu0 0.0
        %1304 = vmatmul.mubr.f32.gmra.mrb[0].mxu0 %v1237
        %v1305 = vpop.f32.mrb[0].mxu0
        %v1306 = vadd.f32 0.0, %v1305
        %v1307 = vpop.f32.mrb[0].mxu0
        %1308 = vdwg.mxu0
        %v1310 = vsel %vm904, %v1065, 0
        %1312 = vmatprep.subr.mxu0 0.0
        %1313 = vmatpush1.msra.mxu0 %v1233
        %1314 = vmatprep.subr.mxu0 0.0
        %1315 = vmatpush1.msra.mxu0 %v1234
        %1316 = vmatprep.subr.mxu0 0.0
        %1317 = vmatpush1.msra.mxu0 0.0
        %1318 = vmatprep.subr.mxu0 0.0
        %1319 = vmatpush1.msra.mxu0 0.0
        %1320 = vmatprep.subr.mxu0 0.0
        %1321 = vmatpush1.msra.mxu0 0.0
        %1322 = vmatprep.subr.mxu0 0.0
        %1323 = vmatpush1.msra.mxu0 0.0
        %1324 = vmatprep.subr.mxu0 0.0
        %1325 = vmatpush1.msra.mxu0 0.0
        %1326 = vmatprep.subr.mxu0 0.0
        %1327 = vmatpush1.msra.mxu0 0.0
        %1328 = vmatprep.subr.mxu0 0.0
        %1329 = vmatpush1.msra.mxu0 0.0
        %1330 = vmatprep.subr.mxu0 0.0
        %1331 = vmatpush1.msra.mxu0 0.0
        %1332 = vmatprep.subr.mxu0 0.0
        %1333 = vmatpush1.msra.mxu0 0.0
        %1334 = vmatprep.subr.mxu0 0.0
        %1335 = vmatpush1.msra.mxu0 0.0
        %1336 = vmatprep.subr.mxu0 0.0
        %1337 = vmatpush1.msra.mxu0 0.0
        %1338 = vmatprep.subr.mxu0 0.0
        %1339 = vmatpush1.msra.mxu0 0.0
        %1340 = vmatprep.subr.mxu0 0.0
        %1341 = vmatpush1.msra.mxu0 0.0
        %1342 = vmatprep.subr.mxu0 0.0
        %1343 = vmatpush1.msra.mxu0 0.0
        %1344 = vmatprep.subr.mxu0 0.0
        %1345 = vmatpush1.msra.mxu0 0.0
        %1346 = vmatprep.subr.mxu0 0.0
        %1347 = vmatpush1.msra.mxu0 0.0
        %1348 = vmatprep.subr.mxu0 0.0
        %1349 = vmatpush1.msra.mxu0 0.0
        %1350 = vmatprep.subr.mxu0 0.0
        %1351 = vmatpush1.msra.mxu0 0.0
        %1352 = vmatprep.subr.mxu0 0.0
        %1353 = vmatpush1.msra.mxu0 0.0
        %1354 = vmatprep.subr.mxu0 0.0
        %1355 = vmatpush1.msra.mxu0 0.0
        %1356 = vmatprep.subr.mxu0 0.0
        %1357 = vmatpush1.msra.mxu0 0.0
        %1358 = vmatprep.subr.mxu0 0.0
        %1359 = vmatpush1.msra.mxu0 0.0
        %1360 = vmatprep.subr.mxu0 0.0
        %1361 = vmatpush1.msra.mxu0 0.0
        %1362 = vmatprep.subr.mxu0 0.0
        %1363 = vmatpush1.msra.mxu0 0.0
        %1364 = vmatprep.subr.mxu0 0.0
        %1365 = vmatpush1.msra.mxu0 0.0
        %1366 = vmatprep.subr.mxu0 0.0
        %1367 = vmatpush1.msra.mxu0 0.0
        %1368 = vmatprep.subr.mxu0 0.0
        %1369 = vmatpush1.msra.mxu0 0.0
        %1370 = vmatprep.subr.mxu0 0.0
        %1371 = vmatpush1.msra.mxu0 0.0
        %1372 = vmatprep.subr.mxu0 0.0
        %1373 = vmatpush1.msra.mxu0 0.0
        %1374 = vmatprep.subr.mxu0 0.0
        %1375 = vmatpush1.msra.mxu0 0.0
        %1376 = vmatprep.mubr.f32.mxu0 0.0
        %1377 = vmatmul.mubr.f32.gmra.mrb[0].mxu0 %v1310
        %v1378 = vpop.f32.mrb[0].mxu0
        %v1379 = vadd.f32 %v1306, %v1378
        %v1380 = vpop.f32.mrb[0].mxu0
        %1381 = vdwg.mxu0
        %p1382 = scmp.eq.s32.totalorder %s44, 0
        // Predicated region
        $region89: #{tpu_custom_call.1} parent=83 // pred_check
          %p1383 = pneg %p1382
        $region90: #{tpu_custom_call.1} parent=83 // pred_check_branch
          %1385 = sbr.rel (%p1383) target = $region92
        $region91: #{tpu_custom_call.1} parent=83 // pred_region
          %v1386 = vld [vmem:[%s7] sm:$0x1]
          %v1388 = vlaneseq
          %v1389 = vshrl.u32 %v1388, 7
          %v1390 = vsub.s32 0, %v1389
          %v1391 = vrot.slane %v1386, %v1390
          %v1393 = vadd.f32 %v730, %v1391
          %1394 = vst.msk [vmem:[#allocation2] sm:$0xff] %vm743, %v1393
        $region92: #{tpu_custom_call.1} parent=83 // pred_fallthru
          _
        %v1395 = vld [vmem:[#allocation2] sm:$0xff]
        %v1396 = vadd.f32 %v1395, %v1379
        %1397 = vst.msk [vmem:[#allocation2] sm:$0xff] %vm743, %v1396
        %p1398 = scmp.eq.s32.totalorder %s44, 1
        // Predicated region
        $region93: #{tpu_custom_call.1} parent=83 // pred_check
          %p1399 = pneg %p1398
        $region94: #{tpu_custom_call.1} parent=83 // pred_check_branch
          %1401 = sbr.rel (%p1399) target = $region96
        $region95: #{tpu_custom_call.1} parent=83 // pred_region
          %v1402 = vld [vmem:[#allocation2] sm:$0xff]
          %v1403 = vld [vmem:[%s8] sm:$0x1]
          %v1404 = vld [vmem:[%s9] sm:$0x1]
          %v1405 = vsel %vm743, %v1402, 0.0
          %1406 = vadd.xlane.f32.xlu0 %v1405
          %v1407 = vpop.xlane.xlu0 %1406
          %v1408 = vrcp.pop 32.0
          %v1409 = vmul.f32 %v1407, %v1408
          %v1410 = vsub.f32 %v1402, %v1409
          %v1411 = vmul.f32 %v1410, %v1410
          %v1412 = vsel %vm743, %v1411, 0.0
          %1413 = vadd.xlane.f32.xlu0 %v1412
          %v1414 = vpop.xlane.xlu0 %1413
          %v1415 = vmul.f32 %v1414, %v1408
          %v1416 = vadd.f32 %v1415, 1e-05
          %v1417 = vrsqrt.pop %v1416
          %v1418 = vmul.f32 %v1410, %v1417
          %v1420 = vlaneseq
          %v1421 = vshrl.u32 %v1420, 7
          %v1422 = vsub.s32 0, %v1421
          %v1423 = vrot.slane %v1403, %v1422
          %v1425 = vmul.f32 %v1418, %v1423
          %v1427 = vlaneseq
          %v1428 = vshrl.u32 %v1427, 7
          %v1429 = vsub.s32 0, %v1428
          %v1430 = vrot.slane %v1404, %v1429
          %v1432 = vadd.f32 %v1425, %v1430
          %v1433 = vld [vmem:[%s10] sm:$0xff]
          %v1434 = vld [vmem:[%s10 + $0x8] sm:$0xff]
          %v1435 = vld [vmem:[%s10 + $0x10] sm:$0xff]
          %v1436 = vld [vmem:[%s10 + $0x18] sm:$0xff]
          %v1437 = vld [vmem:[%s11] sm:$0x1]
          %v1439 = vlaneseq
          %v1440 = vshrl.u32 %v1439, 7
          %v1441 = vsub.s32 0, %v1440
          %v1442 = vrot.slane %v1437, %v1441
          %v1445 = vsel %vm743, %v1432, 0
          %1447 = vmatprep.subr.mxu0 0.0
          %1448 = vmatpush1.msra.mxu0 %v1433
          %1449 = vmatprep.subr.mxu0 0.0
          %1450 = vmatpush1.msra.mxu0 %v1434
          %1451 = vmatprep.subr.mxu0 0.0
          %1452 = vmatpush1.msra.mxu0 %v1435
          %1453 = vmatprep.subr.mxu0 0.0
          %1454 = vmatpush1.msra.mxu0 %v1436
          %1455 = vmatprep.subr.mxu0 0.0
          %1456 = vmatpush1.msra.mxu0 0.0
          %1457 = vmatprep.subr.mxu0 0.0
          %1458 = vmatpush1.msra.mxu0 0.0
          %1459 = vmatprep.subr.mxu0 0.0
          %1460 = vmatpush1.msra.mxu0 0.0
          %1461 = vmatprep.subr.mxu0 0.0
          %1462 = vmatpush1.msra.mxu0 0.0
          %1463 = vmatprep.subr.mxu0 0.0
          %1464 = vmatpush1.msra.mxu0 0.0
          %1465 = vmatprep.subr.mxu0 0.0
          %1466 = vmatpush1.msra.mxu0 0.0
          %1467 = vmatprep.subr.mxu0 0.0
          %1468 = vmatpush1.msra.mxu0 0.0
          %1469 = vmatprep.subr.mxu0 0.0
          %1470 = vmatpush1.msra.mxu0 0.0
          %1471 = vmatprep.subr.mxu0 0.0
          %1472 = vmatpush1.msra.mxu0 0.0
          %1473 = vmatprep.subr.mxu0 0.0
          %1474 = vmatpush1.msra.mxu0 0.0
          %1475 = vmatprep.subr.mxu0 0.0
          %1476 = vmatpush1.msra.mxu0 0.0
          %1477 = vmatprep.subr.mxu0 0.0
          %1478 = vmatpush1.msra.mxu0 0.0
          %1479 = vmatprep.subr.mxu0 0.0
          %1480 = vmatpush1.msra.mxu0 0.0
          %1481 = vmatprep.subr.mxu0 0.0
          %1482 = vmatpush1.msra.mxu0 0.0
          %1483 = vmatprep.subr.mxu0 0.0
          %1484 = vmatpush1.msra.mxu0 0.0
          %1485 = vmatprep.subr.mxu0 0.0
          %1486 = vmatpush1.msra.mxu0 0.0
          %1487 = vmatprep.subr.mxu0 0.0
          %1488 = vmatpush1.msra.mxu0 0.0
          %1489 = vmatprep.subr.mxu0 0.0
          %1490 = vmatpush1.msra.mxu0 0.0
          %1491 = vmatprep.subr.mxu0 0.0
          %1492 = vmatpush1.msra.mxu0 0.0
          %1493 = vmatprep.subr.mxu0 0.0
          %1494 = vmatpush1.msra.mxu0 0.0
          %1495 = vmatprep.subr.mxu0 0.0
          %1496 = vmatpush1.msra.mxu0 0.0
          %1497 = vmatprep.subr.mxu0 0.0
          %1498 = vmatpush1.msra.mxu0 0.0
          %1499 = vmatprep.subr.mxu0 0.0
          %1500 = vmatpush1.msra.mxu0 0.0
          %1501 = vmatprep.subr.mxu0 0.0
          %1502 = vmatpush1.msra.mxu0 0.0
          %1503 = vmatprep.subr.mxu0 0.0
          %1504 = vmatpush1.msra.mxu0 0.0
          %1505 = vmatprep.subr.mxu0 0.0
          %1506 = vmatpush1.msra.mxu0 0.0
          %1507 = vmatprep.subr.mxu0 0.0
          %1508 = vmatpush1.msra.mxu0 0.0
          %1509 = vmatprep.subr.mxu0 0.0
          %1510 = vmatpush1.msra.mxu0 0.0
          %1511 = vmatprep.mubr.f32.mxu0 0.0
          %1512 = vmatmul.mubr.f32.gmra.mrb[0].mxu0 %v1445
          %v1513 = vpop.f32.mrb[0].mxu0
          %v1514 = vadd.f32 %v1442, %v1513
          %v1515 = vpop.f32.mrb[0].mxu0
          %1516 = vdwg.mxu0
          %v1517 = vmax.f32 %v1514, 0.0
          %v1518 = vld [vmem:[%s12] sm:$0xff]
          %v1519 = vld [vmem:[%s12 + $0x8] sm:$0xff]
          %v1520 = vld [vmem:[%s12 + $0x10] sm:$0xff]
          %v1521 = vld [vmem:[%s12 + $0x18] sm:$0xff]
          %v1522 = vld [vmem:[%s12 + $0x20] sm:$0xff]
          %v1523 = vld [vmem:[%s12 + $0x28] sm:$0xff]
          %v1524 = vld [vmem:[%s12 + $0x30] sm:$0xff]
          %v1525 = vld [vmem:[%s12 + $0x38] sm:$0xff]
          %v1526 = vld [vmem:[%s13] sm:$0x1]
          %v1528 = vlaneseq
          %v1529 = vshrl.u32 %v1528, 7
          %v1530 = vsub.s32 0, %v1529
          %v1531 = vrot.slane %v1526, %v1530
          %vm1533 = vcmask 523264
          %v1535 = vsel %vm1533, %v1517, 0
          %1537 = vmatprep.subr.mxu0 0.0
          %1538 = vmatpush1.msra.mxu0 %v1518
          %1539 = vmatprep.subr.mxu0 0.0
          %1540 = vmatpush1.msra.mxu0 %v1519
          %1541 = vmatprep.subr.mxu0 0.0
          %1542 = vmatpush1.msra.mxu0 %v1520
          %1543 = vmatprep.subr.mxu0 0.0
          %1544 = vmatpush1.msra.mxu0 %v1521
          %1545 = vmatprep.subr.mxu0 0.0
          %1546 = vmatpush1.msra.mxu0 %v1522
          %1547 = vmatprep.subr.mxu0 0.0
          %1548 = vmatpush1.msra.mxu0 %v1523
          %1549 = vmatprep.subr.mxu0 0.0
          %1550 = vmatpush1.msra.mxu0 %v1524
          %1551 = vmatprep.subr.mxu0 0.0
          %1552 = vmatpush1.msra.mxu0 %v1525
          %1553 = vmatprep.subr.mxu0 0.0
          %1554 = vmatpush1.msra.mxu0 0.0
          %1555 = vmatprep.subr.mxu0 0.0
          %1556 = vmatpush1.msra.mxu0 0.0
          %1557 = vmatprep.subr.mxu0 0.0
          %1558 = vmatpush1.msra.mxu0 0.0
          %1559 = vmatprep.subr.mxu0 0.0
          %1560 = vmatpush1.msra.mxu0 0.0
          %1561 = vmatprep.subr.mxu0 0.0
          %1562 = vmatpush1.msra.mxu0 0.0
          %1563 = vmatprep.subr.mxu0 0.0
          %1564 = vmatpush1.msra.mxu0 0.0
          %1565 = vmatprep.subr.mxu0 0.0
          %1566 = vmatpush1.msra.mxu0 0.0
          %1567 = vmatprep.subr.mxu0 0.0
          %1568 = vmatpush1.msra.mxu0 0.0
          %1569 = vmatprep.subr.mxu0 0.0
          %1570 = vmatpush1.msra.mxu0 0.0
          %1571 = vmatprep.subr.mxu0 0.0
          %1572 = vmatpush1.msra.mxu0 0.0
          %1573 = vmatprep.subr.mxu0 0.0
          %1574 = vmatpush1.msra.mxu0 0.0
          %1575 = vmatprep.subr.mxu0 0.0
          %1576 = vmatpush1.msra.mxu0 0.0
          %1577 = vmatprep.subr.mxu0 0.0
          %1578 = vmatpush1.msra.mxu0 0.0
          %1579 = vmatprep.subr.mxu0 0.0
          %1580 = vmatpush1.msra.mxu0 0.0
          %1581 = vmatprep.subr.mxu0 0.0
          %1582 = vmatpush1.msra.mxu0 0.0
          %1583 = vmatprep.subr.mxu0 0.0
          %1584 = vmatpush1.msra.mxu0 0.0
          %1585 = vmatprep.subr.mxu0 0.0
          %1586 = vmatpush1.msra.mxu0 0.0
          %1587 = vmatprep.subr.mxu0 0.0
          %1588 = vmatpush1.msra.mxu0 0.0
          %1589 = vmatprep.subr.mxu0 0.0
          %1590 = vmatpush1.msra.mxu0 0.0
          %1591 = vmatprep.subr.mxu0 0.0
          %1592 = vmatpush1.msra.mxu0 0.0
          %1593 = vmatprep.subr.mxu0 0.0
          %1594 = vmatpush1.msra.mxu0 0.0
          %1595 = vmatprep.subr.mxu0 0.0
          %1596 = vmatpush1.msra.mxu0 0.0
          %1597 = vmatprep.subr.mxu0 0.0
          %1598 = vmatpush1.msra.mxu0 0.0
          %1599 = vmatprep.subr.mxu0 0.0
          %1600 = vmatpush1.msra.mxu0 0.0
          %1601 = vmatprep.mubr.f32.mxu0 0.0
          %1602 = vmatmul.mubr.f32.gmra.mrb[0].mxu0 %v1535
          %v1603 = vpop.f32.mrb[0].mxu0
          %v1604 = vadd.f32 %v1531, %v1603
          %v1605 = vpop.f32.mrb[0].mxu0
          %1606 = vdwg.mxu0
          %v1607 = vadd.f32 %v1604, %v1432
          %v1608 = vld [vmem:[%s14] sm:$0x1]
          %v1609 = vld [vmem:[%s15] sm:$0x1]
          %v1610 = vsel %vm743, %v1607, 0.0
          %1611 = vadd.xlane.f32.xlu0 %v1610
          %v1612 = vpop.xlane.xlu0 %1611
          %v1613 = vmul.f32 %v1612, %v1408
          %v1614 = vsub.f32 %v1607, %v1613
          %v1615 = vmul.f32 %v1614, %v1614
          %v1616 = vsel %vm743, %v1615, 0.0
          %1617 = vadd.xlane.f32.xlu0 %v1616
          %v1618 = vpop.xlane.xlu0 %1617
          %v1619 = vmul.f32 %v1618, %v1408
          %v1620 = vadd.f32 %v1619, 1e-05
          %v1621 = vrsqrt.pop %v1620
          %v1622 = vmul.f32 %v1614, %v1621
          %v1624 = vlaneseq
          %v1625 = vshrl.u32 %v1624, 7
          %v1626 = vsub.s32 0, %v1625
          %v1627 = vrot.slane %v1608, %v1626
          %v1629 = vmul.f32 %v1622, %v1627
          %v1631 = vlaneseq
          %v1632 = vshrl.u32 %v1631, 7
          %v1633 = vsub.s32 0, %v1632
          %v1634 = vrot.slane %v1609, %v1633
          %v1636 = vadd.f32 %v1629, %v1634
          %vm1637 = vcmp.ne.f32.partialorder %v730, 0.0
          %v1638 = vsel %vm1637, 1, 0
          %v1639 = vcvt.s32.f32 %v1638
          %v1640 = vsel %vm743, %v1639, -inf
          %1641 = vmax.xlane.f32.xlu0 %v1640
          %v1642 = vpop.xlane.xlu0 %1641
          %v1643 = vmul.f32 %v1636, %v1642
          %1644 = vst.msk [vmem:[%s690] sm:$0xff] %vm743, %v1643
        $region96: #{tpu_custom_call.1} parent=83 // pred_fallthru
          _
        %s1645 = sand.u32 %s430, 1
        %s1646 = scalar_lea.sflag [#allocation5], %s1645
        %s1647 = sand.u32 %s430, 1
        %s1648 = smul.addr %s1647, 8
        %s1649 = scalar_lea.vmem [#allocation6], %s1648
        %s1650 = sand.u32 %s39, 1
        %s1651 = scalar_lea.sflag [#allocation8], %s1650
        %s1652 = sand.u32 %s458, 1
        %s1653 = smul.addr %s1652, 8
        %s1654 = scalar_lea.vmem [#allocation7], %s1653
        %s1655 = sand.u32 %s39, 1
        %s1656 = scalar_lea.sflag [#allocation8], %s1655
        %s1657 = sand.u32 %s486, 1
        %s1658 = smul.addr %s1657, 8
        %s1659 = scalar_lea.vmem [#allocation9], %s1658
        // Predicated region
        $region97: #{tpu_custom_call.1} parent=83 // pred_check
          %p1660 = pneg %p440
        $region98: #{tpu_custom_call.1} parent=83 // pred_check_branch
          %1662 = sbr.rel (%p1660) target = $region100
        $region99: #{tpu_custom_call.1} parent=83 // pred_region
          %s1664 = ssub.s32 128, 128
          %1665 = vsyncadd %s1646, %s1664
          %s1666 = smul.addr %s43, 128
          %s1667 = scalar_lea.hbm %s16, %s1666
          %s1669 = sshll.u32 %s1649, 4
          %s1670 = int_to_ptr.vmem [resolvable:$true] %s1669
          %1672 = dma.vmem_to_hbm [thread:$0]  %s1670, 128, %s1667, %s1646
        $region100: #{tpu_custom_call.1} parent=83 // pred_fallthru
          _
        // Predicated region
        $region101: #{tpu_custom_call.1} parent=83 // pred_check
          %p1673 = pneg %p468
        $region102: #{tpu_custom_call.1} parent=83 // pred_check_branch
          %1675 = sbr.rel (%p1673) target = $region104
        $region103: #{tpu_custom_call.1} parent=83 // pred_region
          %s1677 = ssub.s32 128, 128
          %1678 = vsyncadd %s1651, %s1677
          %s1679 = smul.addr %s43, 2
          %s1680 = sadd.s32 %s44, %s1679
          %s1681 = smul.addr %s1680, 128
          %s1682 = scalar_lea.hbm %s17, %s1681
          %s1684 = sshll.u32 %s1654, 4
          %s1685 = int_to_ptr.vmem [resolvable:$true] %s1684
          %1687 = dma.vmem_to_hbm [thread:$0]  %s1685, 128, %s1682, %s1651
        $region104: #{tpu_custom_call.1} parent=83 // pred_fallthru
          _
        // Predicated region
        $region105: #{tpu_custom_call.1} parent=83 // pred_check
          %p1688 = pneg %p496
        $region106: #{tpu_custom_call.1} parent=83 // pred_check_branch
          %1690 = sbr.rel (%p1688) target = $region108
        $region107: #{tpu_custom_call.1} parent=83 // pred_region
          %s1692 = ssub.s32 128, 128
          %1693 = vsyncadd %s1656, %s1692
          %s1694 = smul.addr %s43, 2
          %s1695 = sadd.s32 %s44, %s1694
          %s1696 = smul.addr %s1695, 128
          %s1697 = scalar_lea.hbm %s18, %s1696
          %s1699 = sshll.u32 %s1659, 4
          %s1700 = int_to_ptr.vmem [resolvable:$true] %s1699
          %1702 = dma.vmem_to_hbm [thread:$0]  %s1700, 128, %s1697, %s1656
        $region108: #{tpu_custom_call.1} parent=83 // pred_fallthru
          _
      $region84: #{tpu_custom_call.1} parent=5 // pred_fallthru
        _
      %p1703 = scmp.le.s32.totalorder 2, %s34
      // Predicated region
      $region109: #{tpu_custom_call.1} parent=5 // pred_check
        %p1704 = pneg %p1703
      $region110: #{tpu_custom_call.1} parent=5 // pred_check_branch
        %1706 = sbr.rel (%p1704) target = $region112
      $region111: #{tpu_custom_call.1} parent=5 // pred_region
        %s1707 = ssub.s32 %s34, 2
        // Predicated region
        $region113: #{tpu_custom_call.1} parent=111 // pred_check
          %p1708 = pneg %p446
        $region114: #{tpu_custom_call.1} parent=111 // pred_check_branch
          %1710 = sbr.rel (%p1708) target = $region116
        $region115: #{tpu_custom_call.1} parent=111 // pred_region
          %s1711 = sand.u32 %s431, 1
          %s1712 = scalar_lea.sflag [#allocation5], %s1711
          %s1713 = sand.u32 %s431, 1
          %s1714 = smul.addr %s1713, 8
          %s1715 = scalar_lea.vmem [#allocation6], %s1714
          %1716 = dma.done %s1712, 128
        $region116: #{tpu_custom_call.1} parent=111 // pred_fallthru
          _
        // Predicated region
        $region117: #{tpu_custom_call.1} parent=111 // pred_check
          %p1717 = pneg %p474
        $region118: #{tpu_custom_call.1} parent=111 // pred_check_branch
          %1719 = sbr.rel (%p1717) target = $region120
        $region119: #{tpu_custom_call.1} parent=111 // pred_region
          %s1720 = sand.u32 %s40, 1
          %s1721 = scalar_lea.sflag [#allocation8], %s1720
          %s1722 = sand.u32 %s459, 1
          %s1723 = smul.addr %s1722, 8
          %s1724 = scalar_lea.vmem [#allocation7], %s1723
          %1725 = dma.done %s1721, 128
        $region120: #{tpu_custom_call.1} parent=111 // pred_fallthru
          _
        // Predicated region
        $region121: #{tpu_custom_call.1} parent=111 // pred_check
          %p1726 = pneg %p502
        $region122: #{tpu_custom_call.1} parent=111 // pred_check_branch
          %1728 = sbr.rel (%p1726) target = $region124
        $region123: #{tpu_custom_call.1} parent=111 // pred_region
          %s1729 = sand.u32 %s40, 1
          %s1730 = scalar_lea.sflag [#allocation8], %s1729
          %s1731 = sand.u32 %s487, 1
          %s1732 = smul.addr %s1731, 8
          %s1733 = scalar_lea.vmem [#allocation9], %s1732
          %1734 = dma.done %s1730, 128
        $region124: #{tpu_custom_call.1} parent=111 // pred_fallthru
          _
      $region112: #{tpu_custom_call.1} parent=5 // pred_fallthru
        _
    $region6: #{tpu_custom_call.1} parent=1 // loop_footer
      %s38 = sadd.s32 1, %s34
    $region7: #{tpu_custom_call.1} parent=1 // loop_footer_branch
      %33 = sbr.rel target = $region3
    $region8: #{tpu_custom_call.1} parent=1 // loop_exit
      _
    %1735 = vsyncpa [#allocation4], 1
    %s1736 = scalar_lea.sflag [#allocation4], 1
    %1737 = vsyncpa %s1736, 1
    %1738 = vsyncpa [#allocation5], 1
    %s1739 = scalar_lea.sflag [#allocation5], 1
    %1740 = vsyncpa %s1739, 1
    %1741 = vsyncpa [#allocation8], 1
    %s1742 = scalar_lea.sflag [#allocation8], 1
    %1743 = vsyncpa %s1742, 1

</llo_original>
